<compile_context>
chip_gen: v5e
topology: v5e:2x2
jax: 0.10.0
libtpu: 0.0.40
codegen_flags: <defaults>
</compile_context>

<pallas_src>
import jax
import jax.numpy as jnp
import numpy as np
from jax.experimental import pallas as pl
from jax.experimental.pallas import tpu as pltpu

# Module constants (from the PyTorch source).
N_OF_FRAMES = 750
GLOBAL_FEATURES_SIZE = 1
HIDDEN_SIZE = 512
INPUT_SIZE = 188
NUM_CLASSES = 56
IN_FEATURES = INPUT_SIZE * N_OF_FRAMES + GLOBAL_FEATURES_SIZE  # 141001

# First-layer K is huge (141001) -> stream W1 over a K grid, accumulate in VMEM.
TK = 4096
K_PAD = ((IN_FEATURES + TK - 1) // TK) * TK  # 143360 (zero-padded, exact result)
TN = HIDDEN_SIZE // 2                        # 256: N split in 2 -> megacore-parallel


# ---------------- layer 1: relu(x @ W1 + b1), (N, K)-tiled matmul -----------
def _layer1_kernel(x_ref, w_ref, b_ref, h_ref, acc_ref):
    k = pl.program_id(1)

    @pl.when(k == 0)
    def _():
        acc_ref[...] = jnp.zeros_like(acc_ref)

    acc_ref[...] += jnp.dot(x_ref[...], w_ref[...],
                            preferred_element_type=jnp.float32)

    @pl.when(k == pl.num_programs(1) - 1)
    def _():
        h_ref[...] = jnp.maximum(acc_ref[...] + b_ref[...], 0.0).astype(h_ref.dtype)


def _layer1(x_pad, w1_pad, b1):
    B = x_pad.shape[0]
    n_blocks = HIDDEN_SIZE // TN
    k_blocks = K_PAD // TK
    cost = pl.CostEstimate(
        flops=2 * B * K_PAD * HIDDEN_SIZE,
        transcendentals=0,
        bytes_accessed=(K_PAD * HIDDEN_SIZE * 4      # W1 stream (dominant)
                        + B * K_PAD * 4              # x (read once per N-block)
                        + B * HIDDEN_SIZE * 4),      # h1 out
    )
    return pl.pallas_call(
        _layer1_kernel,
        out_shape=jax.ShapeDtypeStruct((B, HIDDEN_SIZE), jnp.float32),
        grid_spec=pltpu.PrefetchScalarGridSpec(
            num_scalar_prefetch=0,
            grid=(n_blocks, k_blocks),               # N outer (parallel), K inner (reduce)
            in_specs=[
                pl.BlockSpec((B, TK), lambda n, k: (0, k)),
                pl.BlockSpec((TK, TN), lambda n, k: (k, n)),
                pl.BlockSpec((1, TN), lambda n, k: (0, n)),
            ],
            out_specs=pl.BlockSpec((B, TN), lambda n, k: (0, n)),
            scratch_shapes=[pltpu.VMEM((B, TN), jnp.float32)],
        ),
        compiler_params=pltpu.CompilerParams(
            dimension_semantics=("parallel", "arbitrary"),
            vmem_limit_bytes=32 * 1024 * 1024,       # ~9 MiB used; safe on v5e/v6e/v7x
        ),
        cost_estimate=cost,
    )(x_pad, w1_pad, b1)


# ------------- layers 2..6: all weights fit in VMEM, single block -----------
def _tail_kernel(h_ref, w2, b2, w3, b3, w4, b4, w5, b5, w6, b6, o_ref):
    h = h_ref[...]
    h = jnp.maximum(jnp.dot(h, w2[...], preferred_element_type=jnp.float32) + b2[...], 0.0)
    h = jnp.maximum(jnp.dot(h, w3[...], preferred_element_type=jnp.float32) + b3[...], 0.0)
    h = jnp.maximum(jnp.dot(h, w4[...], preferred_element_type=jnp.float32) + b4[...], 0.0)
    h = jnp.maximum(jnp.dot(h, w5[...], preferred_element_type=jnp.float32) + b5[...], 0.0)
    o_ref[...] = (jnp.dot(h, w6[...], preferred_element_type=jnp.float32)
                  + b6[...]).astype(o_ref.dtype)


def _tail(h, rest_params):
    B = h.shape[0]
    full = lambda shape: pl.BlockSpec(shape, lambda i: (0, 0))
    return pl.pallas_call(
        _tail_kernel,
        out_shape=jax.ShapeDtypeStruct((B, NUM_CLASSES), jnp.float32),
        grid=(1,),
        in_specs=[full(h.shape)] + [full(p.shape) for p in rest_params],
        out_specs=full((B, NUM_CLASSES)),
    )(h, *rest_params)


# ------------------------------- wrappers ------------------------------------
def prepare_params(params):
    """One-time parameter prep (do this at load/init time, NOT per forward):
    zero-pad W1 along K so the kernel never re-pads the 276 MiB weight."""
    w1, b1 = params[0], params[1]
    w1_pad = jnp.zeros((K_PAD, HIDDEN_SIZE), jnp.float32).at[:IN_FEATURES, :].set(w1)
    return (w1_pad, b1) + tuple(params[2:])


@jax.jit
def deep_mlp_forward(x, padded_params):
    w1_pad, b1 = padded_params[0], padded_params[1]
    rest = padded_params[2:]
    B = x.shape[0]
    # Only x (~1.1 MiB) is padded per call; padding contributes exactly 0.
    x_pad = jnp.zeros((B, K_PAD), jnp.float32).at[:, :IN_FEATURES].set(x)
    h1 = _layer1(x_pad, w1_pad, b1)
    return _tail(h1, rest)


def init_params(key):
    """Deterministic init, PyTorch-Linear-style uniform(-1/sqrt(fan_in), +)."""
    dims = [
        (IN_FEATURES, HIDDEN_SIZE),
        (HIDDEN_SIZE, HIDDEN_SIZE),
        (HIDDEN_SIZE, HIDDEN_SIZE),
        (HIDDEN_SIZE, HIDDEN_SIZE),
        (HIDDEN_SIZE, HIDDEN_SIZE),
        (HIDDEN_SIZE, NUM_CLASSES),
    ]
    params = []
    for (fan_in, fan_out) in dims:
        key, kw, kb = jax.random.split(key, 3)
        bound = 1.0 / np.sqrt(fan_in)
        w = jax.random.uniform(kw, (fan_in, fan_out), jnp.float32, -bound, bound)
        b = jax.random.uniform(kb, (1, fan_out), jnp.float32, -bound, bound)
        params += [w, b]
    return tuple(params)


def reference_forward(x, params):
    w1, b1, w2, b2, w3, b3, w4, b4, w5, b5, w6, b6 = params
    h = jnp.maximum(x @ w1 + b1, 0.0)
    h = jnp.maximum(h @ w2 + b2, 0.0)
    h = jnp.maximum(h @ w3 + b3, 0.0)
    h = jnp.maximum(h @ w4 + b4, 0.0)
    h = jnp.maximum(h @ w5 + b5, 0.0)
    return h @ w6 + b6


if __name__ == "__main__":
    key = jax.random.PRNGKey(0)
    kx, kp = jax.random.split(key)

    batch = 2
    x = jax.random.normal(kx, (batch, IN_FEATURES), jnp.float32)
    params = init_params(kp)

    padded_params = jax.block_until_ready(prepare_params(params))  # one-time cost

    out = deep_mlp_forward(x, padded_params)
    out = jax.block_until_ready(out)
    assert out.shape == (batch, NUM_CLASSES), out.shape

    ref = jax.block_until_ready(reference_forward(x, params))
    np.testing.assert_allclose(np.asarray(out), np.asarray(ref), rtol=2e-4, atol=2e-4)

    print("KERNEL_OK")
</pallas_src>

<mosaic_0001>
module attributes {stable_mosaic.version = 11 : i64} {
  func.func @_layer1_kernel(%arg0: i32, %arg1: i32, %arg2: memref<2x4096xf32, #tpu.memory_space<vmem>>, %arg3: memref<4096x256xf32, #tpu.memory_space<vmem>>, %arg4: memref<1x256xf32, #tpu.memory_space<vmem>>, %arg5: memref<2x256xf32, #tpu.memory_space<vmem>>, %arg6: memref<2x256xf32, #tpu.memory_space<vmem>>) attributes {dimension_semantics = [#tpu.dimension_semantics<parallel>, #tpu.dimension_semantics<arbitrary>], iteration_bounds = array<i64: 2, 35>, scalar_prefetch = 0 : i64, scratch_operands = 1 : i64, tpu.core_type = #tpu.core_type<tc>, window_params = [{transform_indices = @transform_0, window_bounds = array<i64: 2, 4096>}, {transform_indices = @transform_1, window_bounds = array<i64: 4096, 256>}, {transform_indices = @transform_2, window_bounds = array<i64: 1, 256>}, {transform_indices = @transform_3, window_bounds = array<i64: 2, 256>}]} {
    %c0_i32 = arith.constant 0 : i32
    %0 = arith.cmpi eq, %arg1, %c0_i32 : i32
    %1 = arith.extui %0 : i1 to i32
    %c0_i32_0 = arith.constant 0 : i32
    %2 = arith.cmpi ne, %1, %c0_i32_0 : i32
    scf.if %2 {
      %cst_9 = arith.constant 0.000000e+00 : f32
      %12 = vector.broadcast %cst_9 : f32 to vector<2x256xf32>
      %c0_10 = arith.constant 0 : index
      %c0_11 = arith.constant 0 : index
      %13 = vector.load %arg6[%c0_10, %c0_11] : memref<2x256xf32, #tpu.memory_space<vmem>>, vector<2x256xf32>
      tpu.vector_store %arg6[%c0_10, %c0_11], %12 {strides = array<i32>} : memref<2x256xf32, #tpu.memory_space<vmem>>, vector<2x256xf32>,
    } else {
    }
    %c0 = arith.constant 0 : index
    %c0_1 = arith.constant 0 : index
    %3 = vector.load %arg6[%c0, %c0_1] : memref<2x256xf32, #tpu.memory_space<vmem>>, vector<2x256xf32>
    %c0_2 = arith.constant 0 : index
    %c0_3 = arith.constant 0 : index
    %4 = vector.load %arg2[%c0_2, %c0_3] : memref<2x4096xf32, #tpu.memory_space<vmem>>, vector<2x4096xf32>
    %c0_4 = arith.constant 0 : index
    %c0_5 = arith.constant 0 : index
    %5 = vector.load %arg3[%c0_4, %c0_5] : memref<4096x256xf32, #tpu.memory_space<vmem>>, vector<4096x256xf32>
    %cst = arith.constant dense<0.000000e+00> : vector<2x256xf32>
    %6 = tpu.matmul %4, %5, %cst {dimension_numbers = #tpu.dot_dimension_numbers<[1], [0], [0], [1], [0, 0, 1, 1], [], []>} : vector<2x4096xf32>, vector<4096x256xf32>, vector<2x256xf32> -> vector<2x256xf32>
    %7 = arith.addf %3, %6 : vector<2x256xf32>
    %c0_6 = arith.constant 0 : index
    %c0_7 = arith.constant 0 : index
    %8 = vector.load %arg6[%c0_6, %c0_7] : memref<2x256xf32, #tpu.memory_space<vmem>>, vector<2x256xf32>
    tpu.vector_store %arg6[%c0_6, %c0_7], %7 {strides = array<i32>} : memref<2x256xf32, #tpu.memory_space<vmem>>, vector<2x256xf32>,
    %c34_i32 = arith.constant 34 : i32
    %9 = arith.cmpi eq, %arg1, %c34_i32 : i32
    %10 = arith.extui %9 : i1 to i32
    %c0_i32_8 = arith.constant 0 : i32
    %11 = arith.cmpi ne, %10, %c0_i32_8 : i32
    scf.if %11 {
      %c0_9 = arith.constant 0 : index
      %c0_10 = arith.constant 0 : index
      %12 = vector.load %arg6[%c0_9, %c0_10] : memref<2x256xf32, #tpu.memory_space<vmem>>, vector<2x256xf32>
      %c0_11 = arith.constant 0 : index
      %c0_12 = arith.constant 0 : index
      %13 = vector.load %arg4[%c0_11, %c0_12] : memref<1x256xf32, #tpu.memory_space<vmem>>, vector<1x256xf32>
      %14 = vector.broadcast %13 : vector<1x256xf32> to vector<2x256xf32>
      %15 = arith.addf %12, %14 : vector<2x256xf32>
      %cst_13 = arith.constant 0.000000e+00 : f32
      %16 = vector.broadcast %cst_13 : f32 to vector<2x256xf32>
      %17 = arith.maximumf %15, %16 : vector<2x256xf32>
      %c0_14 = arith.constant 0 : index
      %c0_15 = arith.constant 0 : index
      %18 = vector.load %arg5[%c0_14, %c0_15] : memref<2x256xf32, #tpu.memory_space<vmem>>, vector<2x256xf32>
      tpu.vector_store %arg5[%c0_14, %c0_15], %17 {strides = array<i32>} : memref<2x256xf32, #tpu.memory_space<vmem>>, vector<2x256xf32>,
    } else {
    }
    return
  }
  func.func @transform_0(%arg0: i32, %arg1: i32) -> (i32, i32) {
    %c0_i32 = arith.constant 0 : i32
    %c0_i32_0 = arith.constant 0 : i32
    return %c0_i32, %arg1 : i32, i32
  }
  func.func @transform_1(%arg0: i32, %arg1: i32) -> (i32, i32) {
    %c0_i32 = arith.constant 0 : i32
    return %arg1, %arg0 : i32, i32
  }
  func.func @transform_2(%arg0: i32, %arg1: i32) -> (i32, i32) {
    %c0_i32 = arith.constant 0 : i32
    %c0_i32_0 = arith.constant 0 : i32
    return %c0_i32, %arg0 : i32, i32
  }
  func.func @transform_3(%arg0: i32, %arg1: i32) -> (i32, i32) {
    %c0_i32 = arith.constant 0 : i32
    %c0_i32_0 = arith.constant 0 : i32
    return %c0_i32, %arg0 : i32, i32
  }
}

module attributes {stable_mosaic.version = 11 : i64} {
  func.func @_tail_kernel(%arg0: i32, %arg1: memref<2x512xf32, #tpu.memory_space<vmem>>, %arg2: memref<512x512xf32, #tpu.memory_space<vmem>>, %arg3: memref<1x512xf32, #tpu.memory_space<vmem>>, %arg4: memref<512x512xf32, #tpu.memory_space<vmem>>, %arg5: memref<1x512xf32, #tpu.memory_space<vmem>>, %arg6: memref<512x512xf32, #tpu.memory_space<vmem>>, %arg7: memref<1x512xf32, #tpu.memory_space<vmem>>, %arg8: memref<512x512xf32, #tpu.memory_space<vmem>>, %arg9: memref<1x512xf32, #tpu.memory_space<vmem>>, %arg10: memref<512x56xf32, #tpu.memory_space<vmem>>, %arg11: memref<1x56xf32, #tpu.memory_space<vmem>>, %arg12: memref<2x56xf32, #tpu.memory_space<vmem>>) attributes {dimension_semantics = [#tpu.dimension_semantics<arbitrary>], iteration_bounds = array<i64: 1>, scalar_prefetch = 0 : i64, scratch_operands = 0 : i64, tpu.core_type = #tpu.core_type<tc>, window_params = [{pipeline_mode = #tpu.pipeline_mode<synchronous>, transform_indices = @transform_0, window_bounds = array<i64: 2, 512>}, {pipeline_mode = #tpu.pipeline_mode<synchronous>, transform_indices = @transform_1, window_bounds = array<i64: 512, 512>}, {pipeline_mode = #tpu.pipeline_mode<synchronous>, transform_indices = @transform_2, window_bounds = array<i64: 1, 512>}, {pipeline_mode = #tpu.pipeline_mode<synchronous>, transform_indices = @transform_3, window_bounds = array<i64: 512, 512>}, {pipeline_mode = #tpu.pipeline_mode<synchronous>, transform_indices = @transform_4, window_bounds = array<i64: 1, 512>}, {pipeline_mode = #tpu.pipeline_mode<synchronous>, transform_indices = @transform_5, window_bounds = array<i64: 512, 512>}, {pipeline_mode = #tpu.pipeline_mode<synchronous>, transform_indices = @transform_6, window_bounds = array<i64: 1, 512>}, {pipeline_mode = #tpu.pipeline_mode<synchronous>, transform_indices = @transform_7, window_bounds = array<i64: 512, 512>}, {pipeline_mode = #tpu.pipeline_mode<synchronous>, transform_indices = @transform_8, window_bounds = array<i64: 1, 512>}, {pipeline_mode = #tpu.pipeline_mode<synchronous>, transform_indices = @transform_9, window_bounds = array<i64: 512, 56>}, {pipeline_mode = #tpu.pipeline_mode<synchronous>, transform_indices = @transform_10, window_bounds = array<i64: 1, 56>}, {pipeline_mode = #tpu.pipeline_mode<synchronous>, transform_indices = @transform_11, window_bounds = array<i64: 2, 56>}]} {
    %c0 = arith.constant 0 : index
    %c0_0 = arith.constant 0 : index
    %0 = vector.load %arg1[%c0, %c0_0] : memref<2x512xf32, #tpu.memory_space<vmem>>, vector<2x512xf32>
    %c0_1 = arith.constant 0 : index
    %c0_2 = arith.constant 0 : index
    %1 = vector.load %arg2[%c0_1, %c0_2] : memref<512x512xf32, #tpu.memory_space<vmem>>, vector<512x512xf32>
    %cst = arith.constant dense<0.000000e+00> : vector<2x512xf32>
    %2 = tpu.matmul %0, %1, %cst {dimension_numbers = #tpu.dot_dimension_numbers<[1], [0], [0], [1], [0, 0, 1, 1], [], []>} : vector<2x512xf32>, vector<512x512xf32>, vector<2x512xf32> -> vector<2x512xf32>
    %c0_3 = arith.constant 0 : index
    %c0_4 = arith.constant 0 : index
    %3 = vector.load %arg3[%c0_3, %c0_4] : memref<1x512xf32, #tpu.memory_space<vmem>>, vector<1x512xf32>
    %4 = vector.broadcast %3 : vector<1x512xf32> to vector<2x512xf32>
    %5 = arith.addf %2, %4 : vector<2x512xf32>
    %cst_5 = arith.constant 0.000000e+00 : f32
    %6 = vector.broadcast %cst_5 : f32 to vector<2x512xf32>
    %7 = arith.maximumf %5, %6 : vector<2x512xf32>
    %c0_6 = arith.constant 0 : index
    %c0_7 = arith.constant 0 : index
    %8 = vector.load %arg4[%c0_6, %c0_7] : memref<512x512xf32, #tpu.memory_space<vmem>>, vector<512x512xf32>
    %cst_8 = arith.constant dense<0.000000e+00> : vector<2x512xf32>
    %9 = tpu.matmul %7, %8, %cst_8 {dimension_numbers = #tpu.dot_dimension_numbers<[1], [0], [0], [1], [0, 0, 1, 1], [], []>} : vector<2x512xf32>, vector<512x512xf32>, vector<2x512xf32> -> vector<2x512xf32>
    %c0_9 = arith.constant 0 : index
    %c0_10 = arith.constant 0 : index
    %10 = vector.load %arg5[%c0_9, %c0_10] : memref<1x512xf32, #tpu.memory_space<vmem>>, vector<1x512xf32>
    %11 = vector.broadcast %10 : vector<1x512xf32> to vector<2x512xf32>
    %12 = arith.addf %9, %11 : vector<2x512xf32>
    %cst_11 = arith.constant 0.000000e+00 : f32
    %13 = vector.broadcast %cst_11 : f32 to vector<2x512xf32>
    %14 = arith.maximumf %12, %13 : vector<2x512xf32>
    %c0_12 = arith.constant 0 : index
    %c0_13 = arith.constant 0 : index
    %15 = vector.load %arg6[%c0_12, %c0_13] : memref<512x512xf32, #tpu.memory_space<vmem>>, vector<512x512xf32>
    %cst_14 = arith.constant dense<0.000000e+00> : vector<2x512xf32>
    %16 = tpu.matmul %14, %15, %cst_14 {dimension_numbers = #tpu.dot_dimension_numbers<[1], [0], [0], [1], [0, 0, 1, 1], [], []>} : vector<2x512xf32>, vector<512x512xf32>, vector<2x512xf32> -> vector<2x512xf32>
    %c0_15 = arith.constant 0 : index
    %c0_16 = arith.constant 0 : index
    %17 = vector.load %arg7[%c0_15, %c0_16] : memref<1x512xf32, #tpu.memory_space<vmem>>, vector<1x512xf32>
    %18 = vector.broadcast %17 : vector<1x512xf32> to vector<2x512xf32>
    %19 = arith.addf %16, %18 : vector<2x512xf32>
    %cst_17 = arith.constant 0.000000e+00 : f32
    %20 = vector.broadcast %cst_17 : f32 to vector<2x512xf32>
    %21 = arith.maximumf %19, %20 : vector<2x512xf32>
    %c0_18 = arith.constant 0 : index
    %c0_19 = arith.constant 0 : index
    %22 = vector.load %arg8[%c0_18, %c0_19] : memref<512x512xf32, #tpu.memory_space<vmem>>, vector<512x512xf32>
    %cst_20 = arith.constant dense<0.000000e+00> : vector<2x512xf32>
    %23 = tpu.matmul %21, %22, %cst_20 {dimension_numbers = #tpu.dot_dimension_numbers<[1], [0], [0], [1], [0, 0, 1, 1], [], []>} : vector<2x512xf32>, vector<512x512xf32>, vector<2x512xf32> -> vector<2x512xf32>
    %c0_21 = arith.constant 0 : index
    %c0_22 = arith.constant 0 : index
    %24 = vector.load %arg9[%c0_21, %c0_22] : memref<1x512xf32, #tpu.memory_space<vmem>>, vector<1x512xf32>
    %25 = vector.broadcast %24 : vector<1x512xf32> to vector<2x512xf32>
    %26 = arith.addf %23, %25 : vector<2x512xf32>
    %cst_23 = arith.constant 0.000000e+00 : f32
    %27 = vector.broadcast %cst_23 : f32 to vector<2x512xf32>
    %28 = arith.maximumf %26, %27 : vector<2x512xf32>
    %c0_24 = arith.constant 0 : index
    %c0_25 = arith.constant 0 : index
    %29 = vector.load %arg10[%c0_24, %c0_25] : memref<512x56xf32, #tpu.memory_space<vmem>>, vector<512x56xf32>
    %cst_26 = arith.constant dense<0.000000e+00> : vector<2x56xf32>
    %30 = tpu.matmul %28, %29, %cst_26 {dimension_numbers = #tpu.dot_dimension_numbers<[1], [0], [0], [1], [0, 0, 1, 1], [], []>} : vector<2x512xf32>, vector<512x56xf32>, vector<2x56xf32> -> vector<2x56xf32>
    %c0_27 = arith.constant 0 : index
    %c0_28 = arith.constant 0 : index
    %31 = vector.load %arg11[%c0_27, %c0_28] : memref<1x56xf32, #tpu.memory_space<vmem>>, vector<1x56xf32>
    %32 = vector.broadcast %31 : vector<1x56xf32> to vector<2x56xf32>
    %33 = arith.addf %30, %32 : vector<2x56xf32>
    %c0_29 = arith.constant 0 : index
    %c0_30 = arith.constant 0 : index
    %34 = vector.load %arg12[%c0_29, %c0_30] : memref<2x56xf32, #tpu.memory_space<vmem>>, vector<2x56xf32>
    tpu.vector_store %arg12[%c0_29, %c0_30], %33 {strides = array<i32>} : memref<2x56xf32, #tpu.memory_space<vmem>>, vector<2x56xf32>,
    return
  }
  func.func @transform_0(%arg0: i32) -> (i32, i32) {
    %c0_i32 = arith.constant 0 : i32
    %c0_i32_0 = arith.constant 0 : i32
    %c0_i32_1 = arith.constant 0 : i32
    return %c0_i32, %c0_i32_0 : i32, i32
  }
  func.func @transform_1(%arg0: i32) -> (i32, i32) {
    %c0_i32 = arith.constant 0 : i32
    %c0_i32_0 = arith.constant 0 : i32
    %c0_i32_1 = arith.constant 0 : i32
    return %c0_i32, %c0_i32_0 : i32, i32
  }
  func.func @transform_2(%arg0: i32) -> (i32, i32) {
    %c0_i32 = arith.constant 0 : i32
    %c0_i32_0 = arith.constant 0 : i32
    %c0_i32_1 = arith.constant 0 : i32
    return %c0_i32, %c0_i32_0 : i32, i32
  }
  func.func @transform_3(%arg0: i32) -> (i32, i32) {
    %c0_i32 = arith.constant 0 : i32
    %c0_i32_0 = arith.constant 0 : i32
    %c0_i32_1 = arith.constant 0 : i32
    return %c0_i32, %c0_i32_0 : i32, i32
  }
  func.func @transform_4(%arg0: i32) -> (i32, i32) {
    %c0_i32 = arith.constant 0 : i32
    %c0_i32_0 = arith.constant 0 : i32
    %c0_i32_1 = arith.constant 0 : i32
    return %c0_i32, %c0_i32_0 : i32, i32
  }
  func.func @transform_5(%arg0: i32) -> (i32, i32) {
    %c0_i32 = arith.constant 0 : i32
    %c0_i32_0 = arith.constant 0 : i32
    %c0_i32_1 = arith.constant 0 : i32
    return %c0_i32, %c0_i32_0 : i32, i32
  }
  func.func @transform_6(%arg0: i32) -> (i32, i32) {
    %c0_i32 = arith.constant 0 : i32
    %c0_i32_0 = arith.constant 0 : i32
    %c0_i32_1 = arith.constant 0 : i32
    return %c0_i32, %c0_i32_0 : i32, i32
  }
  func.func @transform_7(%arg0: i32) -> (i32, i32) {
    %c0_i32 = arith.constant 0 : i32
    %c0_i32_0 = arith.constant 0 : i32
    %c0_i32_1 = arith.constant 0 : i32
    return %c0_i32, %c0_i32_0 : i32, i32
  }
  func.func @transform_8(%arg0: i32) -> (i32, i32) {
    %c0_i32 = arith.constant 0 : i32
    %c0_i32_0 = arith.constant 0 : i32
    %c0_i32_1 = arith.constant 0 : i32
    return %c0_i32, %c0_i32_0 : i32, i32
  }
  func.func @transform_9(%arg0: i32) -> (i32, i32) {
    %c0_i32 = arith.constant 0 : i32
    %c0_i32_0 = arith.constant 0 : i32
    %c0_i32_1 = arith.constant 0 : i32
    return %c0_i32, %c0_i32_0 : i32, i32
  }
  func.func @transform_10(%arg0: i32) -> (i32, i32) {
    %c0_i32 = arith.constant 0 : i32
    %c0_i32_0 = arith.constant 0 : i32
    %c0_i32_1 = arith.constant 0 : i32
    return %c0_i32, %c0_i32_0 : i32, i32
  }
  func.func @transform_11(%arg0: i32) -> (i32, i32) {
    %c0_i32 = arith.constant 0 : i32
    %c0_i32_0 = arith.constant 0 : i32
    %c0_i32_1 = arith.constant 0 : i32
    return %c0_i32, %c0_i32_0 : i32, i32
  }
}

</mosaic_0001>

<llo_original>
// kernel: deep_mlp_forward.2
$region0: #{deep_mlp_forward.2}
  #allocation0 [shape = 'u32[]', space=smem, size = 0x4, offset = 0x4, fixed_abs, tag = 'smem constant byte address 0x4 - core index']
  #allocation1 [shape = 'u32[72,128]{1,0:T(1,128)}', space=vmem, size = 0x9000, scoped, tag = 'internal scratch']
  #allocation2 [shape = 'f32[2,256]{1,0:T(2,128)}', space=vmem, size = 0x800, scoped, tag = 'scratch operand']
  %s0 = inlined_call_operand.vmem [shape: f32[2,143360], index: 0, kind: input, shape index: {}]
  %s1 = inlined_call_operand.hbm [shape: f32[143360,512], index: 1, kind: input, shape index: {}]
  %s2 = inlined_call_operand.vmem [shape: f32[1,512], index: 2, kind: input, shape index: {}]
  %s3 = inlined_call_operand.vmem [shape: f32[2,512], index: 3, kind: output, shape index: {}]
  %s4 = sld [smem:[#allocation0]]
  $region57: #{deep_mlp_forward.2} parent=0
    _
  %s6 = ssub.s32 1, %s4
  %s7 = scalar_select 0, %s6, %s4
  $region1: #{deep_mlp_forward.2} parent=0
    #allocation3 [shape = 'u8[8388608]{0}', space=vmem, size = 0x800000, scoped, tag = 'input window, operand 1']
    #allocation4 [shape = 's32[2]{0}', space=sflag, size = 0x8, scoped, tag = 'scoped memory for deep_mlp_forward.2']
    %8 = vsyncpa [#allocation4], 0
    %s9 = scalar_lea.sflag [#allocation4], 1
    %10 = vsyncpa %s9, 0
    loop: start=0, step=1, limit=72
    $region2: #{deep_mlp_forward.2} parent=1 // loop_pre_header
      _
    $region3: #{deep_mlp_forward.2} parent=1 // loop_header
      %s12 = sphi 0, %s16
      %p13 = scmp.ge.s32.totalorder %s12, 72
      %s19 = sphi 0, %s31
      %s20 = sphi 0, %s27
      %s21 = sphi 0, %s19
      %s22 = sphi 0, %s20
      %s23 = sphi 0, %s21
      %s24 = sphi 0, %s22
      %s34 = sphi 0, %s36
      %s37 = sphi 0, %s34
      %s38 = sphi 0, %s37
      %s54 = sphi 0, %s38
      %s62 = sphi 0, %s64
      %s65 = sphi 0, %s62
      %s66 = sphi 0, %s65
      %s82 = sphi 0, %s66
      %s88 = sphi 0, %s90
      %s91 = sphi 0, %s88
      %s92 = sphi 0, %s91
      %s108 = sphi 0, %s92
      %s114 = sphi 0, %s116
      %s117 = sphi 0, %s114
      %s118 = sphi 0, %s117
      %s134 = sphi 0, %s118
    $region4: #{deep_mlp_forward.2} parent=1 // loop_header_branch
      %15 = sbr.rel (%p13) target = $region8
    $region5: #{deep_mlp_forward.2} parent=1 // loop_body
      %s17 = ssub.s32 %s12, 1
      %s18 = ssub.s32 %s12, 2
      %s25 = sadd.s32 1, %s20
      %p26 = scmp.ge.s32.totalorder %s25, 35
      %s27 = scalar_select %p26, 0, %s25
      %s28 = sadd.s32 1, %s19
      %s29 = scalar_select %p26, %s28, %s19
      %p30 = scmp.ge.s32.totalorder %s29, 2
      %s31 = scalar_select %p30, 0, %s29
      %s32 = ssub.s32 %s20, %s27
      %p33 = scmp.eq.s32.totalorder %s32, 0
      %s35 = sadd.s32 %s34, 1
      %s36 = scalar_select %p33, %s34, %s35
      %p39 = pneg %p33
      %p40 = scmp.eq.s32.totalorder %s12, 69
      %p41 = por %p39, %p40
      %p42 = scmp.ne.s32.totalorder %s34, %s37
      %p43 = scmp.eq.s32.totalorder %s12, 0
      %p44 = por %p42, %p43
      %p45 = scmp.ne.s32.totalorder %s34, %s37
      %p46 = scmp.eq.s32.totalorder %s17, 69
      %p47 = por %p45, %p46
      %p48 = scmp.ne.s32.totalorder %s37, %s38
      %p49 = scmp.eq.s32.totalorder %s17, 0
      %p50 = por %p48, %p49
      %p51 = scmp.ne.s32.totalorder %s37, %s38
      %p52 = scmp.eq.s32.totalorder %s18, 69
      %p53 = por %p51, %p52
      %p55 = scmp.ne.s32.totalorder %s38, %s54
      %p56 = scmp.eq.s32.totalorder %s18, 0
      %p57 = por %p55, %p56
      %s58 = ssub.s32 %s20, %s27
      %s59 = ssub.s32 %s19, %s31
      %s60 = sor.u32 %s58, %s59
      %p61 = scmp.eq.s32.totalorder %s60, 0
      %s63 = sadd.s32 %s62, 1
      %s64 = scalar_select %p61, %s62, %s63
      %p67 = pneg %p61
      %p68 = scmp.eq.s32.totalorder %s12, 69
      %p69 = por %p67, %p68
      %p70 = scmp.ne.s32.totalorder %s62, %s65
      %p71 = scmp.eq.s32.totalorder %s12, 0
      %p72 = por %p70, %p71
      %p73 = scmp.ne.s32.totalorder %s62, %s65
      %p74 = scmp.eq.s32.totalorder %s17, 69
      %p75 = por %p73, %p74
      %p76 = scmp.ne.s32.totalorder %s65, %s66
      %p77 = scmp.eq.s32.totalorder %s17, 0
      %p78 = por %p76, %p77
      %p79 = scmp.ne.s32.totalorder %s65, %s66
      %p80 = scmp.eq.s32.totalorder %s18, 69
      %p81 = por %p79, %p80
      %p83 = scmp.ne.s32.totalorder %s66, %s82
      %p84 = scmp.eq.s32.totalorder %s18, 0
      %p85 = por %p83, %p84
      %s86 = ssub.s32 %s19, %s31
      %p87 = scmp.eq.s32.totalorder %s86, 0
      %s89 = sadd.s32 %s88, 1
      %s90 = scalar_select %p87, %s88, %s89
      %p93 = pneg %p87
      %p94 = scmp.eq.s32.totalorder %s12, 69
      %p95 = por %p93, %p94
      %p96 = scmp.ne.s32.totalorder %s88, %s91
      %p97 = scmp.eq.s32.totalorder %s12, 0
      %p98 = por %p96, %p97
      %p99 = scmp.ne.s32.totalorder %s88, %s91
      %p100 = scmp.eq.s32.totalorder %s17, 69
      %p101 = por %p99, %p100
      %p102 = scmp.ne.s32.totalorder %s91, %s92
      %p103 = scmp.eq.s32.totalorder %s17, 0
      %p104 = por %p102, %p103
      %p105 = scmp.ne.s32.totalorder %s91, %s92
      %p106 = scmp.eq.s32.totalorder %s18, 69
      %p107 = por %p105, %p106
      %p109 = scmp.ne.s32.totalorder %s92, %s108
      %p110 = scmp.eq.s32.totalorder %s18, 0
      %p111 = por %p109, %p110
      %s112 = ssub.s32 %s19, %s31
      %p113 = scmp.eq.s32.totalorder %s112, 0
      %s115 = sadd.s32 %s114, 1
      %s116 = scalar_select %p113, %s114, %s115
      %p119 = pneg %p113
      %p120 = scmp.eq.s32.totalorder %s12, 69
      %p121 = por %p119, %p120
      %p122 = scmp.ne.s32.totalorder %s114, %s117
      %p123 = scmp.eq.s32.totalorder %s12, 0
      %p124 = por %p122, %p123
      %p125 = scmp.ne.s32.totalorder %s114, %s117
      %p126 = scmp.eq.s32.totalorder %s17, 69
      %p127 = por %p125, %p126
      %p128 = scmp.ne.s32.totalorder %s117, %s118
      %p129 = scmp.eq.s32.totalorder %s17, 0
      %p130 = por %p128, %p129
      %p131 = scmp.ne.s32.totalorder %s117, %s118
      %p132 = scmp.eq.s32.totalorder %s18, 69
      %p133 = por %p131, %p132
      %p135 = scmp.ne.s32.totalorder %s118, %s134
      %p136 = scmp.eq.s32.totalorder %s18, 0
      %p137 = por %p135, %p136
      %p138 = scmp.le.s32.totalorder 1, %s12
      %p139 = scmp.lt.s32.totalorder %s12, 71
      %p140 = pnand %p138, %p139
      %p141 = pneg %p140
      // Predicated region
      $region9: #{deep_mlp_forward.2} parent=5 // pred_check
        _
      $region10: #{deep_mlp_forward.2} parent=5 // pred_check_branch
        %143 = sbr.rel (%p140) target = $region12
      $region11: #{deep_mlp_forward.2} parent=5 // pred_region
        %s144 = ssub.s32 %s12, 1
      $region12: #{deep_mlp_forward.2} parent=5 // pred_fallthru
        _
      %p145 = scmp.lt.s32.totalorder %s12, 70
      // Predicated region
      $region13: #{deep_mlp_forward.2} parent=5 // pred_check
        %p146 = pneg %p145
      $region14: #{deep_mlp_forward.2} parent=5 // pred_check_branch
        %148 = sbr.rel (%p146) target = $region16
      $region15: #{deep_mlp_forward.2} parent=5 // pred_region
        // Predicated region
        $region17: #{deep_mlp_forward.2} parent=15 // pred_check
          %p149 = pneg %p44
        $region18: #{deep_mlp_forward.2} parent=15 // pred_check_branch
          %151 = sbr.rel (%p149) target = $region20
        $region19: #{deep_mlp_forward.2} parent=15 // pred_region
          %s152 = smul.u32 32, %s20
          %p153 = scmp.lt.s32.totalorder %s152, 1119
          %s154 = scalar_select %p153, %s152, 1119
          %s155 = smul.addr %s154, 2
          %s156 = scalar_lea.vmem %s0, %s155
          %s157 = smul.u32 32, %s20
        $region20: #{deep_mlp_forward.2} parent=15 // pred_fallthru
          _
        // Predicated region
        $region21: #{deep_mlp_forward.2} parent=15 // pred_check
          %p158 = pneg %p72
        $region22: #{deep_mlp_forward.2} parent=15 // pred_check_branch
          %160 = sbr.rel (%p158) target = $region24
        $region23: #{deep_mlp_forward.2} parent=15 // pred_region
          %s161 = sand.u32 %s62, 1
          %s162 = scalar_lea.sflag [#allocation4], %s161
          %s163 = sand.u32 %s62, 1
          %s164 = smul.addr %s163, 8192
          %s165 = scalar_lea.vmem [#allocation3], %s164
          %s166 = smul.u32 512, %s20
          %s167 = smul.u32 2, %s19
          %169 = vsyncadd %s162, 0
          %s170 = smul.addr %s166, 4
          %s171 = sadd.s32 %s167, %s170
          %s172 = smul.addr %s171, 8
          %s173 = scalar_lea.hbm %s1, %s172
          %s174 = sshll.u32 %s173, 4
          %s175 = int_to_ptr.hbm [resolvable:$true] %s174
          %s176 = sshll.u32 %s165, 4
          %s177 = int_to_ptr.vmem [resolvable:$true] %s176
          %182 = dma.hbm_to_vmem [thread:$0]  %s175, 131072, %s177, %s162, 512, 256, 16
        $region24: #{deep_mlp_forward.2} parent=15 // pred_fallthru
          _
        // Predicated region
        $region25: #{deep_mlp_forward.2} parent=15 // pred_check
          %p183 = pneg %p98
        $region26: #{deep_mlp_forward.2} parent=15 // pred_check_branch
          %185 = sbr.rel (%p183) target = $region28
        $region27: #{deep_mlp_forward.2} parent=15 // pred_region
          %s186 = smul.u32 2, %s19
          %p187 = scmp.lt.s32.totalorder %s186, 3
          %s188 = scalar_select %p187, %s186, 3
          %s189 = scalar_lea.vmem %s2, %s188
          %s190 = smul.u32 2, %s19
        $region28: #{deep_mlp_forward.2} parent=15 // pred_fallthru
          _
      $region16: #{deep_mlp_forward.2} parent=5 // pred_fallthru
        _
      %p191 = scmp.le.s32.totalorder 1, %s12
      %p192 = scmp.lt.s32.totalorder %s12, 71
      %p193 = pnand %p191, %p192
      %p194 = pneg %p193
      // Predicated region
      $region29: #{deep_mlp_forward.2} parent=5 // pred_check
        _
      $region30: #{deep_mlp_forward.2} parent=5 // pred_check_branch
        %196 = sbr.rel (%p193) target = $region32
      $region31: #{deep_mlp_forward.2} parent=5 // pred_region
        %s197 = ssub.s32 %s12, 1
        %s198 = sand.u32 %s65, 1
        %s199 = scalar_lea.sflag [#allocation4], %s198
        %s200 = sand.u32 %s65, 1
        %s201 = smul.addr %s200, 8192
        %s202 = scalar_lea.vmem [#allocation3], %s201
        // Predicated region
        $region33: #{deep_mlp_forward.2} parent=31 // pred_check
          %p203 = pneg %p78
        $region34: #{deep_mlp_forward.2} parent=31 // pred_check_branch
          %205 = sbr.rel (%p203) target = $region36
        $region35: #{deep_mlp_forward.2} parent=31 // pred_region
          %207 = dma.done %s199, 131072
        $region36: #{deep_mlp_forward.2} parent=31 // pred_fallthru
          _
        %s208 = smul.u32 32, %s22
        %p209 = scmp.lt.s32.totalorder %s208, 1119
        %s210 = scalar_select %p209, %s208, 1119
        %s211 = smul.addr %s210, 2
        %s212 = scalar_lea.vmem %s0, %s211
        %p213 = pneg %p50
        %p214 = pneg %p47
        %s215 = sand.u32 %s65, 1
        %s216 = scalar_lea.sflag [#allocation4], %s215
        %s217 = sand.u32 %s65, 1
        %s218 = smul.addr %s217, 8192
        %s219 = scalar_lea.vmem [#allocation3], %s218
        %p220 = pneg %p78
        %p221 = pneg %p75
        %s222 = smul.u32 2, %s21
        %p223 = scmp.lt.s32.totalorder %s222, 3
        %s224 = scalar_select %p223, %s222, 3
        %s225 = scalar_lea.vmem %s2, %s224
        %p226 = pneg %p104
        %p227 = pneg %p101
        %p228 = pneg %p130
        %p229 = pneg %p127
        %s230 = smul.u32 2, %s21
        %p231 = scmp.lt.s32.totalorder %s230, 3
        %s232 = scalar_select %p231, %s230, 3
        %s233 = smul.addr %s232, 2
        %s234 = scalar_lea.vmem %s3, %s233
        %s235 = smul.u32 32, %s22
        %p236 = scmp.lt.s32.totalorder %s235, 1119
        %s237 = scalar_select %p236, %s235, 1119
        %s238 = smul.addr %s237, 2
        %s239 = scalar_lea.vmem %s0, %s238
        %s240 = smul.u32 32, %s22
        %s241 = smul.u32 512, %s22
        %s242 = smul.u32 2, %s21
        %s243 = smul.u32 2, %s21
        %p244 = scmp.lt.s32.totalorder %s243, 3
        %s245 = scalar_select %p244, %s243, 3
        %s246 = scalar_lea.vmem %s2, %s245
        %s247 = smul.u32 2, %s21
        %s248 = smul.u32 2, %s21
        %p249 = scmp.lt.s32.totalorder %s248, 3
        %s250 = scalar_select %p249, %s248, 3
        %s251 = smul.addr %s250, 2
        %s252 = scalar_lea.vmem %s3, %s251
        %s253 = smul.u32 2, %s21
        %p254 = scmp.eq.s32.totalorder %s22, 0
        // Predicated region
        $region37: #{deep_mlp_forward.2} parent=31 // pred_check
          %p255 = pneg %p254
        $region38: #{deep_mlp_forward.2} parent=31 // pred_check_branch
          %257 = sbr.rel (%p255) target = $region40
        $region39: #{deep_mlp_forward.2} parent=31 // pred_region
          %258 = vst [vmem:[#allocation2] sm:$0xf] 0.0
        $region40: #{deep_mlp_forward.2} parent=31 // pred_fallthru
          _
        %v259 = vld [vmem:[#allocation2] sm:$0xf]
        %v260 = vld [vmem:[%s239] sm:$0xff]
        %v261 = vld [vmem:[%s239 + $0x8] sm:$0xff]
        %v262 = vld [vmem:[%s239 + $0x10] sm:$0xff]
        %v263 = vld [vmem:[%s239 + $0x18] sm:$0xff]
        %v264 = vld [vmem:[%s239 + $0x20] sm:$0xff]
        %v265 = vld [vmem:[%s239 + $0x28] sm:$0xff]
        %v266 = vld [vmem:[%s239 + $0x30] sm:$0xff]
        %v267 = vld [vmem:[%s239 + $0x38] sm:$0xff]
        %v268 = vld [vmem:[%s202] sm:$0xff]
        %v269 = vld [vmem:[%s202 + $0x8] sm:$0xff]
        %v270 = vld [vmem:[%s202 + $0x10] sm:$0xff]
        %v271 = vld [vmem:[%s202 + $0x18] sm:$0xff]
        %v272 = vld [vmem:[%s202 + $0x20] sm:$0xff]
        %v273 = vld [vmem:[%s202 + $0x28] sm:$0xff]
        %v274 = vld [vmem:[%s202 + $0x30] sm:$0xff]
        %v275 = vld [vmem:[%s202 + $0x38] sm:$0xff]
        %v276 = vld [vmem:[%s202 + $0x40] sm:$0xff]
        %v277 = vld [vmem:[%s202 + $0x48] sm:$0xff]
        %v278 = vld [vmem:[%s202 + $0x50] sm:$0xff]
        %v279 = vld [vmem:[%s202 + $0x58] sm:$0xff]
        %v280 = vld [vmem:[%s202 + $0x60] sm:$0xff]
        %v281 = vld [vmem:[%s202 + $0x68] sm:$0xff]
        %v282 = vld [vmem:[%s202 + $0x70] sm:$0xff]
        %v283 = vld [vmem:[%s202 + $0x78] sm:$0xff]
        %v284 = vld [vmem:[%s202 + $0x80] sm:$0xff]
        %v285 = vld [vmem:[%s202 + $0x88] sm:$0xff]
        %v286 = vld [vmem:[%s202 + $0x90] sm:$0xff]
        %v287 = vld [vmem:[%s202 + $0x98] sm:$0xff]
        %v288 = vld [vmem:[%s202 + $0xa0] sm:$0xff]
        %v289 = vld [vmem:[%s202 + $0xa8] sm:$0xff]
        %v290 = vld [vmem:[%s202 + $0xb0] sm:$0xff]
        %v291 = vld [vmem:[%s202 + $0xb8] sm:$0xff]
        %v292 = vld [vmem:[%s202 + $0xc0] sm:$0xff]
        %v293 = vld [vmem:[%s202 + $0xc8] sm:$0xff]
        %v294 = vld [vmem:[%s202 + $0xd0] sm:$0xff]
        %v295 = vld [vmem:[%s202 + $0xd8] sm:$0xff]
        %v296 = vld [vmem:[%s202 + $0xe0] sm:$0xff]
        %v297 = vld [vmem:[%s202 + $0xe8] sm:$0xff]
        %v298 = vld [vmem:[%s202 + $0xf0] sm:$0xff]
        %v299 = vld [vmem:[%s202 + $0xf8] sm:$0xff]
        %v300 = vld [vmem:[%s202 + $0x100] sm:$0xff]
        %v301 = vld [vmem:[%s202 + $0x108] sm:$0xff]
        %v302 = vld [vmem:[%s202 + $0x110] sm:$0xff]
        %v303 = vld [vmem:[%s202 + $0x118] sm:$0xff]
        %v304 = vld [vmem:[%s202 + $0x120] sm:$0xff]
        %v305 = vld [vmem:[%s202 + $0x128] sm:$0xff]
        %v306 = vld [vmem:[%s202 + $0x130] sm:$0xff]
        %v307 = vld [vmem:[%s202 + $0x138] sm:$0xff]
        %v308 = vld [vmem:[%s202 + $0x140] sm:$0xff]
        %v309 = vld [vmem:[%s202 + $0x148] sm:$0xff]
        %v310 = vld [vmem:[%s202 + $0x150] sm:$0xff]
        %v311 = vld [vmem:[%s202 + $0x158] sm:$0xff]
        %v312 = vld [vmem:[%s202 + $0x160] sm:$0xff]
        %v313 = vld [vmem:[%s202 + $0x168] sm:$0xff]
        %v314 = vld [vmem:[%s202 + $0x170] sm:$0xff]
        %v315 = vld [vmem:[%s202 + $0x178] sm:$0xff]
        %v316 = vld [vmem:[%s202 + $0x180] sm:$0xff]
        %v317 = vld [vmem:[%s202 + $0x188] sm:$0xff]
        %v318 = vld [vmem:[%s202 + $0x190] sm:$0xff]
        %v319 = vld [vmem:[%s202 + $0x198] sm:$0xff]
        %v320 = vld [vmem:[%s202 + $0x1a0] sm:$0xff]
        %v321 = vld [vmem:[%s202 + $0x1a8] sm:$0xff]
        %v322 = vld [vmem:[%s202 + $0x1b0] sm:$0xff]
        %v323 = vld [vmem:[%s202 + $0x1b8] sm:$0xff]
        %v324 = vld [vmem:[%s202 + $0x1c0] sm:$0xff]
        %v325 = vld [vmem:[%s202 + $0x1c8] sm:$0xff]
        %v326 = vld [vmem:[%s202 + $0x1d0] sm:$0xff]
        %v327 = vld [vmem:[%s202 + $0x1d8] sm:$0xff]
        %v328 = vld [vmem:[%s202 + $0x1e0] sm:$0xff]
        %v329 = vld [vmem:[%s202 + $0x1e8] sm:$0xff]
        %v330 = vld [vmem:[%s202 + $0x1f0] sm:$0xff]
        %v331 = vld [vmem:[%s202 + $0x1f8] sm:$0xff]
        %v332 = vld [vmem:[%s202 + $0x200] sm:$0xff]
        %v333 = vld [vmem:[%s202 + $0x208] sm:$0xff]
        %v334 = vld [vmem:[%s202 + $0x210] sm:$0xff]
        %v335 = vld [vmem:[%s202 + $0x218] sm:$0xff]
        %v336 = vld [vmem:[%s202 + $0x220] sm:$0xff]
        %v337 = vld [vmem:[%s202 + $0x228] sm:$0xff]
        %v338 = vld [vmem:[%s202 + $0x230] sm:$0xff]
        %v339 = vld [vmem:[%s202 + $0x238] sm:$0xff]
        %v340 = vld [vmem:[%s202 + $0x240] sm:$0xff]
        %v341 = vld [vmem:[%s202 + $0x248] sm:$0xff]
        %v342 = vld [vmem:[%s202 + $0x250] sm:$0xff]
        %v343 = vld [vmem:[%s202 + $0x258] sm:$0xff]
        %v344 = vld [vmem:[%s202 + $0x260] sm:$0xff]
        %v345 = vld [vmem:[%s202 + $0x268] sm:$0xff]
        %v346 = vld [vmem:[%s202 + $0x270] sm:$0xff]
        %v347 = vld [vmem:[%s202 + $0x278] sm:$0xff]
        %v348 = vld [vmem:[%s202 + $0x280] sm:$0xff]
        %v349 = vld [vmem:[%s202 + $0x288] sm:$0xff]
        %v350 = vld [vmem:[%s202 + $0x290] sm:$0xff]
        %v351 = vld [vmem:[%s202 + $0x298] sm:$0xff]
        %v352 = vld [vmem:[%s202 + $0x2a0] sm:$0xff]
        %v353 = vld [vmem:[%s202 + $0x2a8] sm:$0xff]
        %v354 = vld [vmem:[%s202 + $0x2b0] sm:$0xff]
        %v355 = vld [vmem:[%s202 + $0x2b8] sm:$0xff]
        %v356 = vld [vmem:[%s202 + $0x2c0] sm:$0xff]
        %v357 = vld [vmem:[%s202 + $0x2c8] sm:$0xff]
        %v358 = vld [vmem:[%s202 + $0x2d0] sm:$0xff]
        %v359 = vld [vmem:[%s202 + $0x2d8] sm:$0xff]
        %v360 = vld [vmem:[%s202 + $0x2e0] sm:$0xff]
        %v361 = vld [vmem:[%s202 + $0x2e8] sm:$0xff]
        %v362 = vld [vmem:[%s202 + $0x2f0] sm:$0xff]
        %v363 = vld [vmem:[%s202 + $0x2f8] sm:$0xff]
        %v364 = vld [vmem:[%s202 + $0x300] sm:$0xff]
        %v365 = vld [vmem:[%s202 + $0x308] sm:$0xff]
        %v366 = vld [vmem:[%s202 + $0x310] sm:$0xff]
        %v367 = vld [vmem:[%s202 + $0x318] sm:$0xff]
        %v368 = vld [vmem:[%s202 + $0x320] sm:$0xff]
        %v369 = vld [vmem:[%s202 + $0x328] sm:$0xff]
        %v370 = vld [vmem:[%s202 + $0x330] sm:$0xff]
        %v371 = vld [vmem:[%s202 + $0x338] sm:$0xff]
        %v372 = vld [vmem:[%s202 + $0x340] sm:$0xff]
        %v373 = vld [vmem:[%s202 + $0x348] sm:$0xff]
        %v374 = vld [vmem:[%s202 + $0x350] sm:$0xff]
        %v375 = vld [vmem:[%s202 + $0x358] sm:$0xff]
        %v376 = vld [vmem:[%s202 + $0x360] sm:$0xff]
        %v377 = vld [vmem:[%s202 + $0x368] sm:$0xff]
        %v378 = vld [vmem:[%s202 + $0x370] sm:$0xff]
        %v379 = vld [vmem:[%s202 + $0x378] sm:$0xff]
        %v380 = vld [vmem:[%s202 + $0x380] sm:$0xff]
        %v381 = vld [vmem:[%s202 + $0x388] sm:$0xff]
        %v382 = vld [vmem:[%s202 + $0x390] sm:$0xff]
        %v383 = vld [vmem:[%s202 + $0x398] sm:$0xff]
        %v384 = vld [vmem:[%s202 + $0x3a0] sm:$0xff]
        %v385 = vld [vmem:[%s202 + $0x3a8] sm:$0xff]
        %v386 = vld [vmem:[%s202 + $0x3b0] sm:$0xff]
        %v387 = vld [vmem:[%s202 + $0x3b8] sm:$0xff]
        %v388 = vld [vmem:[%s202 + $0x3c0] sm:$0xff]
        %v389 = vld [vmem:[%s202 + $0x3c8] sm:$0xff]
        %v390 = vld [vmem:[%s202 + $0x3d0] sm:$0xff]
        %v391 = vld [vmem:[%s202 + $0x3d8] sm:$0xff]
        %v392 = vld [vmem:[%s202 + $0x3e0] sm:$0xff]
        %v393 = vld [vmem:[%s202 + $0x3e8] sm:$0xff]
        %v394 = vld [vmem:[%s202 + $0x3f0] sm:$0xff]
        %v395 = vld [vmem:[%s202 + $0x3f8] sm:$0xff]
        %v396 = vld [vmem:[%s202 + $0x400] sm:$0xff]
        %v397 = vld [vmem:[%s202 + $0x408] sm:$0xff]
        %v398 = vld [vmem:[%s202 + $0x410] sm:$0xff]
        %v399 = vld [vmem:[%s202 + $0x418] sm:$0xff]
        %v400 = vld [vmem:[%s202 + $0x420] sm:$0xff]
        %v401 = vld [vmem:[%s202 + $0x428] sm:$0xff]
        %v402 = vld [vmem:[%s202 + $0x430] sm:$0xff]
        %v403 = vld [vmem:[%s202 + $0x438] sm:$0xff]
        %v404 = vld [vmem:[%s202 + $0x440] sm:$0xff]
        %v405 = vld [vmem:[%s202 + $0x448] sm:$0xff]
        %v406 = vld [vmem:[%s202 + $0x450] sm:$0xff]
        %v407 = vld [vmem:[%s202 + $0x458] sm:$0xff]
        %v408 = vld [vmem:[%s202 + $0x460] sm:$0xff]
        %v409 = vld [vmem:[%s202 + $0x468] sm:$0xff]
        %v410 = vld [vmem:[%s202 + $0x470] sm:$0xff]
        %v411 = vld [vmem:[%s202 + $0x478] sm:$0xff]
        %v412 = vld [vmem:[%s202 + $0x480] sm:$0xff]
        %v413 = vld [vmem:[%s202 + $0x488] sm:$0xff]
        %v414 = vld [vmem:[%s202 + $0x490] sm:$0xff]
        %v415 = vld [vmem:[%s202 + $0x498] sm:$0xff]
        %v416 = vld [vmem:[%s202 + $0x4a0] sm:$0xff]
        %v417 = vld [vmem:[%s202 + $0x4a8] sm:$0xff]
        %v418 = vld [vmem:[%s202 + $0x4b0] sm:$0xff]
        %v419 = vld [vmem:[%s202 + $0x4b8] sm:$0xff]
        %v420 = vld [vmem:[%s202 + $0x4c0] sm:$0xff]
        %v421 = vld [vmem:[%s202 + $0x4c8] sm:$0xff]
        %v422 = vld [vmem:[%s202 + $0x4d0] sm:$0xff]
        %v423 = vld [vmem:[%s202 + $0x4d8] sm:$0xff]
        %v424 = vld [vmem:[%s202 + $0x4e0] sm:$0xff]
        %v425 = vld [vmem:[%s202 + $0x4e8] sm:$0xff]
        %v426 = vld [vmem:[%s202 + $0x4f0] sm:$0xff]
        %v427 = vld [vmem:[%s202 + $0x4f8] sm:$0xff]
        %v428 = vld [vmem:[%s202 + $0x500] sm:$0xff]
        %v429 = vld [vmem:[%s202 + $0x508] sm:$0xff]
        %v430 = vld [vmem:[%s202 + $0x510] sm:$0xff]
        %v431 = vld [vmem:[%s202 + $0x518] sm:$0xff]
        %v432 = vld [vmem:[%s202 + $0x520] sm:$0xff]
        %v433 = vld [vmem:[%s202 + $0x528] sm:$0xff]
        %v434 = vld [vmem:[%s202 + $0x530] sm:$0xff]
        %v435 = vld [vmem:[%s202 + $0x538] sm:$0xff]
        %v436 = vld [vmem:[%s202 + $0x540] sm:$0xff]
        %v437 = vld [vmem:[%s202 + $0x548] sm:$0xff]
        %v438 = vld [vmem:[%s202 + $0x550] sm:$0xff]
        %v439 = vld [vmem:[%s202 + $0x558] sm:$0xff]
        %v440 = vld [vmem:[%s202 + $0x560] sm:$0xff]
        %v441 = vld [vmem:[%s202 + $0x568] sm:$0xff]
        %v442 = vld [vmem:[%s202 + $0x570] sm:$0xff]
        %v443 = vld [vmem:[%s202 + $0x578] sm:$0xff]
        %v444 = vld [vmem:[%s202 + $0x580] sm:$0xff]
        %v445 = vld [vmem:[%s202 + $0x588] sm:$0xff]
        %v446 = vld [vmem:[%s202 + $0x590] sm:$0xff]
        %v447 = vld [vmem:[%s202 + $0x598] sm:$0xff]
        %v448 = vld [vmem:[%s202 + $0x5a0] sm:$0xff]
        %v449 = vld [vmem:[%s202 + $0x5a8] sm:$0xff]
        %v450 = vld [vmem:[%s202 + $0x5b0] sm:$0xff]
        %v451 = vld [vmem:[%s202 + $0x5b8] sm:$0xff]
        %v452 = vld [vmem:[%s202 + $0x5c0] sm:$0xff]
        %v453 = vld [vmem:[%s202 + $0x5c8] sm:$0xff]
        %v454 = vld [vmem:[%s202 + $0x5d0] sm:$0xff]
        %v455 = vld [vmem:[%s202 + $0x5d8] sm:$0xff]
        %v456 = vld [vmem:[%s202 + $0x5e0] sm:$0xff]
        %v457 = vld [vmem:[%s202 + $0x5e8] sm:$0xff]
        %v458 = vld [vmem:[%s202 + $0x5f0] sm:$0xff]
        %v459 = vld [vmem:[%s202 + $0x5f8] sm:$0xff]
        %v460 = vld [vmem:[%s202 + $0x600] sm:$0xff]
        %v461 = vld [vmem:[%s202 + $0x608] sm:$0xff]
        %v462 = vld [vmem:[%s202 + $0x610] sm:$0xff]
        %v463 = vld [vmem:[%s202 + $0x618] sm:$0xff]
        %v464 = vld [vmem:[%s202 + $0x620] sm:$0xff]
        %v465 = vld [vmem:[%s202 + $0x628] sm:$0xff]
        %v466 = vld [vmem:[%s202 + $0x630] sm:$0xff]
        %v467 = vld [vmem:[%s202 + $0x638] sm:$0xff]
        %v468 = vld [vmem:[%s202 + $0x640] sm:$0xff]
        %v469 = vld [vmem:[%s202 + $0x648] sm:$0xff]
        %v470 = vld [vmem:[%s202 + $0x650] sm:$0xff]
        %v471 = vld [vmem:[%s202 + $0x658] sm:$0xff]
        %v472 = vld [vmem:[%s202 + $0x660] sm:$0xff]
        %v473 = vld [vmem:[%s202 + $0x668] sm:$0xff]
        %v474 = vld [vmem:[%s202 + $0x670] sm:$0xff]
        %v475 = vld [vmem:[%s202 + $0x678] sm:$0xff]
        %v476 = vld [vmem:[%s202 + $0x680] sm:$0xff]
        %v477 = vld [vmem:[%s202 + $0x688] sm:$0xff]
        %v478 = vld [vmem:[%s202 + $0x690] sm:$0xff]
        %v479 = vld [vmem:[%s202 + $0x698] sm:$0xff]
        %v480 = vld [vmem:[%s202 + $0x6a0] sm:$0xff]
        %v481 = vld [vmem:[%s202 + $0x6a8] sm:$0xff]
        %v482 = vld [vmem:[%s202 + $0x6b0] sm:$0xff]
        %v483 = vld [vmem:[%s202 + $0x6b8] sm:$0xff]
        %v484 = vld [vmem:[%s202 + $0x6c0] sm:$0xff]
        %v485 = vld [vmem:[%s202 + $0x6c8] sm:$0xff]
        %v486 = vld [vmem:[%s202 + $0x6d0] sm:$0xff]
        %v487 = vld [vmem:[%s202 + $0x6d8] sm:$0xff]
        %v488 = vld [vmem:[%s202 + $0x6e0] sm:$0xff]
        %v489 = vld [vmem:[%s202 + $0x6e8] sm:$0xff]
        %v490 = vld [vmem:[%s202 + $0x6f0] sm:$0xff]
        %v491 = vld [vmem:[%s202 + $0x6f8] sm:$0xff]
        %v492 = vld [vmem:[%s202 + $0x700] sm:$0xff]
        %v493 = vld [vmem:[%s202 + $0x708] sm:$0xff]
        %v494 = vld [vmem:[%s202 + $0x710] sm:$0xff]
        %v495 = vld [vmem:[%s202 + $0x718] sm:$0xff]
        %v496 = vld [vmem:[%s202 + $0x720] sm:$0xff]
        %v497 = vld [vmem:[%s202 + $0x728] sm:$0xff]
        %v498 = vld [vmem:[%s202 + $0x730] sm:$0xff]
        %v499 = vld [vmem:[%s202 + $0x738] sm:$0xff]
        %v500 = vld [vmem:[%s202 + $0x740] sm:$0xff]
        %v501 = vld [vmem:[%s202 + $0x748] sm:$0xff]
        %v502 = vld [vmem:[%s202 + $0x750] sm:$0xff]
        %v503 = vld [vmem:[%s202 + $0x758] sm:$0xff]
        %v504 = vld [vmem:[%s202 + $0x760] sm:$0xff]
        %v505 = vld [vmem:[%s202 + $0x768] sm:$0xff]
        %v506 = vld [vmem:[%s202 + $0x770] sm:$0xff]
        %v507 = vld [vmem:[%s202 + $0x778] sm:$0xff]
        %v508 = vld [vmem:[%s202 + $0x780] sm:$0xff]
        %v509 = vld [vmem:[%s202 + $0x788] sm:$0xff]
        %v510 = vld [vmem:[%s202 + $0x790] sm:$0xff]
        %v511 = vld [vmem:[%s202 + $0x798] sm:$0xff]
        %v512 = vld [vmem:[%s202 + $0x7a0] sm:$0xff]
        %v513 = vld [vmem:[%s202 + $0x7a8] sm:$0xff]
        %v514 = vld [vmem:[%s202 + $0x7b0] sm:$0xff]
        %v515 = vld [vmem:[%s202 + $0x7b8] sm:$0xff]
        %v516 = vld [vmem:[%s202 + $0x7c0] sm:$0xff]
        %v517 = vld [vmem:[%s202 + $0x7c8] sm:$0xff]
        %v518 = vld [vmem:[%s202 + $0x7d0] sm:$0xff]
        %v519 = vld [vmem:[%s202 + $0x7d8] sm:$0xff]
        %v520 = vld [vmem:[%s202 + $0x7e0] sm:$0xff]
        %v521 = vld [vmem:[%s202 + $0x7e8] sm:$0xff]
        %v522 = vld [vmem:[%s202 + $0x7f0] sm:$0xff]
        %v523 = vld [vmem:[%s202 + $0x7f8] sm:$0xff]
        %v524 = vld [vmem:[%s202 + $0x800] sm:$0xff]
        %v525 = vld [vmem:[%s202 + $0x808] sm:$0xff]
        %v526 = vld [vmem:[%s202 + $0x810] sm:$0xff]
        %v527 = vld [vmem:[%s202 + $0x818] sm:$0xff]
        %v528 = vld [vmem:[%s202 + $0x820] sm:$0xff]
        %v529 = vld [vmem:[%s202 + $0x828] sm:$0xff]
        %v530 = vld [vmem:[%s202 + $0x830] sm:$0xff]
        %v531 = vld [vmem:[%s202 + $0x838] sm:$0xff]
        %v532 = vld [vmem:[%s202 + $0x840] sm:$0xff]
        %v533 = vld [vmem:[%s202 + $0x848] sm:$0xff]
        %v534 = vld [vmem:[%s202 + $0x850] sm:$0xff]
        %v535 = vld [vmem:[%s202 + $0x858] sm:$0xff]
        %v536 = vld [vmem:[%s202 + $0x860] sm:$0xff]
        %v537 = vld [vmem:[%s202 + $0x868] sm:$0xff]
        %v538 = vld [vmem:[%s202 + $0x870] sm:$0xff]
        %v539 = vld [vmem:[%s202 + $0x878] sm:$0xff]
        %v540 = vld [vmem:[%s202 + $0x880] sm:$0xff]
        %v541 = vld [vmem:[%s202 + $0x888] sm:$0xff]
        %v542 = vld [vmem:[%s202 + $0x890] sm:$0xff]
        %v543 = vld [vmem:[%s202 + $0x898] sm:$0xff]
        %v544 = vld [vmem:[%s202 + $0x8a0] sm:$0xff]
        %v545 = vld [vmem:[%s202 + $0x8a8] sm:$0xff]
        %v546 = vld [vmem:[%s202 + $0x8b0] sm:$0xff]
        %v547 = vld [vmem:[%s202 + $0x8b8] sm:$0xff]
        %v548 = vld [vmem:[%s202 + $0x8c0] sm:$0xff]
        %v549 = vld [vmem:[%s202 + $0x8c8] sm:$0xff]
        %v550 = vld [vmem:[%s202 + $0x8d0] sm:$0xff]
        %v551 = vld [vmem:[%s202 + $0x8d8] sm:$0xff]
        %v552 = vld [vmem:[%s202 + $0x8e0] sm:$0xff]
        %v553 = vld [vmem:[%s202 + $0x8e8] sm:$0xff]
        %v554 = vld [vmem:[%s202 + $0x8f0] sm:$0xff]
        %v555 = vld [vmem:[%s202 + $0x8f8] sm:$0xff]
        %v556 = vld [vmem:[%s202 + $0x900] sm:$0xff]
        %v557 = vld [vmem:[%s202 + $0x908] sm:$0xff]
        %v558 = vld [vmem:[%s202 + $0x910] sm:$0xff]
        %v559 = vld [vmem:[%s202 + $0x918] sm:$0xff]
        %v560 = vld [vmem:[%s202 + $0x920] sm:$0xff]
        %v561 = vld [vmem:[%s202 + $0x928] sm:$0xff]
        %v562 = vld [vmem:[%s202 + $0x930] sm:$0xff]
        %v563 = vld [vmem:[%s202 + $0x938] sm:$0xff]
        %v564 = vld [vmem:[%s202 + $0x940] sm:$0xff]
        %v565 = vld [vmem:[%s202 + $0x948] sm:$0xff]
        %v566 = vld [vmem:[%s202 + $0x950] sm:$0xff]
        %v567 = vld [vmem:[%s202 + $0x958] sm:$0xff]
        %v568 = vld [vmem:[%s202 + $0x960] sm:$0xff]
        %v569 = vld [vmem:[%s202 + $0x968] sm:$0xff]
        %v570 = vld [vmem:[%s202 + $0x970] sm:$0xff]
        %v571 = vld [vmem:[%s202 + $0x978] sm:$0xff]
        %v572 = vld [vmem:[%s202 + $0x980] sm:$0xff]
        %v573 = vld [vmem:[%s202 + $0x988] sm:$0xff]
        %v574 = vld [vmem:[%s202 + $0x990] sm:$0xff]
        %v575 = vld [vmem:[%s202 + $0x998] sm:$0xff]
        %v576 = vld [vmem:[%s202 + $0x9a0] sm:$0xff]
        %v577 = vld [vmem:[%s202 + $0x9a8] sm:$0xff]
        %v578 = vld [vmem:[%s202 + $0x9b0] sm:$0xff]
        %v579 = vld [vmem:[%s202 + $0x9b8] sm:$0xff]
        %v580 = vld [vmem:[%s202 + $0x9c0] sm:$0xff]
        %v581 = vld [vmem:[%s202 + $0x9c8] sm:$0xff]
        %v582 = vld [vmem:[%s202 + $0x9d0] sm:$0xff]
        %v583 = vld [vmem:[%s202 + $0x9d8] sm:$0xff]
        %v584 = vld [vmem:[%s202 + $0x9e0] sm:$0xff]
        %v585 = vld [vmem:[%s202 + $0x9e8] sm:$0xff]
        %v586 = vld [vmem:[%s202 + $0x9f0] sm:$0xff]
        %v587 = vld [vmem:[%s202 + $0x9f8] sm:$0xff]
        %v588 = vld [vmem:[%s202 + $0xa00] sm:$0xff]
        %v589 = vld [vmem:[%s202 + $0xa08] sm:$0xff]
        %v590 = vld [vmem:[%s202 + $0xa10] sm:$0xff]
        %v591 = vld [vmem:[%s202 + $0xa18] sm:$0xff]
        %v592 = vld [vmem:[%s202 + $0xa20] sm:$0xff]
        %v593 = vld [vmem:[%s202 + $0xa28] sm:$0xff]
        %v594 = vld [vmem:[%s202 + $0xa30] sm:$0xff]
        %v595 = vld [vmem:[%s202 + $0xa38] sm:$0xff]
        %v596 = vld [vmem:[%s202 + $0xa40] sm:$0xff]
        %v597 = vld [vmem:[%s202 + $0xa48] sm:$0xff]
        %v598 = vld [vmem:[%s202 + $0xa50] sm:$0xff]
        %v599 = vld [vmem:[%s202 + $0xa58] sm:$0xff]
        %v600 = vld [vmem:[%s202 + $0xa60] sm:$0xff]
        %v601 = vld [vmem:[%s202 + $0xa68] sm:$0xff]
        %v602 = vld [vmem:[%s202 + $0xa70] sm:$0xff]
        %v603 = vld [vmem:[%s202 + $0xa78] sm:$0xff]
        %v604 = vld [vmem:[%s202 + $0xa80] sm:$0xff]
        %v605 = vld [vmem:[%s202 + $0xa88] sm:$0xff]
        %v606 = vld [vmem:[%s202 + $0xa90] sm:$0xff]
        %v607 = vld [vmem:[%s202 + $0xa98] sm:$0xff]
        %v608 = vld [vmem:[%s202 + $0xaa0] sm:$0xff]
        %v609 = vld [vmem:[%s202 + $0xaa8] sm:$0xff]
        %v610 = vld [vmem:[%s202 + $0xab0] sm:$0xff]
        %v611 = vld [vmem:[%s202 + $0xab8] sm:$0xff]
        %v612 = vld [vmem:[%s202 + $0xac0] sm:$0xff]
        %v613 = vld [vmem:[%s202 + $0xac8] sm:$0xff]
        %v614 = vld [vmem:[%s202 + $0xad0] sm:$0xff]
        %v615 = vld [vmem:[%s202 + $0xad8] sm:$0xff]
        %v616 = vld [vmem:[%s202 + $0xae0] sm:$0xff]
        %v617 = vld [vmem:[%s202 + $0xae8] sm:$0xff]
        %v618 = vld [vmem:[%s202 + $0xaf0] sm:$0xff]
        %v619 = vld [vmem:[%s202 + $0xaf8] sm:$0xff]
        %v620 = vld [vmem:[%s202 + $0xb00] sm:$0xff]
        %v621 = vld [vmem:[%s202 + $0xb08] sm:$0xff]
        %v622 = vld [vmem:[%s202 + $0xb10] sm:$0xff]
        %v623 = vld [vmem:[%s202 + $0xb18] sm:$0xff]
        %v624 = vld [vmem:[%s202 + $0xb20] sm:$0xff]
        %v625 = vld [vmem:[%s202 + $0xb28] sm:$0xff]
        %v626 = vld [vmem:[%s202 + $0xb30] sm:$0xff]
        %v627 = vld [vmem:[%s202 + $0xb38] sm:$0xff]
        %v628 = vld [vmem:[%s202 + $0xb40] sm:$0xff]
        %v629 = vld [vmem:[%s202 + $0xb48] sm:$0xff]
        %v630 = vld [vmem:[%s202 + $0xb50] sm:$0xff]
        %v631 = vld [vmem:[%s202 + $0xb58] sm:$0xff]
        %v632 = vld [vmem:[%s202 + $0xb60] sm:$0xff]
        %v633 = vld [vmem:[%s202 + $0xb68] sm:$0xff]
        %v634 = vld [vmem:[%s202 + $0xb70] sm:$0xff]
        %v635 = vld [vmem:[%s202 + $0xb78] sm:$0xff]
        %v636 = vld [vmem:[%s202 + $0xb80] sm:$0xff]
        %v637 = vld [vmem:[%s202 + $0xb88] sm:$0xff]
        %v638 = vld [vmem:[%s202 + $0xb90] sm:$0xff]
        %v639 = vld [vmem:[%s202 + $0xb98] sm:$0xff]
        %v640 = vld [vmem:[%s202 + $0xba0] sm:$0xff]
        %v641 = vld [vmem:[%s202 + $0xba8] sm:$0xff]
        %v642 = vld [vmem:[%s202 + $0xbb0] sm:$0xff]
        %v643 = vld [vmem:[%s202 + $0xbb8] sm:$0xff]
        %v644 = vld [vmem:[%s202 + $0xbc0] sm:$0xff]
        %v645 = vld [vmem:[%s202 + $0xbc8] sm:$0xff]
        %v646 = vld [vmem:[%s202 + $0xbd0] sm:$0xff]
        %v647 = vld [vmem:[%s202 + $0xbd8] sm:$0xff]
        %v648 = vld [vmem:[%s202 + $0xbe0] sm:$0xff]
        %v649 = vld [vmem:[%s202 + $0xbe8] sm:$0xff]
        %v650 = vld [vmem:[%s202 + $0xbf0] sm:$0xff]
        %v651 = vld [vmem:[%s202 + $0xbf8] sm:$0xff]
        %v652 = vld [vmem:[%s202 + $0xc00] sm:$0xff]
        %v653 = vld [vmem:[%s202 + $0xc08] sm:$0xff]
        %v654 = vld [vmem:[%s202 + $0xc10] sm:$0xff]
        %v655 = vld [vmem:[%s202 + $0xc18] sm:$0xff]
        %v656 = vld [vmem:[%s202 + $0xc20] sm:$0xff]
        %v657 = vld [vmem:[%s202 + $0xc28] sm:$0xff]
        %v658 = vld [vmem:[%s202 + $0xc30] sm:$0xff]
        %v659 = vld [vmem:[%s202 + $0xc38] sm:$0xff]
        %v660 = vld [vmem:[%s202 + $0xc40] sm:$0xff]
        %v661 = vld [vmem:[%s202 + $0xc48] sm:$0xff]
        %v662 = vld [vmem:[%s202 + $0xc50] sm:$0xff]
        %v663 = vld [vmem:[%s202 + $0xc58] sm:$0xff]
        %v664 = vld [vmem:[%s202 + $0xc60] sm:$0xff]
        %v665 = vld [vmem:[%s202 + $0xc68] sm:$0xff]
        %v666 = vld [vmem:[%s202 + $0xc70] sm:$0xff]
        %v667 = vld [vmem:[%s202 + $0xc78] sm:$0xff]
        %v668 = vld [vmem:[%s202 + $0xc80] sm:$0xff]
        %v669 = vld [vmem:[%s202 + $0xc88] sm:$0xff]
        %v670 = vld [vmem:[%s202 + $0xc90] sm:$0xff]
        %v671 = vld [vmem:[%s202 + $0xc98] sm:$0xff]
        %v672 = vld [vmem:[%s202 + $0xca0] sm:$0xff]
        %v673 = vld [vmem:[%s202 + $0xca8] sm:$0xff]
        %v674 = vld [vmem:[%s202 + $0xcb0] sm:$0xff]
        %v675 = vld [vmem:[%s202 + $0xcb8] sm:$0xff]
        %v676 = vld [vmem:[%s202 + $0xcc0] sm:$0xff]
        %v677 = vld [vmem:[%s202 + $0xcc8] sm:$0xff]
        %v678 = vld [vmem:[%s202 + $0xcd0] sm:$0xff]
        %v679 = vld [vmem:[%s202 + $0xcd8] sm:$0xff]
        %v680 = vld [vmem:[%s202 + $0xce0] sm:$0xff]
        %v681 = vld [vmem:[%s202 + $0xce8] sm:$0xff]
        %v682 = vld [vmem:[%s202 + $0xcf0] sm:$0xff]
        %v683 = vld [vmem:[%s202 + $0xcf8] sm:$0xff]
        %v684 = vld [vmem:[%s202 + $0xd00] sm:$0xff]
        %v685 = vld [vmem:[%s202 + $0xd08] sm:$0xff]
        %v686 = vld [vmem:[%s202 + $0xd10] sm:$0xff]
        %v687 = vld [vmem:[%s202 + $0xd18] sm:$0xff]
        %v688 = vld [vmem:[%s202 + $0xd20] sm:$0xff]
        %v689 = vld [vmem:[%s202 + $0xd28] sm:$0xff]
        %v690 = vld [vmem:[%s202 + $0xd30] sm:$0xff]
        %v691 = vld [vmem:[%s202 + $0xd38] sm:$0xff]
        %v692 = vld [vmem:[%s202 + $0xd40] sm:$0xff]
        %v693 = vld [vmem:[%s202 + $0xd48] sm:$0xff]
        %v694 = vld [vmem:[%s202 + $0xd50] sm:$0xff]
        %v695 = vld [vmem:[%s202 + $0xd58] sm:$0xff]
        %v696 = vld [vmem:[%s202 + $0xd60] sm:$0xff]
        %v697 = vld [vmem:[%s202 + $0xd68] sm:$0xff]
        %v698 = vld [vmem:[%s202 + $0xd70] sm:$0xff]
        %v699 = vld [vmem:[%s202 + $0xd78] sm:$0xff]
        %v700 = vld [vmem:[%s202 + $0xd80] sm:$0xff]
        %v701 = vld [vmem:[%s202 + $0xd88] sm:$0xff]
        %v702 = vld [vmem:[%s202 + $0xd90] sm:$0xff]
        %v703 = vld [vmem:[%s202 + $0xd98] sm:$0xff]
        %v704 = vld [vmem:[%s202 + $0xda0] sm:$0xff]
        %v705 = vld [vmem:[%s202 + $0xda8] sm:$0xff]
        %v706 = vld [vmem:[%s202 + $0xdb0] sm:$0xff]
        %v707 = vld [vmem:[%s202 + $0xdb8] sm:$0xff]
        %v708 = vld [vmem:[%s202 + $0xdc0] sm:$0xff]
        %v709 = vld [vmem:[%s202 + $0xdc8] sm:$0xff]
        %v710 = vld [vmem:[%s202 + $0xdd0] sm:$0xff]
        %v711 = vld [vmem:[%s202 + $0xdd8] sm:$0xff]
        %v712 = vld [vmem:[%s202 + $0xde0] sm:$0xff]
        %v713 = vld [vmem:[%s202 + $0xde8] sm:$0xff]
        %v714 = vld [vmem:[%s202 + $0xdf0] sm:$0xff]
        %v715 = vld [vmem:[%s202 + $0xdf8] sm:$0xff]
        %v716 = vld [vmem:[%s202 + $0xe00] sm:$0xff]
        %v717 = vld [vmem:[%s202 + $0xe08] sm:$0xff]
        %v718 = vld [vmem:[%s202 + $0xe10] sm:$0xff]
        %v719 = vld [vmem:[%s202 + $0xe18] sm:$0xff]
        %v720 = vld [vmem:[%s202 + $0xe20] sm:$0xff]
        %v721 = vld [vmem:[%s202 + $0xe28] sm:$0xff]
        %v722 = vld [vmem:[%s202 + $0xe30] sm:$0xff]
        %v723 = vld [vmem:[%s202 + $0xe38] sm:$0xff]
        %v724 = vld [vmem:[%s202 + $0xe40] sm:$0xff]
        %v725 = vld [vmem:[%s202 + $0xe48] sm:$0xff]
        %v726 = vld [vmem:[%s202 + $0xe50] sm:$0xff]
        %v727 = vld [vmem:[%s202 + $0xe58] sm:$0xff]
        %v728 = vld [vmem:[%s202 + $0xe60] sm:$0xff]
        %v729 = vld [vmem:[%s202 + $0xe68] sm:$0xff]
        %v730 = vld [vmem:[%s202 + $0xe70] sm:$0xff]
        %v731 = vld [vmem:[%s202 + $0xe78] sm:$0xff]
        %v732 = vld [vmem:[%s202 + $0xe80] sm:$0xff]
        %v733 = vld [vmem:[%s202 + $0xe88] sm:$0xff]
        %v734 = vld [vmem:[%s202 + $0xe90] sm:$0xff]
        %v735 = vld [vmem:[%s202 + $0xe98] sm:$0xff]
        %v736 = vld [vmem:[%s202 + $0xea0] sm:$0xff]
        %v737 = vld [vmem:[%s202 + $0xea8] sm:$0xff]
        %v738 = vld [vmem:[%s202 + $0xeb0] sm:$0xff]
        %v739 = vld [vmem:[%s202 + $0xeb8] sm:$0xff]
        %v740 = vld [vmem:[%s202 + $0xec0] sm:$0xff]
        %v741 = vld [vmem:[%s202 + $0xec8] sm:$0xff]
        %v742 = vld [vmem:[%s202 + $0xed0] sm:$0xff]
        %v743 = vld [vmem:[%s202 + $0xed8] sm:$0xff]
        %v744 = vld [vmem:[%s202 + $0xee0] sm:$0xff]
        %v745 = vld [vmem:[%s202 + $0xee8] sm:$0xff]
        %v746 = vld [vmem:[%s202 + $0xef0] sm:$0xff]
        %v747 = vld [vmem:[%s202 + $0xef8] sm:$0xff]
        %v748 = vld [vmem:[%s202 + $0xf00] sm:$0xff]
        %v749 = vld [vmem:[%s202 + $0xf08] sm:$0xff]
        %v750 = vld [vmem:[%s202 + $0xf10] sm:$0xff]
        %v751 = vld [vmem:[%s202 + $0xf18] sm:$0xff]
        %v752 = vld [vmem:[%s202 + $0xf20] sm:$0xff]
        %v753 = vld [vmem:[%s202 + $0xf28] sm:$0xff]
        %v754 = vld [vmem:[%s202 + $0xf30] sm:$0xff]
        %v755 = vld [vmem:[%s202 + $0xf38] sm:$0xff]
        %v756 = vld [vmem:[%s202 + $0xf40] sm:$0xff]
        %v757 = vld [vmem:[%s202 + $0xf48] sm:$0xff]
        %v758 = vld [vmem:[%s202 + $0xf50] sm:$0xff]
        %v759 = vld [vmem:[%s202 + $0xf58] sm:$0xff]
        %v760 = vld [vmem:[%s202 + $0xf60] sm:$0xff]
        %v761 = vld [vmem:[%s202 + $0xf68] sm:$0xff]
        %v762 = vld [vmem:[%s202 + $0xf70] sm:$0xff]
        %v763 = vld [vmem:[%s202 + $0xf78] sm:$0xff]
        %v764 = vld [vmem:[%s202 + $0xf80] sm:$0xff]
        %v765 = vld [vmem:[%s202 + $0xf88] sm:$0xff]
        %v766 = vld [vmem:[%s202 + $0xf90] sm:$0xff]
        %v767 = vld [vmem:[%s202 + $0xf98] sm:$0xff]
        %v768 = vld [vmem:[%s202 + $0xfa0] sm:$0xff]
        %v769 = vld [vmem:[%s202 + $0xfa8] sm:$0xff]
        %v770 = vld [vmem:[%s202 + $0xfb0] sm:$0xff]
        %v771 = vld [vmem:[%s202 + $0xfb8] sm:$0xff]
        %v772 = vld [vmem:[%s202 + $0xfc0] sm:$0xff]
        %v773 = vld [vmem:[%s202 + $0xfc8] sm:$0xff]
        %v774 = vld [vmem:[%s202 + $0xfd0] sm:$0xff]
        %v775 = vld [vmem:[%s202 + $0xfd8] sm:$0xff]
        %v776 = vld [vmem:[%s202 + $0xfe0] sm:$0xff]
        %v777 = vld [vmem:[%s202 + $0xfe8] sm:$0xff]
        %v778 = vld [vmem:[%s202 + $0xff0] sm:$0xff]
        %v779 = vld [vmem:[%s202 + $0xff8] sm:$0xff]
        %v780 = vld [vmem:[%s202 + $0x1000] sm:$0xff]
        %v781 = vld [vmem:[%s202 + $0x1008] sm:$0xff]
        %v782 = vld [vmem:[%s202 + $0x1010] sm:$0xff]
        %v783 = vld [vmem:[%s202 + $0x1018] sm:$0xff]
        %v784 = vld [vmem:[%s202 + $0x1020] sm:$0xff]
        %v785 = vld [vmem:[%s202 + $0x1028] sm:$0xff]
        %v786 = vld [vmem:[%s202 + $0x1030] sm:$0xff]
        %v787 = vld [vmem:[%s202 + $0x1038] sm:$0xff]
        %v788 = vld [vmem:[%s202 + $0x1040] sm:$0xff]
        %v789 = vld [vmem:[%s202 + $0x1048] sm:$0xff]
        %v790 = vld [vmem:[%s202 + $0x1050] sm:$0xff]
        %v791 = vld [vmem:[%s202 + $0x1058] sm:$0xff]
        %v792 = vld [vmem:[%s202 + $0x1060] sm:$0xff]
        %v793 = vld [vmem:[%s202 + $0x1068] sm:$0xff]
        %v794 = vld [vmem:[%s202 + $0x1070] sm:$0xff]
        %v795 = vld [vmem:[%s202 + $0x1078] sm:$0xff]
        %v796 = vld [vmem:[%s202 + $0x1080] sm:$0xff]
        %v797 = vld [vmem:[%s202 + $0x1088] sm:$0xff]
        %v798 = vld [vmem:[%s202 + $0x1090] sm:$0xff]
        %v799 = vld [vmem:[%s202 + $0x1098] sm:$0xff]
        %v800 = vld [vmem:[%s202 + $0x10a0] sm:$0xff]
        %v801 = vld [vmem:[%s202 + $0x10a8] sm:$0xff]
        %v802 = vld [vmem:[%s202 + $0x10b0] sm:$0xff]
        %v803 = vld [vmem:[%s202 + $0x10b8] sm:$0xff]
        %v804 = vld [vmem:[%s202 + $0x10c0] sm:$0xff]
        %v805 = vld [vmem:[%s202 + $0x10c8] sm:$0xff]
        %v806 = vld [vmem:[%s202 + $0x10d0] sm:$0xff]
        %v807 = vld [vmem:[%s202 + $0x10d8] sm:$0xff]
        %v808 = vld [vmem:[%s202 + $0x10e0] sm:$0xff]
        %v809 = vld [vmem:[%s202 + $0x10e8] sm:$0xff]
        %v810 = vld [vmem:[%s202 + $0x10f0] sm:$0xff]
        %v811 = vld [vmem:[%s202 + $0x10f8] sm:$0xff]
        %v812 = vld [vmem:[%s202 + $0x1100] sm:$0xff]
        %v813 = vld [vmem:[%s202 + $0x1108] sm:$0xff]
        %v814 = vld [vmem:[%s202 + $0x1110] sm:$0xff]
        %v815 = vld [vmem:[%s202 + $0x1118] sm:$0xff]
        %v816 = vld [vmem:[%s202 + $0x1120] sm:$0xff]
        %v817 = vld [vmem:[%s202 + $0x1128] sm:$0xff]
        %v818 = vld [vmem:[%s202 + $0x1130] sm:$0xff]
        %v819 = vld [vmem:[%s202 + $0x1138] sm:$0xff]
        %v820 = vld [vmem:[%s202 + $0x1140] sm:$0xff]
        %v821 = vld [vmem:[%s202 + $0x1148] sm:$0xff]
        %v822 = vld [vmem:[%s202 + $0x1150] sm:$0xff]
        %v823 = vld [vmem:[%s202 + $0x1158] sm:$0xff]
        %v824 = vld [vmem:[%s202 + $0x1160] sm:$0xff]
        %v825 = vld [vmem:[%s202 + $0x1168] sm:$0xff]
        %v826 = vld [vmem:[%s202 + $0x1170] sm:$0xff]
        %v827 = vld [vmem:[%s202 + $0x1178] sm:$0xff]
        %v828 = vld [vmem:[%s202 + $0x1180] sm:$0xff]
        %v829 = vld [vmem:[%s202 + $0x1188] sm:$0xff]
        %v830 = vld [vmem:[%s202 + $0x1190] sm:$0xff]
        %v831 = vld [vmem:[%s202 + $0x1198] sm:$0xff]
        %v832 = vld [vmem:[%s202 + $0x11a0] sm:$0xff]
        %v833 = vld [vmem:[%s202 + $0x11a8] sm:$0xff]
        %v834 = vld [vmem:[%s202 + $0x11b0] sm:$0xff]
        %v835 = vld [vmem:[%s202 + $0x11b8] sm:$0xff]
        %v836 = vld [vmem:[%s202 + $0x11c0] sm:$0xff]
        %v837 = vld [vmem:[%s202 + $0x11c8] sm:$0xff]
        %v838 = vld [vmem:[%s202 + $0x11d0] sm:$0xff]
        %v839 = vld [vmem:[%s202 + $0x11d8] sm:$0xff]
        %v840 = vld [vmem:[%s202 + $0x11e0] sm:$0xff]
        %v841 = vld [vmem:[%s202 + $0x11e8] sm:$0xff]
        %v842 = vld [vmem:[%s202 + $0x11f0] sm:$0xff]
        %v843 = vld [vmem:[%s202 + $0x11f8] sm:$0xff]
        %v844 = vld [vmem:[%s202 + $0x1200] sm:$0xff]
        %v845 = vld [vmem:[%s202 + $0x1208] sm:$0xff]
        %v846 = vld [vmem:[%s202 + $0x1210] sm:$0xff]
        %v847 = vld [vmem:[%s202 + $0x1218] sm:$0xff]
        %v848 = vld [vmem:[%s202 + $0x1220] sm:$0xff]
        %v849 = vld [vmem:[%s202 + $0x1228] sm:$0xff]
        %v850 = vld [vmem:[%s202 + $0x1230] sm:$0xff]
        %v851 = vld [vmem:[%s202 + $0x1238] sm:$0xff]
        %v852 = vld [vmem:[%s202 + $0x1240] sm:$0xff]
        %v853 = vld [vmem:[%s202 + $0x1248] sm:$0xff]
        %v854 = vld [vmem:[%s202 + $0x1250] sm:$0xff]
        %v855 = vld [vmem:[%s202 + $0x1258] sm:$0xff]
        %v856 = vld [vmem:[%s202 + $0x1260] sm:$0xff]
        %v857 = vld [vmem:[%s202 + $0x1268] sm:$0xff]
        %v858 = vld [vmem:[%s202 + $0x1270] sm:$0xff]
        %v859 = vld [vmem:[%s202 + $0x1278] sm:$0xff]
        %v860 = vld [vmem:[%s202 + $0x1280] sm:$0xff]
        %v861 = vld [vmem:[%s202 + $0x1288] sm:$0xff]
        %v862 = vld [vmem:[%s202 + $0x1290] sm:$0xff]
        %v863 = vld [vmem:[%s202 + $0x1298] sm:$0xff]
        %v864 = vld [vmem:[%s202 + $0x12a0] sm:$0xff]
        %v865 = vld [vmem:[%s202 + $0x12a8] sm:$0xff]
        %v866 = vld [vmem:[%s202 + $0x12b0] sm:$0xff]
        %v867 = vld [vmem:[%s202 + $0x12b8] sm:$0xff]
        %v868 = vld [vmem:[%s202 + $0x12c0] sm:$0xff]
        %v869 = vld [vmem:[%s202 + $0x12c8] sm:$0xff]
        %v870 = vld [vmem:[%s202 + $0x12d0] sm:$0xff]
        %v871 = vld [vmem:[%s202 + $0x12d8] sm:$0xff]
        %v872 = vld [vmem:[%s202 + $0x12e0] sm:$0xff]
        %v873 = vld [vmem:[%s202 + $0x12e8] sm:$0xff]
        %v874 = vld [vmem:[%s202 + $0x12f0] sm:$0xff]
        %v875 = vld [vmem:[%s202 + $0x12f8] sm:$0xff]
        %v876 = vld [vmem:[%s202 + $0x1300] sm:$0xff]
        %v877 = vld [vmem:[%s202 + $0x1308] sm:$0xff]
        %v878 = vld [vmem:[%s202 + $0x1310] sm:$0xff]
        %v879 = vld [vmem:[%s202 + $0x1318] sm:$0xff]
        %v880 = vld [vmem:[%s202 + $0x1320] sm:$0xff]
        %v881 = vld [vmem:[%s202 + $0x1328] sm:$0xff]
        %v882 = vld [vmem:[%s202 + $0x1330] sm:$0xff]
        %v883 = vld [vmem:[%s202 + $0x1338] sm:$0xff]
        %v884 = vld [vmem:[%s202 + $0x1340] sm:$0xff]
        %v885 = vld [vmem:[%s202 + $0x1348] sm:$0xff]
        %v886 = vld [vmem:[%s202 + $0x1350] sm:$0xff]
        %v887 = vld [vmem:[%s202 + $0x1358] sm:$0xff]
        %v888 = vld [vmem:[%s202 + $0x1360] sm:$0xff]
        %v889 = vld [vmem:[%s202 + $0x1368] sm:$0xff]
        %v890 = vld [vmem:[%s202 + $0x1370] sm:$0xff]
        %v891 = vld [vmem:[%s202 + $0x1378] sm:$0xff]
        %v892 = vld [vmem:[%s202 + $0x1380] sm:$0xff]
        %v893 = vld [vmem:[%s202 + $0x1388] sm:$0xff]
        %v894 = vld [vmem:[%s202 + $0x1390] sm:$0xff]
        %v895 = vld [vmem:[%s202 + $0x1398] sm:$0xff]
        %v896 = vld [vmem:[%s202 + $0x13a0] sm:$0xff]
        %v897 = vld [vmem:[%s202 + $0x13a8] sm:$0xff]
        %v898 = vld [vmem:[%s202 + $0x13b0] sm:$0xff]
        %v899 = vld [vmem:[%s202 + $0x13b8] sm:$0xff]
        %v900 = vld [vmem:[%s202 + $0x13c0] sm:$0xff]
        %v901 = vld [vmem:[%s202 + $0x13c8] sm:$0xff]
        %v902 = vld [vmem:[%s202 + $0x13d0] sm:$0xff]
        %v903 = vld [vmem:[%s202 + $0x13d8] sm:$0xff]
        %v904 = vld [vmem:[%s202 + $0x13e0] sm:$0xff]
        %v905 = vld [vmem:[%s202 + $0x13e8] sm:$0xff]
        %v906 = vld [vmem:[%s202 + $0x13f0] sm:$0xff]
        %v907 = vld [vmem:[%s202 + $0x13f8] sm:$0xff]
        %v908 = vld [vmem:[%s202 + $0x1400] sm:$0xff]
        %v909 = vld [vmem:[%s202 + $0x1408] sm:$0xff]
        %v910 = vld [vmem:[%s202 + $0x1410] sm:$0xff]
        %v911 = vld [vmem:[%s202 + $0x1418] sm:$0xff]
        %v912 = vld [vmem:[%s202 + $0x1420] sm:$0xff]
        %v913 = vld [vmem:[%s202 + $0x1428] sm:$0xff]
        %v914 = vld [vmem:[%s202 + $0x1430] sm:$0xff]
        %v915 = vld [vmem:[%s202 + $0x1438] sm:$0xff]
        %v916 = vld [vmem:[%s202 + $0x1440] sm:$0xff]
        %v917 = vld [vmem:[%s202 + $0x1448] sm:$0xff]
        %v918 = vld [vmem:[%s202 + $0x1450] sm:$0xff]
        %v919 = vld [vmem:[%s202 + $0x1458] sm:$0xff]
        %v920 = vld [vmem:[%s202 + $0x1460] sm:$0xff]
        %v921 = vld [vmem:[%s202 + $0x1468] sm:$0xff]
        %v922 = vld [vmem:[%s202 + $0x1470] sm:$0xff]
        %v923 = vld [vmem:[%s202 + $0x1478] sm:$0xff]
        %v924 = vld [vmem:[%s202 + $0x1480] sm:$0xff]
        %v925 = vld [vmem:[%s202 + $0x1488] sm:$0xff]
        %v926 = vld [vmem:[%s202 + $0x1490] sm:$0xff]
        %v927 = vld [vmem:[%s202 + $0x1498] sm:$0xff]
        %v928 = vld [vmem:[%s202 + $0x14a0] sm:$0xff]
        %v929 = vld [vmem:[%s202 + $0x14a8] sm:$0xff]
        %v930 = vld [vmem:[%s202 + $0x14b0] sm:$0xff]
        %v931 = vld [vmem:[%s202 + $0x14b8] sm:$0xff]
        %v932 = vld [vmem:[%s202 + $0x14c0] sm:$0xff]
        %v933 = vld [vmem:[%s202 + $0x14c8] sm:$0xff]
        %v934 = vld [vmem:[%s202 + $0x14d0] sm:$0xff]
        %v935 = vld [vmem:[%s202 + $0x14d8] sm:$0xff]
        %v936 = vld [vmem:[%s202 + $0x14e0] sm:$0xff]
        %v937 = vld [vmem:[%s202 + $0x14e8] sm:$0xff]
        %v938 = vld [vmem:[%s202 + $0x14f0] sm:$0xff]
        %v939 = vld [vmem:[%s202 + $0x14f8] sm:$0xff]
        %v940 = vld [vmem:[%s202 + $0x1500] sm:$0xff]
        %v941 = vld [vmem:[%s202 + $0x1508] sm:$0xff]
        %v942 = vld [vmem:[%s202 + $0x1510] sm:$0xff]
        %v943 = vld [vmem:[%s202 + $0x1518] sm:$0xff]
        %v944 = vld [vmem:[%s202 + $0x1520] sm:$0xff]
        %v945 = vld [vmem:[%s202 + $0x1528] sm:$0xff]
        %v946 = vld [vmem:[%s202 + $0x1530] sm:$0xff]
        %v947 = vld [vmem:[%s202 + $0x1538] sm:$0xff]
        %v948 = vld [vmem:[%s202 + $0x1540] sm:$0xff]
        %v949 = vld [vmem:[%s202 + $0x1548] sm:$0xff]
        %v950 = vld [vmem:[%s202 + $0x1550] sm:$0xff]
        %v951 = vld [vmem:[%s202 + $0x1558] sm:$0xff]
        %v952 = vld [vmem:[%s202 + $0x1560] sm:$0xff]
        %v953 = vld [vmem:[%s202 + $0x1568] sm:$0xff]
        %v954 = vld [vmem:[%s202 + $0x1570] sm:$0xff]
        %v955 = vld [vmem:[%s202 + $0x1578] sm:$0xff]
        %v956 = vld [vmem:[%s202 + $0x1580] sm:$0xff]
        %v957 = vld [vmem:[%s202 + $0x1588] sm:$0xff]
        %v958 = vld [vmem:[%s202 + $0x1590] sm:$0xff]
        %v959 = vld [vmem:[%s202 + $0x1598] sm:$0xff]
        %v960 = vld [vmem:[%s202 + $0x15a0] sm:$0xff]
        %v961 = vld [vmem:[%s202 + $0x15a8] sm:$0xff]
        %v962 = vld [vmem:[%s202 + $0x15b0] sm:$0xff]
        %v963 = vld [vmem:[%s202 + $0x15b8] sm:$0xff]
        %v964 = vld [vmem:[%s202 + $0x15c0] sm:$0xff]
        %v965 = vld [vmem:[%s202 + $0x15c8] sm:$0xff]
        %v966 = vld [vmem:[%s202 + $0x15d0] sm:$0xff]
        %v967 = vld [vmem:[%s202 + $0x15d8] sm:$0xff]
        %v968 = vld [vmem:[%s202 + $0x15e0] sm:$0xff]
        %v969 = vld [vmem:[%s202 + $0x15e8] sm:$0xff]
        %v970 = vld [vmem:[%s202 + $0x15f0] sm:$0xff]
        %v971 = vld [vmem:[%s202 + $0x15f8] sm:$0xff]
        %v972 = vld [vmem:[%s202 + $0x1600] sm:$0xff]
        %v973 = vld [vmem:[%s202 + $0x1608] sm:$0xff]
        %v974 = vld [vmem:[%s202 + $0x1610] sm:$0xff]
        %v975 = vld [vmem:[%s202 + $0x1618] sm:$0xff]
        %v976 = vld [vmem:[%s202 + $0x1620] sm:$0xff]
        %v977 = vld [vmem:[%s202 + $0x1628] sm:$0xff]
        %v978 = vld [vmem:[%s202 + $0x1630] sm:$0xff]
        %v979 = vld [vmem:[%s202 + $0x1638] sm:$0xff]
        %v980 = vld [vmem:[%s202 + $0x1640] sm:$0xff]
        %v981 = vld [vmem:[%s202 + $0x1648] sm:$0xff]
        %v982 = vld [vmem:[%s202 + $0x1650] sm:$0xff]
        %v983 = vld [vmem:[%s202 + $0x1658] sm:$0xff]
        %v984 = vld [vmem:[%s202 + $0x1660] sm:$0xff]
        %v985 = vld [vmem:[%s202 + $0x1668] sm:$0xff]
        %v986 = vld [vmem:[%s202 + $0x1670] sm:$0xff]
        %v987 = vld [vmem:[%s202 + $0x1678] sm:$0xff]
        %v988 = vld [vmem:[%s202 + $0x1680] sm:$0xff]
        %v989 = vld [vmem:[%s202 + $0x1688] sm:$0xff]
        %v990 = vld [vmem:[%s202 + $0x1690] sm:$0xff]
        %v991 = vld [vmem:[%s202 + $0x1698] sm:$0xff]
        %v992 = vld [vmem:[%s202 + $0x16a0] sm:$0xff]
        %v993 = vld [vmem:[%s202 + $0x16a8] sm:$0xff]
        %v994 = vld [vmem:[%s202 + $0x16b0] sm:$0xff]
        %v995 = vld [vmem:[%s202 + $0x16b8] sm:$0xff]
        %v996 = vld [vmem:[%s202 + $0x16c0] sm:$0xff]
        %v997 = vld [vmem:[%s202 + $0x16c8] sm:$0xff]
        %v998 = vld [vmem:[%s202 + $0x16d0] sm:$0xff]
        %v999 = vld [vmem:[%s202 + $0x16d8] sm:$0xff]
        %v1000 = vld [vmem:[%s202 + $0x16e0] sm:$0xff]
        %v1001 = vld [vmem:[%s202 + $0x16e8] sm:$0xff]
        %v1002 = vld [vmem:[%s202 + $0x16f0] sm:$0xff]
        %v1003 = vld [vmem:[%s202 + $0x16f8] sm:$0xff]
        %v1004 = vld [vmem:[%s202 + $0x1700] sm:$0xff]
        %v1005 = vld [vmem:[%s202 + $0x1708] sm:$0xff]
        %v1006 = vld [vmem:[%s202 + $0x1710] sm:$0xff]
        %v1007 = vld [vmem:[%s202 + $0x1718] sm:$0xff]
        %v1008 = vld [vmem:[%s202 + $0x1720] sm:$0xff]
        %v1009 = vld [vmem:[%s202 + $0x1728] sm:$0xff]
        %v1010 = vld [vmem:[%s202 + $0x1730] sm:$0xff]
        %v1011 = vld [vmem:[%s202 + $0x1738] sm:$0xff]
        %v1012 = vld [vmem:[%s202 + $0x1740] sm:$0xff]
        %v1013 = vld [vmem:[%s202 + $0x1748] sm:$0xff]
        %v1014 = vld [vmem:[%s202 + $0x1750] sm:$0xff]
        %v1015 = vld [vmem:[%s202 + $0x1758] sm:$0xff]
        %v1016 = vld [vmem:[%s202 + $0x1760] sm:$0xff]
        %v1017 = vld [vmem:[%s202 + $0x1768] sm:$0xff]
        %v1018 = vld [vmem:[%s202 + $0x1770] sm:$0xff]
        %v1019 = vld [vmem:[%s202 + $0x1778] sm:$0xff]
        %v1020 = vld [vmem:[%s202 + $0x1780] sm:$0xff]
        %v1021 = vld [vmem:[%s202 + $0x1788] sm:$0xff]
        %v1022 = vld [vmem:[%s202 + $0x1790] sm:$0xff]
        %v1023 = vld [vmem:[%s202 + $0x1798] sm:$0xff]
        %v1024 = vld [vmem:[%s202 + $0x17a0] sm:$0xff]
        %v1025 = vld [vmem:[%s202 + $0x17a8] sm:$0xff]
        %v1026 = vld [vmem:[%s202 + $0x17b0] sm:$0xff]
        %v1027 = vld [vmem:[%s202 + $0x17b8] sm:$0xff]
        %v1028 = vld [vmem:[%s202 + $0x17c0] sm:$0xff]
        %v1029 = vld [vmem:[%s202 + $0x17c8] sm:$0xff]
        %v1030 = vld [vmem:[%s202 + $0x17d0] sm:$0xff]
        %v1031 = vld [vmem:[%s202 + $0x17d8] sm:$0xff]
        %v1032 = vld [vmem:[%s202 + $0x17e0] sm:$0xff]
        %v1033 = vld [vmem:[%s202 + $0x17e8] sm:$0xff]
        %v1034 = vld [vmem:[%s202 + $0x17f0] sm:$0xff]
        %v1035 = vld [vmem:[%s202 + $0x17f8] sm:$0xff]
        %v1036 = vld [vmem:[%s202 + $0x1800] sm:$0xff]
        %v1037 = vld [vmem:[%s202 + $0x1808] sm:$0xff]
        %v1038 = vld [vmem:[%s202 + $0x1810] sm:$0xff]
        %v1039 = vld [vmem:[%s202 + $0x1818] sm:$0xff]
        %v1040 = vld [vmem:[%s202 + $0x1820] sm:$0xff]
        %v1041 = vld [vmem:[%s202 + $0x1828] sm:$0xff]
        %v1042 = vld [vmem:[%s202 + $0x1830] sm:$0xff]
        %v1043 = vld [vmem:[%s202 + $0x1838] sm:$0xff]
        %v1044 = vld [vmem:[%s202 + $0x1840] sm:$0xff]
        %v1045 = vld [vmem:[%s202 + $0x1848] sm:$0xff]
        %v1046 = vld [vmem:[%s202 + $0x1850] sm:$0xff]
        %v1047 = vld [vmem:[%s202 + $0x1858] sm:$0xff]
        %v1048 = vld [vmem:[%s202 + $0x1860] sm:$0xff]
        %v1049 = vld [vmem:[%s202 + $0x1868] sm:$0xff]
        %v1050 = vld [vmem:[%s202 + $0x1870] sm:$0xff]
        %v1051 = vld [vmem:[%s202 + $0x1878] sm:$0xff]
        %v1052 = vld [vmem:[%s202 + $0x1880] sm:$0xff]
        %v1053 = vld [vmem:[%s202 + $0x1888] sm:$0xff]
        %v1054 = vld [vmem:[%s202 + $0x1890] sm:$0xff]
        %v1055 = vld [vmem:[%s202 + $0x1898] sm:$0xff]
        %v1056 = vld [vmem:[%s202 + $0x18a0] sm:$0xff]
        %v1057 = vld [vmem:[%s202 + $0x18a8] sm:$0xff]
        %v1058 = vld [vmem:[%s202 + $0x18b0] sm:$0xff]
        %v1059 = vld [vmem:[%s202 + $0x18b8] sm:$0xff]
        %v1060 = vld [vmem:[%s202 + $0x18c0] sm:$0xff]
        %v1061 = vld [vmem:[%s202 + $0x18c8] sm:$0xff]
        %v1062 = vld [vmem:[%s202 + $0x18d0] sm:$0xff]
        %v1063 = vld [vmem:[%s202 + $0x18d8] sm:$0xff]
        %v1064 = vld [vmem:[%s202 + $0x18e0] sm:$0xff]
        %v1065 = vld [vmem:[%s202 + $0x18e8] sm:$0xff]
        %v1066 = vld [vmem:[%s202 + $0x18f0] sm:$0xff]
        %v1067 = vld [vmem:[%s202 + $0x18f8] sm:$0xff]
        %v1068 = vld [vmem:[%s202 + $0x1900] sm:$0xff]
        %v1069 = vld [vmem:[%s202 + $0x1908] sm:$0xff]
        %v1070 = vld [vmem:[%s202 + $0x1910] sm:$0xff]
        %v1071 = vld [vmem:[%s202 + $0x1918] sm:$0xff]
        %v1072 = vld [vmem:[%s202 + $0x1920] sm:$0xff]
        %v1073 = vld [vmem:[%s202 + $0x1928] sm:$0xff]
        %v1074 = vld [vmem:[%s202 + $0x1930] sm:$0xff]
        %v1075 = vld [vmem:[%s202 + $0x1938] sm:$0xff]
        %v1076 = vld [vmem:[%s202 + $0x1940] sm:$0xff]
        %v1077 = vld [vmem:[%s202 + $0x1948] sm:$0xff]
        %v1078 = vld [vmem:[%s202 + $0x1950] sm:$0xff]
        %v1079 = vld [vmem:[%s202 + $0x1958] sm:$0xff]
        %v1080 = vld [vmem:[%s202 + $0x1960] sm:$0xff]
        %v1081 = vld [vmem:[%s202 + $0x1968] sm:$0xff]
        %v1082 = vld [vmem:[%s202 + $0x1970] sm:$0xff]
        %v1083 = vld [vmem:[%s202 + $0x1978] sm:$0xff]
        %v1084 = vld [vmem:[%s202 + $0x1980] sm:$0xff]
        %v1085 = vld [vmem:[%s202 + $0x1988] sm:$0xff]
        %v1086 = vld [vmem:[%s202 + $0x1990] sm:$0xff]
        %v1087 = vld [vmem:[%s202 + $0x1998] sm:$0xff]
        %v1088 = vld [vmem:[%s202 + $0x19a0] sm:$0xff]
        %v1089 = vld [vmem:[%s202 + $0x19a8] sm:$0xff]
        %v1090 = vld [vmem:[%s202 + $0x19b0] sm:$0xff]
        %v1091 = vld [vmem:[%s202 + $0x19b8] sm:$0xff]
        %v1092 = vld [vmem:[%s202 + $0x19c0] sm:$0xff]
        %v1093 = vld [vmem:[%s202 + $0x19c8] sm:$0xff]
        %v1094 = vld [vmem:[%s202 + $0x19d0] sm:$0xff]
        %v1095 = vld [vmem:[%s202 + $0x19d8] sm:$0xff]
        %v1096 = vld [vmem:[%s202 + $0x19e0] sm:$0xff]
        %v1097 = vld [vmem:[%s202 + $0x19e8] sm:$0xff]
        %v1098 = vld [vmem:[%s202 + $0x19f0] sm:$0xff]
        %v1099 = vld [vmem:[%s202 + $0x19f8] sm:$0xff]
        %v1100 = vld [vmem:[%s202 + $0x1a00] sm:$0xff]
        %v1101 = vld [vmem:[%s202 + $0x1a08] sm:$0xff]
        %v1102 = vld [vmem:[%s202 + $0x1a10] sm:$0xff]
        %v1103 = vld [vmem:[%s202 + $0x1a18] sm:$0xff]
        %v1104 = vld [vmem:[%s202 + $0x1a20] sm:$0xff]
        %v1105 = vld [vmem:[%s202 + $0x1a28] sm:$0xff]
        %v1106 = vld [vmem:[%s202 + $0x1a30] sm:$0xff]
        %v1107 = vld [vmem:[%s202 + $0x1a38] sm:$0xff]
        %v1108 = vld [vmem:[%s202 + $0x1a40] sm:$0xff]
        %v1109 = vld [vmem:[%s202 + $0x1a48] sm:$0xff]
        %v1110 = vld [vmem:[%s202 + $0x1a50] sm:$0xff]
        %v1111 = vld [vmem:[%s202 + $0x1a58] sm:$0xff]
        %v1112 = vld [vmem:[%s202 + $0x1a60] sm:$0xff]
        %v1113 = vld [vmem:[%s202 + $0x1a68] sm:$0xff]
        %v1114 = vld [vmem:[%s202 + $0x1a70] sm:$0xff]
        %v1115 = vld [vmem:[%s202 + $0x1a78] sm:$0xff]
        %v1116 = vld [vmem:[%s202 + $0x1a80] sm:$0xff]
        %v1117 = vld [vmem:[%s202 + $0x1a88] sm:$0xff]
        %v1118 = vld [vmem:[%s202 + $0x1a90] sm:$0xff]
        %v1119 = vld [vmem:[%s202 + $0x1a98] sm:$0xff]
        %v1120 = vld [vmem:[%s202 + $0x1aa0] sm:$0xff]
        %v1121 = vld [vmem:[%s202 + $0x1aa8] sm:$0xff]
        %v1122 = vld [vmem:[%s202 + $0x1ab0] sm:$0xff]
        %v1123 = vld [vmem:[%s202 + $0x1ab8] sm:$0xff]
        %v1124 = vld [vmem:[%s202 + $0x1ac0] sm:$0xff]
        %v1125 = vld [vmem:[%s202 + $0x1ac8] sm:$0xff]
        %v1126 = vld [vmem:[%s202 + $0x1ad0] sm:$0xff]
        %v1127 = vld [vmem:[%s202 + $0x1ad8] sm:$0xff]
        %v1128 = vld [vmem:[%s202 + $0x1ae0] sm:$0xff]
        %v1129 = vld [vmem:[%s202 + $0x1ae8] sm:$0xff]
        %v1130 = vld [vmem:[%s202 + $0x1af0] sm:$0xff]
        %v1131 = vld [vmem:[%s202 + $0x1af8] sm:$0xff]
        %v1132 = vld [vmem:[%s202 + $0x1b00] sm:$0xff]
        %v1133 = vld [vmem:[%s202 + $0x1b08] sm:$0xff]
        %v1134 = vld [vmem:[%s202 + $0x1b10] sm:$0xff]
        %v1135 = vld [vmem:[%s202 + $0x1b18] sm:$0xff]
        %v1136 = vld [vmem:[%s202 + $0x1b20] sm:$0xff]
        %v1137 = vld [vmem:[%s202 + $0x1b28] sm:$0xff]
        %v1138 = vld [vmem:[%s202 + $0x1b30] sm:$0xff]
        %v1139 = vld [vmem:[%s202 + $0x1b38] sm:$0xff]
        %v1140 = vld [vmem:[%s202 + $0x1b40] sm:$0xff]
        %v1141 = vld [vmem:[%s202 + $0x1b48] sm:$0xff]
        %v1142 = vld [vmem:[%s202 + $0x1b50] sm:$0xff]
        %v1143 = vld [vmem:[%s202 + $0x1b58] sm:$0xff]
        %v1144 = vld [vmem:[%s202 + $0x1b60] sm:$0xff]
        %v1145 = vld [vmem:[%s202 + $0x1b68] sm:$0xff]
        %v1146 = vld [vmem:[%s202 + $0x1b70] sm:$0xff]
        %v1147 = vld [vmem:[%s202 + $0x1b78] sm:$0xff]
        %v1148 = vld [vmem:[%s202 + $0x1b80] sm:$0xff]
        %v1149 = vld [vmem:[%s202 + $0x1b88] sm:$0xff]
        %v1150 = vld [vmem:[%s202 + $0x1b90] sm:$0xff]
        %v1151 = vld [vmem:[%s202 + $0x1b98] sm:$0xff]
        %v1152 = vld [vmem:[%s202 + $0x1ba0] sm:$0xff]
        %v1153 = vld [vmem:[%s202 + $0x1ba8] sm:$0xff]
        %v1154 = vld [vmem:[%s202 + $0x1bb0] sm:$0xff]
        %v1155 = vld [vmem:[%s202 + $0x1bb8] sm:$0xff]
        %v1156 = vld [vmem:[%s202 + $0x1bc0] sm:$0xff]
        %v1157 = vld [vmem:[%s202 + $0x1bc8] sm:$0xff]
        %v1158 = vld [vmem:[%s202 + $0x1bd0] sm:$0xff]
        %v1159 = vld [vmem:[%s202 + $0x1bd8] sm:$0xff]
        %v1160 = vld [vmem:[%s202 + $0x1be0] sm:$0xff]
        %v1161 = vld [vmem:[%s202 + $0x1be8] sm:$0xff]
        %v1162 = vld [vmem:[%s202 + $0x1bf0] sm:$0xff]
        %v1163 = vld [vmem:[%s202 + $0x1bf8] sm:$0xff]
        %v1164 = vld [vmem:[%s202 + $0x1c00] sm:$0xff]
        %v1165 = vld [vmem:[%s202 + $0x1c08] sm:$0xff]
        %v1166 = vld [vmem:[%s202 + $0x1c10] sm:$0xff]
        %v1167 = vld [vmem:[%s202 + $0x1c18] sm:$0xff]
        %v1168 = vld [vmem:[%s202 + $0x1c20] sm:$0xff]
        %v1169 = vld [vmem:[%s202 + $0x1c28] sm:$0xff]
        %v1170 = vld [vmem:[%s202 + $0x1c30] sm:$0xff]
        %v1171 = vld [vmem:[%s202 + $0x1c38] sm:$0xff]
        %v1172 = vld [vmem:[%s202 + $0x1c40] sm:$0xff]
        %v1173 = vld [vmem:[%s202 + $0x1c48] sm:$0xff]
        %v1174 = vld [vmem:[%s202 + $0x1c50] sm:$0xff]
        %v1175 = vld [vmem:[%s202 + $0x1c58] sm:$0xff]
        %v1176 = vld [vmem:[%s202 + $0x1c60] sm:$0xff]
        %v1177 = vld [vmem:[%s202 + $0x1c68] sm:$0xff]
        %v1178 = vld [vmem:[%s202 + $0x1c70] sm:$0xff]
        %v1179 = vld [vmem:[%s202 + $0x1c78] sm:$0xff]
        %v1180 = vld [vmem:[%s202 + $0x1c80] sm:$0xff]
        %v1181 = vld [vmem:[%s202 + $0x1c88] sm:$0xff]
        %v1182 = vld [vmem:[%s202 + $0x1c90] sm:$0xff]
        %v1183 = vld [vmem:[%s202 + $0x1c98] sm:$0xff]
        %v1184 = vld [vmem:[%s202 + $0x1ca0] sm:$0xff]
        %v1185 = vld [vmem:[%s202 + $0x1ca8] sm:$0xff]
        %v1186 = vld [vmem:[%s202 + $0x1cb0] sm:$0xff]
        %v1187 = vld [vmem:[%s202 + $0x1cb8] sm:$0xff]
        %v1188 = vld [vmem:[%s202 + $0x1cc0] sm:$0xff]
        %v1189 = vld [vmem:[%s202 + $0x1cc8] sm:$0xff]
        %v1190 = vld [vmem:[%s202 + $0x1cd0] sm:$0xff]
        %v1191 = vld [vmem:[%s202 + $0x1cd8] sm:$0xff]
        %v1192 = vld [vmem:[%s202 + $0x1ce0] sm:$0xff]
        %v1193 = vld [vmem:[%s202 + $0x1ce8] sm:$0xff]
        %v1194 = vld [vmem:[%s202 + $0x1cf0] sm:$0xff]
        %v1195 = vld [vmem:[%s202 + $0x1cf8] sm:$0xff]
        %v1196 = vld [vmem:[%s202 + $0x1d00] sm:$0xff]
        %v1197 = vld [vmem:[%s202 + $0x1d08] sm:$0xff]
        %v1198 = vld [vmem:[%s202 + $0x1d10] sm:$0xff]
        %v1199 = vld [vmem:[%s202 + $0x1d18] sm:$0xff]
        %v1200 = vld [vmem:[%s202 + $0x1d20] sm:$0xff]
        %v1201 = vld [vmem:[%s202 + $0x1d28] sm:$0xff]
        %v1202 = vld [vmem:[%s202 + $0x1d30] sm:$0xff]
        %v1203 = vld [vmem:[%s202 + $0x1d38] sm:$0xff]
        %v1204 = vld [vmem:[%s202 + $0x1d40] sm:$0xff]
        %v1205 = vld [vmem:[%s202 + $0x1d48] sm:$0xff]
        %v1206 = vld [vmem:[%s202 + $0x1d50] sm:$0xff]
        %v1207 = vld [vmem:[%s202 + $0x1d58] sm:$0xff]
        %v1208 = vld [vmem:[%s202 + $0x1d60] sm:$0xff]
        %v1209 = vld [vmem:[%s202 + $0x1d68] sm:$0xff]
        %v1210 = vld [vmem:[%s202 + $0x1d70] sm:$0xff]
        %v1211 = vld [vmem:[%s202 + $0x1d78] sm:$0xff]
        %v1212 = vld [vmem:[%s202 + $0x1d80] sm:$0xff]
        %v1213 = vld [vmem:[%s202 + $0x1d88] sm:$0xff]
        %v1214 = vld [vmem:[%s202 + $0x1d90] sm:$0xff]
        %v1215 = vld [vmem:[%s202 + $0x1d98] sm:$0xff]
        %v1216 = vld [vmem:[%s202 + $0x1da0] sm:$0xff]
        %v1217 = vld [vmem:[%s202 + $0x1da8] sm:$0xff]
        %v1218 = vld [vmem:[%s202 + $0x1db0] sm:$0xff]
        %v1219 = vld [vmem:[%s202 + $0x1db8] sm:$0xff]
        %v1220 = vld [vmem:[%s202 + $0x1dc0] sm:$0xff]
        %v1221 = vld [vmem:[%s202 + $0x1dc8] sm:$0xff]
        %v1222 = vld [vmem:[%s202 + $0x1dd0] sm:$0xff]
        %v1223 = vld [vmem:[%s202 + $0x1dd8] sm:$0xff]
        %v1224 = vld [vmem:[%s202 + $0x1de0] sm:$0xff]
        %v1225 = vld [vmem:[%s202 + $0x1de8] sm:$0xff]
        %v1226 = vld [vmem:[%s202 + $0x1df0] sm:$0xff]
        %v1227 = vld [vmem:[%s202 + $0x1df8] sm:$0xff]
        %v1228 = vld [vmem:[%s202 + $0x1e00] sm:$0xff]
        %v1229 = vld [vmem:[%s202 + $0x1e08] sm:$0xff]
        %v1230 = vld [vmem:[%s202 + $0x1e10] sm:$0xff]
        %v1231 = vld [vmem:[%s202 + $0x1e18] sm:$0xff]
        %v1232 = vld [vmem:[%s202 + $0x1e20] sm:$0xff]
        %v1233 = vld [vmem:[%s202 + $0x1e28] sm:$0xff]
        %v1234 = vld [vmem:[%s202 + $0x1e30] sm:$0xff]
        %v1235 = vld [vmem:[%s202 + $0x1e38] sm:$0xff]
        %v1236 = vld [vmem:[%s202 + $0x1e40] sm:$0xff]
        %v1237 = vld [vmem:[%s202 + $0x1e48] sm:$0xff]
        %v1238 = vld [vmem:[%s202 + $0x1e50] sm:$0xff]
        %v1239 = vld [vmem:[%s202 + $0x1e58] sm:$0xff]
        %v1240 = vld [vmem:[%s202 + $0x1e60] sm:$0xff]
        %v1241 = vld [vmem:[%s202 + $0x1e68] sm:$0xff]
        %v1242 = vld [vmem:[%s202 + $0x1e70] sm:$0xff]
        %v1243 = vld [vmem:[%s202 + $0x1e78] sm:$0xff]
        %v1244 = vld [vmem:[%s202 + $0x1e80] sm:$0xff]
        %v1245 = vld [vmem:[%s202 + $0x1e88] sm:$0xff]
        %v1246 = vld [vmem:[%s202 + $0x1e90] sm:$0xff]
        %v1247 = vld [vmem:[%s202 + $0x1e98] sm:$0xff]
        %v1248 = vld [vmem:[%s202 + $0x1ea0] sm:$0xff]
        %v1249 = vld [vmem:[%s202 + $0x1ea8] sm:$0xff]
        %v1250 = vld [vmem:[%s202 + $0x1eb0] sm:$0xff]
        %v1251 = vld [vmem:[%s202 + $0x1eb8] sm:$0xff]
        %v1252 = vld [vmem:[%s202 + $0x1ec0] sm:$0xff]
        %v1253 = vld [vmem:[%s202 + $0x1ec8] sm:$0xff]
        %v1254 = vld [vmem:[%s202 + $0x1ed0] sm:$0xff]
        %v1255 = vld [vmem:[%s202 + $0x1ed8] sm:$0xff]
        %v1256 = vld [vmem:[%s202 + $0x1ee0] sm:$0xff]
        %v1257 = vld [vmem:[%s202 + $0x1ee8] sm:$0xff]
        %v1258 = vld [vmem:[%s202 + $0x1ef0] sm:$0xff]
        %v1259 = vld [vmem:[%s202 + $0x1ef8] sm:$0xff]
        %v1260 = vld [vmem:[%s202 + $0x1f00] sm:$0xff]
        %v1261 = vld [vmem:[%s202 + $0x1f08] sm:$0xff]
        %v1262 = vld [vmem:[%s202 + $0x1f10] sm:$0xff]
        %v1263 = vld [vmem:[%s202 + $0x1f18] sm:$0xff]
        %v1264 = vld [vmem:[%s202 + $0x1f20] sm:$0xff]
        %v1265 = vld [vmem:[%s202 + $0x1f28] sm:$0xff]
        %v1266 = vld [vmem:[%s202 + $0x1f30] sm:$0xff]
        %v1267 = vld [vmem:[%s202 + $0x1f38] sm:$0xff]
        %v1268 = vld [vmem:[%s202 + $0x1f40] sm:$0xff]
        %v1269 = vld [vmem:[%s202 + $0x1f48] sm:$0xff]
        %v1270 = vld [vmem:[%s202 + $0x1f50] sm:$0xff]
        %v1271 = vld [vmem:[%s202 + $0x1f58] sm:$0xff]
        %v1272 = vld [vmem:[%s202 + $0x1f60] sm:$0xff]
        %v1273 = vld [vmem:[%s202 + $0x1f68] sm:$0xff]
        %v1274 = vld [vmem:[%s202 + $0x1f70] sm:$0xff]
        %v1275 = vld [vmem:[%s202 + $0x1f78] sm:$0xff]
        %v1276 = vld [vmem:[%s202 + $0x1f80] sm:$0xff]
        %v1277 = vld [vmem:[%s202 + $0x1f88] sm:$0xff]
        %v1278 = vld [vmem:[%s202 + $0x1f90] sm:$0xff]
        %v1279 = vld [vmem:[%s202 + $0x1f98] sm:$0xff]
        %v1280 = vld [vmem:[%s202 + $0x1fa0] sm:$0xff]
        %v1281 = vld [vmem:[%s202 + $0x1fa8] sm:$0xff]
        %v1282 = vld [vmem:[%s202 + $0x1fb0] sm:$0xff]
        %v1283 = vld [vmem:[%s202 + $0x1fb8] sm:$0xff]
        %v1284 = vld [vmem:[%s202 + $0x1fc0] sm:$0xff]
        %v1285 = vld [vmem:[%s202 + $0x1fc8] sm:$0xff]
        %v1286 = vld [vmem:[%s202 + $0x1fd0] sm:$0xff]
        %v1287 = vld [vmem:[%s202 + $0x1fd8] sm:$0xff]
        %v1288 = vld [vmem:[%s202 + $0x1fe0] sm:$0xff]
        %v1289 = vld [vmem:[%s202 + $0x1fe8] sm:$0xff]
        %v1290 = vld [vmem:[%s202 + $0x1ff0] sm:$0xff]
        %v1291 = vld [vmem:[%s202 + $0x1ff8] sm:$0xff]
        %1300 = vst [vmem:[#allocation1] ss:$4 sm:$0xff] %v260
        %s1301 = scalar_lea.vmem [#allocation1], 32
        %1302 = vst [vmem:[%s1301] ss:$4 sm:$0xff] %v261
        %v1303 = vld.sshfl [vmem:[#allocation1] sm:$0xff pattern:$0x73625140]
        %v1304 = vld.sshfl [vmem:[#allocation1 + $0x8] sm:$0xff pattern:$0x73625140]
        %v1305 = vld.sshfl [vmem:[#allocation1 + $0x10] sm:$0xff pattern:$0x73625140]
        %v1306 = vld.sshfl [vmem:[#allocation1 + $0x18] sm:$0xff pattern:$0x73625140]
        %v1307 = vld.sshfl [vmem:[#allocation1 + $0x20] sm:$0xff pattern:$0x73625140]
        %v1308 = vld.sshfl [vmem:[#allocation1 + $0x28] sm:$0xff pattern:$0x73625140]
        %v1309 = vld.sshfl [vmem:[#allocation1 + $0x30] sm:$0xff pattern:$0x73625140]
        %v1310 = vld.sshfl [vmem:[#allocation1 + $0x38] sm:$0xff pattern:$0x73625140]
        %1311 = vst [vmem:[#allocation1] ss:$4 sm:$0xff] %v262
        %1312 = vst [vmem:[%s1301] ss:$4 sm:$0xff] %v263
        %v1313 = vld.sshfl [vmem:[#allocation1] sm:$0xff pattern:$0x73625140]
        %v1314 = vld.sshfl [vmem:[#allocation1 + $0x8] sm:$0xff pattern:$0x73625140]
        %v1315 = vld.sshfl [vmem:[#allocation1 + $0x10] sm:$0xff pattern:$0x73625140]
        %v1316 = vld.sshfl [vmem:[#allocation1 + $0x18] sm:$0xff pattern:$0x73625140]
        %v1317 = vld.sshfl [vmem:[#allocation1 + $0x20] sm:$0xff pattern:$0x73625140]
        %v1318 = vld.sshfl [vmem:[#allocation1 + $0x28] sm:$0xff pattern:$0x73625140]
        %v1319 = vld.sshfl [vmem:[#allocation1 + $0x30] sm:$0xff pattern:$0x73625140]
        %v1320 = vld.sshfl [vmem:[#allocation1 + $0x38] sm:$0xff pattern:$0x73625140]
        %1321 = vst [vmem:[#allocation1] ss:$4 sm:$0xff] %v264
        %1322 = vst [vmem:[%s1301] ss:$4 sm:$0xff] %v265
        %v1323 = vld.sshfl [vmem:[#allocation1] sm:$0xff pattern:$0x73625140]
        %v1324 = vld.sshfl [vmem:[#allocation1 + $0x8] sm:$0xff pattern:$0x73625140]
        %v1325 = vld.sshfl [vmem:[#allocation1 + $0x10] sm:$0xff pattern:$0x73625140]
        %v1326 = vld.sshfl [vmem:[#allocation1 + $0x18] sm:$0xff pattern:$0x73625140]
        %v1327 = vld.sshfl [vmem:[#allocation1 + $0x20] sm:$0xff pattern:$0x73625140]
        %v1328 = vld.sshfl [vmem:[#allocation1 + $0x28] sm:$0xff pattern:$0x73625140]
        %v1329 = vld.sshfl [vmem:[#allocation1 + $0x30] sm:$0xff pattern:$0x73625140]
        %v1330 = vld.sshfl [vmem:[#allocation1 + $0x38] sm:$0xff pattern:$0x73625140]
        %1331 = vst [vmem:[#allocation1] ss:$4 sm:$0xff] %v266
        %1332 = vst [vmem:[%s1301] ss:$4 sm:$0xff] %v267
        %v1333 = vld.sshfl [vmem:[#allocation1] sm:$0xff pattern:$0x73625140]
        %v1334 = vld.sshfl [vmem:[#allocation1 + $0x8] sm:$0xff pattern:$0x73625140]
        %v1335 = vld.sshfl [vmem:[#allocation1 + $0x10] sm:$0xff pattern:$0x73625140]
        %v1336 = vld.sshfl [vmem:[#allocation1 + $0x18] sm:$0xff pattern:$0x73625140]
        %v1337 = vld.sshfl [vmem:[#allocation1 + $0x20] sm:$0xff pattern:$0x73625140]
        %v1338 = vld.sshfl [vmem:[#allocation1 + $0x28] sm:$0xff pattern:$0x73625140]
        %v1339 = vld.sshfl [vmem:[#allocation1 + $0x30] sm:$0xff pattern:$0x73625140]
        %v1340 = vld.sshfl [vmem:[#allocation1 + $0x38] sm:$0xff pattern:$0x73625140]
        %1373 = vmatpush.msra.mxu0 %v298
        %1374 = vmatpush.msra.mxu0 %v296
        %1375 = vmatpush.msra.mxu0 %v294
        %1376 = vmatpush.msra.mxu0 %v292
        %1377 = vmatpush.msra.mxu0 %v290
        %1378 = vmatpush.msra.mxu0 %v288
        %1379 = vmatpush.msra.mxu0 %v286
        %1380 = vmatpush.msra.mxu0 %v284
        %1381 = vmatpush.msra.mxu0 %v282
        %1382 = vmatpush.msra.mxu0 %v280
        %1383 = vmatpush.msra.mxu0 %v278
        %1384 = vmatpush.msra.mxu0 %v276
        %1385 = vmatpush.msra.mxu0 %v274
        %1386 = vmatpush.msra.mxu0 %v272
        %1387 = vmatpush.msra.mxu0 %v270
        %1388 = vmatpush.msra.mxu0 %v268
        %1389 = vmatmul.f32.gmra.mxu0 %v1303
        %v1390 = vpop.f32.mrf.mxu0
        %v1391 = vadd.f32 0.0, %v1390
        %1392 = vdwg.mxu0
        %1393 = vmatpush.msra.mxu0 %v330
        %1394 = vmatpush.msra.mxu0 %v328
        %1395 = vmatpush.msra.mxu0 %v326
        %1396 = vmatpush.msra.mxu0 %v324
        %1397 = vmatpush.msra.mxu0 %v322
        %1398 = vmatpush.msra.mxu0 %v320
        %1399 = vmatpush.msra.mxu0 %v318
        %1400 = vmatpush.msra.mxu0 %v316
        %1401 = vmatpush.msra.mxu0 %v314
        %1402 = vmatpush.msra.mxu0 %v312
        %1403 = vmatpush.msra.mxu0 %v310
        %1404 = vmatpush.msra.mxu0 %v308
        %1405 = vmatpush.msra.mxu0 %v306
        %1406 = vmatpush.msra.mxu0 %v304
        %1407 = vmatpush.msra.mxu0 %v302
        %1408 = vmatpush.msra.mxu0 %v300
        %1409 = vmatmul.f32.gmra.mxu0 %v1304
        %v1410 = vpop.f32.mrf.mxu0
        %v1411 = vadd.f32 %v1391, %v1410
        %1412 = vdwg.mxu0
        %1413 = vmatpush.msra.mxu0 %v362
        %1414 = vmatpush.msra.mxu0 %v360
        %1415 = vmatpush.msra.mxu0 %v358
        %1416 = vmatpush.msra.mxu0 %v356
        %1417 = vmatpush.msra.mxu0 %v354
        %1418 = vmatpush.msra.mxu0 %v352
        %1419 = vmatpush.msra.mxu0 %v350
        %1420 = vmatpush.msra.mxu0 %v348
        %1421 = vmatpush.msra.mxu0 %v346
        %1422 = vmatpush.msra.mxu0 %v344
        %1423 = vmatpush.msra.mxu0 %v342
        %1424 = vmatpush.msra.mxu0 %v340
        %1425 = vmatpush.msra.mxu0 %v338
        %1426 = vmatpush.msra.mxu0 %v336
        %1427 = vmatpush.msra.mxu0 %v334
        %1428 = vmatpush.msra.mxu0 %v332
        %1429 = vmatmul.f32.gmra.mxu0 %v1305
        %v1430 = vpop.f32.mrf.mxu0
        %v1431 = vadd.f32 %v1411, %v1430
        %1432 = vdwg.mxu0
        %1433 = vmatpush.msra.mxu0 %v394
        %1434 = vmatpush.msra.mxu0 %v392
        %1435 = vmatpush.msra.mxu0 %v390
        %1436 = vmatpush.msra.mxu0 %v388
        %1437 = vmatpush.msra.mxu0 %v386
        %1438 = vmatpush.msra.mxu0 %v384
        %1439 = vmatpush.msra.mxu0 %v382
        %1440 = vmatpush.msra.mxu0 %v380
        %1441 = vmatpush.msra.mxu0 %v378
        %1442 = vmatpush.msra.mxu0 %v376
        %1443 = vmatpush.msra.mxu0 %v374
        %1444 = vmatpush.msra.mxu0 %v372
        %1445 = vmatpush.msra.mxu0 %v370
        %1446 = vmatpush.msra.mxu0 %v368
        %1447 = vmatpush.msra.mxu0 %v366
        %1448 = vmatpush.msra.mxu0 %v364
        %1449 = vmatmul.f32.gmra.mxu0 %v1306
        %v1450 = vpop.f32.mrf.mxu0
        %v1451 = vadd.f32 %v1431, %v1450
        %1452 = vdwg.mxu0
        %1453 = vmatpush.msra.mxu0 %v426
        %1454 = vmatpush.msra.mxu0 %v424
        %1455 = vmatpush.msra.mxu0 %v422
        %1456 = vmatpush.msra.mxu0 %v420
        %1457 = vmatpush.msra.mxu0 %v418
        %1458 = vmatpush.msra.mxu0 %v416
        %1459 = vmatpush.msra.mxu0 %v414
        %1460 = vmatpush.msra.mxu0 %v412
        %1461 = vmatpush.msra.mxu0 %v410
        %1462 = vmatpush.msra.mxu0 %v408
        %1463 = vmatpush.msra.mxu0 %v406
        %1464 = vmatpush.msra.mxu0 %v404
        %1465 = vmatpush.msra.mxu0 %v402
        %1466 = vmatpush.msra.mxu0 %v400
        %1467 = vmatpush.msra.mxu0 %v398
        %1468 = vmatpush.msra.mxu0 %v396
        %1469 = vmatmul.f32.gmra.mxu0 %v1307
        %v1470 = vpop.f32.mrf.mxu0
        %v1471 = vadd.f32 %v1451, %v1470
        %1472 = vdwg.mxu0
        %1473 = vmatpush.msra.mxu0 %v458
        %1474 = vmatpush.msra.mxu0 %v456
        %1475 = vmatpush.msra.mxu0 %v454
        %1476 = vmatpush.msra.mxu0 %v452
        %1477 = vmatpush.msra.mxu0 %v450
        %1478 = vmatpush.msra.mxu0 %v448
        %1479 = vmatpush.msra.mxu0 %v446
        %1480 = vmatpush.msra.mxu0 %v444
        %1481 = vmatpush.msra.mxu0 %v442
        %1482 = vmatpush.msra.mxu0 %v440
        %1483 = vmatpush.msra.mxu0 %v438
        %1484 = vmatpush.msra.mxu0 %v436
        %1485 = vmatpush.msra.mxu0 %v434
        %1486 = vmatpush.msra.mxu0 %v432
        %1487 = vmatpush.msra.mxu0 %v430
        %1488 = vmatpush.msra.mxu0 %v428
        %1489 = vmatmul.f32.gmra.mxu0 %v1308
        %v1490 = vpop.f32.mrf.mxu0
        %v1491 = vadd.f32 %v1471, %v1490
        %1492 = vdwg.mxu0
        %1493 = vmatpush.msra.mxu0 %v490
        %1494 = vmatpush.msra.mxu0 %v488
        %1495 = vmatpush.msra.mxu0 %v486
        %1496 = vmatpush.msra.mxu0 %v484
        %1497 = vmatpush.msra.mxu0 %v482
        %1498 = vmatpush.msra.mxu0 %v480
        %1499 = vmatpush.msra.mxu0 %v478
        %1500 = vmatpush.msra.mxu0 %v476
        %1501 = vmatpush.msra.mxu0 %v474
        %1502 = vmatpush.msra.mxu0 %v472
        %1503 = vmatpush.msra.mxu0 %v470
        %1504 = vmatpush.msra.mxu0 %v468
        %1505 = vmatpush.msra.mxu0 %v466
        %1506 = vmatpush.msra.mxu0 %v464
        %1507 = vmatpush.msra.mxu0 %v462
        %1508 = vmatpush.msra.mxu0 %v460
        %1509 = vmatmul.f32.gmra.mxu0 %v1309
        %v1510 = vpop.f32.mrf.mxu0
        %v1511 = vadd.f32 %v1491, %v1510
        %1512 = vdwg.mxu0
        %1513 = vmatpush.msra.mxu0 %v522
        %1514 = vmatpush.msra.mxu0 %v520
        %1515 = vmatpush.msra.mxu0 %v518
        %1516 = vmatpush.msra.mxu0 %v516
        %1517 = vmatpush.msra.mxu0 %v514
        %1518 = vmatpush.msra.mxu0 %v512
        %1519 = vmatpush.msra.mxu0 %v510
        %1520 = vmatpush.msra.mxu0 %v508
        %1521 = vmatpush.msra.mxu0 %v506
        %1522 = vmatpush.msra.mxu0 %v504
        %1523 = vmatpush.msra.mxu0 %v502
        %1524 = vmatpush.msra.mxu0 %v500
        %1525 = vmatpush.msra.mxu0 %v498
        %1526 = vmatpush.msra.mxu0 %v496
        %1527 = vmatpush.msra.mxu0 %v494
        %1528 = vmatpush.msra.mxu0 %v492
        %1529 = vmatmul.f32.gmra.mxu0 %v1310
        %v1530 = vpop.f32.mrf.mxu0
        %v1531 = vadd.f32 %v1511, %v1530
        %1532 = vdwg.mxu0
        %1533 = vmatpush.msra.mxu0 %v554
        %1534 = vmatpush.msra.mxu0 %v552
        %1535 = vmatpush.msra.mxu0 %v550
        %1536 = vmatpush.msra.mxu0 %v548
        %1537 = vmatpush.msra.mxu0 %v546
        %1538 = vmatpush.msra.mxu0 %v544
        %1539 = vmatpush.msra.mxu0 %v542
        %1540 = vmatpush.msra.mxu0 %v540
        %1541 = vmatpush.msra.mxu0 %v538
        %1542 = vmatpush.msra.mxu0 %v536
        %1543 = vmatpush.msra.mxu0 %v534
        %1544 = vmatpush.msra.mxu0 %v532
        %1545 = vmatpush.msra.mxu0 %v530
        %1546 = vmatpush.msra.mxu0 %v528
        %1547 = vmatpush.msra.mxu0 %v526
        %1548 = vmatpush.msra.mxu0 %v524
        %1549 = vmatmul.f32.gmra.mxu0 %v1313
        %v1550 = vpop.f32.mrf.mxu0
        %v1551 = vadd.f32 %v1531, %v1550
        %1552 = vdwg.mxu0
        %1553 = vmatpush.msra.mxu0 %v586
        %1554 = vmatpush.msra.mxu0 %v584
        %1555 = vmatpush.msra.mxu0 %v582
        %1556 = vmatpush.msra.mxu0 %v580
        %1557 = vmatpush.msra.mxu0 %v578
        %1558 = vmatpush.msra.mxu0 %v576
        %1559 = vmatpush.msra.mxu0 %v574
        %1560 = vmatpush.msra.mxu0 %v572
        %1561 = vmatpush.msra.mxu0 %v570
        %1562 = vmatpush.msra.mxu0 %v568
        %1563 = vmatpush.msra.mxu0 %v566
        %1564 = vmatpush.msra.mxu0 %v564
        %1565 = vmatpush.msra.mxu0 %v562
        %1566 = vmatpush.msra.mxu0 %v560
        %1567 = vmatpush.msra.mxu0 %v558
        %1568 = vmatpush.msra.mxu0 %v556
        %1569 = vmatmul.f32.gmra.mxu0 %v1314
        %v1570 = vpop.f32.mrf.mxu0
        %v1571 = vadd.f32 %v1551, %v1570
        %1572 = vdwg.mxu0
        %1573 = vmatpush.msra.mxu0 %v618
        %1574 = vmatpush.msra.mxu0 %v616
        %1575 = vmatpush.msra.mxu0 %v614
        %1576 = vmatpush.msra.mxu0 %v612
        %1577 = vmatpush.msra.mxu0 %v610
        %1578 = vmatpush.msra.mxu0 %v608
        %1579 = vmatpush.msra.mxu0 %v606
        %1580 = vmatpush.msra.mxu0 %v604
        %1581 = vmatpush.msra.mxu0 %v602
        %1582 = vmatpush.msra.mxu0 %v600
        %1583 = vmatpush.msra.mxu0 %v598
        %1584 = vmatpush.msra.mxu0 %v596
        %1585 = vmatpush.msra.mxu0 %v594
        %1586 = vmatpush.msra.mxu0 %v592
        %1587 = vmatpush.msra.mxu0 %v590
        %1588 = vmatpush.msra.mxu0 %v588
        %1589 = vmatmul.f32.gmra.mxu0 %v1315
        %v1590 = vpop.f32.mrf.mxu0
        %v1591 = vadd.f32 %v1571, %v1590
        %1592 = vdwg.mxu0
        %1593 = vmatpush.msra.mxu0 %v650
        %1594 = vmatpush.msra.mxu0 %v648
        %1595 = vmatpush.msra.mxu0 %v646
        %1596 = vmatpush.msra.mxu0 %v644
        %1597 = vmatpush.msra.mxu0 %v642
        %1598 = vmatpush.msra.mxu0 %v640
        %1599 = vmatpush.msra.mxu0 %v638
        %1600 = vmatpush.msra.mxu0 %v636
        %1601 = vmatpush.msra.mxu0 %v634
        %1602 = vmatpush.msra.mxu0 %v632
        %1603 = vmatpush.msra.mxu0 %v630
        %1604 = vmatpush.msra.mxu0 %v628
        %1605 = vmatpush.msra.mxu0 %v626
        %1606 = vmatpush.msra.mxu0 %v624
        %1607 = vmatpush.msra.mxu0 %v622
        %1608 = vmatpush.msra.mxu0 %v620
        %1609 = vmatmul.f32.gmra.mxu0 %v1316
        %v1610 = vpop.f32.mrf.mxu0
        %v1611 = vadd.f32 %v1591, %v1610
        %1612 = vdwg.mxu0
        %1613 = vmatpush.msra.mxu0 %v682
        %1614 = vmatpush.msra.mxu0 %v680
        %1615 = vmatpush.msra.mxu0 %v678
        %1616 = vmatpush.msra.mxu0 %v676
        %1617 = vmatpush.msra.mxu0 %v674
        %1618 = vmatpush.msra.mxu0 %v672
        %1619 = vmatpush.msra.mxu0 %v670
        %1620 = vmatpush.msra.mxu0 %v668
        %1621 = vmatpush.msra.mxu0 %v666
        %1622 = vmatpush.msra.mxu0 %v664
        %1623 = vmatpush.msra.mxu0 %v662
        %1624 = vmatpush.msra.mxu0 %v660
        %1625 = vmatpush.msra.mxu0 %v658
        %1626 = vmatpush.msra.mxu0 %v656
        %1627 = vmatpush.msra.mxu0 %v654
        %1628 = vmatpush.msra.mxu0 %v652
        %1629 = vmatmul.f32.gmra.mxu0 %v1317
        %v1630 = vpop.f32.mrf.mxu0
        %v1631 = vadd.f32 %v1611, %v1630
        %1632 = vdwg.mxu0
        %1633 = vmatpush.msra.mxu0 %v714
        %1634 = vmatpush.msra.mxu0 %v712
        %1635 = vmatpush.msra.mxu0 %v710
        %1636 = vmatpush.msra.mxu0 %v708
        %1637 = vmatpush.msra.mxu0 %v706
        %1638 = vmatpush.msra.mxu0 %v704
        %1639 = vmatpush.msra.mxu0 %v702
        %1640 = vmatpush.msra.mxu0 %v700
        %1641 = vmatpush.msra.mxu0 %v698
        %1642 = vmatpush.msra.mxu0 %v696
        %1643 = vmatpush.msra.mxu0 %v694
        %1644 = vmatpush.msra.mxu0 %v692
        %1645 = vmatpush.msra.mxu0 %v690
        %1646 = vmatpush.msra.mxu0 %v688
        %1647 = vmatpush.msra.mxu0 %v686
        %1648 = vmatpush.msra.mxu0 %v684
        %1649 = vmatmul.f32.gmra.mxu0 %v1318
        %v1650 = vpop.f32.mrf.mxu0
        %v1651 = vadd.f32 %v1631, %v1650
        %1652 = vdwg.mxu0
        %1653 = vmatpush.msra.mxu0 %v746
        %1654 = vmatpush.msra.mxu0 %v744
        %1655 = vmatpush.msra.mxu0 %v742
        %1656 = vmatpush.msra.mxu0 %v740
        %1657 = vmatpush.msra.mxu0 %v738
        %1658 = vmatpush.msra.mxu0 %v736
        %1659 = vmatpush.msra.mxu0 %v734
        %1660 = vmatpush.msra.mxu0 %v732
        %1661 = vmatpush.msra.mxu0 %v730
        %1662 = vmatpush.msra.mxu0 %v728
        %1663 = vmatpush.msra.mxu0 %v726
        %1664 = vmatpush.msra.mxu0 %v724
        %1665 = vmatpush.msra.mxu0 %v722
        %1666 = vmatpush.msra.mxu0 %v720
        %1667 = vmatpush.msra.mxu0 %v718
        %1668 = vmatpush.msra.mxu0 %v716
        %1669 = vmatmul.f32.gmra.mxu0 %v1319
        %v1670 = vpop.f32.mrf.mxu0
        %v1671 = vadd.f32 %v1651, %v1670
        %1672 = vdwg.mxu0
        %1673 = vmatpush.msra.mxu0 %v778
        %1674 = vmatpush.msra.mxu0 %v776
        %1675 = vmatpush.msra.mxu0 %v774
        %1676 = vmatpush.msra.mxu0 %v772
        %1677 = vmatpush.msra.mxu0 %v770
        %1678 = vmatpush.msra.mxu0 %v768
        %1679 = vmatpush.msra.mxu0 %v766
        %1680 = vmatpush.msra.mxu0 %v764
        %1681 = vmatpush.msra.mxu0 %v762
        %1682 = vmatpush.msra.mxu0 %v760
        %1683 = vmatpush.msra.mxu0 %v758
        %1684 = vmatpush.msra.mxu0 %v756
        %1685 = vmatpush.msra.mxu0 %v754
        %1686 = vmatpush.msra.mxu0 %v752
        %1687 = vmatpush.msra.mxu0 %v750
        %1688 = vmatpush.msra.mxu0 %v748
        %1689 = vmatmul.f32.gmra.mxu0 %v1320
        %v1690 = vpop.f32.mrf.mxu0
        %v1691 = vadd.f32 %v1671, %v1690
        %1692 = vdwg.mxu0
        %1693 = vmatpush.msra.mxu0 %v810
        %1694 = vmatpush.msra.mxu0 %v808
        %1695 = vmatpush.msra.mxu0 %v806
        %1696 = vmatpush.msra.mxu0 %v804
        %1697 = vmatpush.msra.mxu0 %v802
        %1698 = vmatpush.msra.mxu0 %v800
        %1699 = vmatpush.msra.mxu0 %v798
        %1700 = vmatpush.msra.mxu0 %v796
        %1701 = vmatpush.msra.mxu0 %v794
        %1702 = vmatpush.msra.mxu0 %v792
        %1703 = vmatpush.msra.mxu0 %v790
        %1704 = vmatpush.msra.mxu0 %v788
        %1705 = vmatpush.msra.mxu0 %v786
        %1706 = vmatpush.msra.mxu0 %v784
        %1707 = vmatpush.msra.mxu0 %v782
        %1708 = vmatpush.msra.mxu0 %v780
        %1709 = vmatmul.f32.gmra.mxu0 %v1323
        %v1710 = vpop.f32.mrf.mxu0
        %v1711 = vadd.f32 %v1691, %v1710
        %1712 = vdwg.mxu0
        %1713 = vmatpush.msra.mxu0 %v842
        %1714 = vmatpush.msra.mxu0 %v840
        %1715 = vmatpush.msra.mxu0 %v838
        %1716 = vmatpush.msra.mxu0 %v836
        %1717 = vmatpush.msra.mxu0 %v834
        %1718 = vmatpush.msra.mxu0 %v832
        %1719 = vmatpush.msra.mxu0 %v830
        %1720 = vmatpush.msra.mxu0 %v828
        %1721 = vmatpush.msra.mxu0 %v826
        %1722 = vmatpush.msra.mxu0 %v824
        %1723 = vmatpush.msra.mxu0 %v822
        %1724 = vmatpush.msra.mxu0 %v820
        %1725 = vmatpush.msra.mxu0 %v818
        %1726 = vmatpush.msra.mxu0 %v816
        %1727 = vmatpush.msra.mxu0 %v814
        %1728 = vmatpush.msra.mxu0 %v812
        %1729 = vmatmul.f32.gmra.mxu0 %v1324
        %v1730 = vpop.f32.mrf.mxu0
        %v1731 = vadd.f32 %v1711, %v1730
        %1732 = vdwg.mxu0
        %1733 = vmatpush.msra.mxu0 %v874
        %1734 = vmatpush.msra.mxu0 %v872
        %1735 = vmatpush.msra.mxu0 %v870
        %1736 = vmatpush.msra.mxu0 %v868
        %1737 = vmatpush.msra.mxu0 %v866
        %1738 = vmatpush.msra.mxu0 %v864
        %1739 = vmatpush.msra.mxu0 %v862
        %1740 = vmatpush.msra.mxu0 %v860
        %1741 = vmatpush.msra.mxu0 %v858
        %1742 = vmatpush.msra.mxu0 %v856
        %1743 = vmatpush.msra.mxu0 %v854
        %1744 = vmatpush.msra.mxu0 %v852
        %1745 = vmatpush.msra.mxu0 %v850
        %1746 = vmatpush.msra.mxu0 %v848
        %1747 = vmatpush.msra.mxu0 %v846
        %1748 = vmatpush.msra.mxu0 %v844
        %1749 = vmatmul.f32.gmra.mxu0 %v1325
        %v1750 = vpop.f32.mrf.mxu0
        %v1751 = vadd.f32 %v1731, %v1750
        %1752 = vdwg.mxu0
        %1753 = vmatpush.msra.mxu0 %v906
        %1754 = vmatpush.msra.mxu0 %v904
        %1755 = vmatpush.msra.mxu0 %v902
        %1756 = vmatpush.msra.mxu0 %v900
        %1757 = vmatpush.msra.mxu0 %v898
        %1758 = vmatpush.msra.mxu0 %v896
        %1759 = vmatpush.msra.mxu0 %v894
        %1760 = vmatpush.msra.mxu0 %v892
        %1761 = vmatpush.msra.mxu0 %v890
        %1762 = vmatpush.msra.mxu0 %v888
        %1763 = vmatpush.msra.mxu0 %v886
        %1764 = vmatpush.msra.mxu0 %v884
        %1765 = vmatpush.msra.mxu0 %v882
        %1766 = vmatpush.msra.mxu0 %v880
        %1767 = vmatpush.msra.mxu0 %v878
        %1768 = vmatpush.msra.mxu0 %v876
        %1769 = vmatmul.f32.gmra.mxu0 %v1326
        %v1770 = vpop.f32.mrf.mxu0
        %v1771 = vadd.f32 %v1751, %v1770
        %1772 = vdwg.mxu0
        %1773 = vmatpush.msra.mxu0 %v938
        %1774 = vmatpush.msra.mxu0 %v936
        %1775 = vmatpush.msra.mxu0 %v934
        %1776 = vmatpush.msra.mxu0 %v932
        %1777 = vmatpush.msra.mxu0 %v930
        %1778 = vmatpush.msra.mxu0 %v928
        %1779 = vmatpush.msra.mxu0 %v926
        %1780 = vmatpush.msra.mxu0 %v924
        %1781 = vmatpush.msra.mxu0 %v922
        %1782 = vmatpush.msra.mxu0 %v920
        %1783 = vmatpush.msra.mxu0 %v918
        %1784 = vmatpush.msra.mxu0 %v916
        %1785 = vmatpush.msra.mxu0 %v914
        %1786 = vmatpush.msra.mxu0 %v912
        %1787 = vmatpush.msra.mxu0 %v910
        %1788 = vmatpush.msra.mxu0 %v908
        %1789 = vmatmul.f32.gmra.mxu0 %v1327
        %v1790 = vpop.f32.mrf.mxu0
        %v1791 = vadd.f32 %v1771, %v1790
        %1792 = vdwg.mxu0
        %1793 = vmatpush.msra.mxu0 %v970
        %1794 = vmatpush.msra.mxu0 %v968
        %1795 = vmatpush.msra.mxu0 %v966
        %1796 = vmatpush.msra.mxu0 %v964
        %1797 = vmatpush.msra.mxu0 %v962
        %1798 = vmatpush.msra.mxu0 %v960
        %1799 = vmatpush.msra.mxu0 %v958
        %1800 = vmatpush.msra.mxu0 %v956
        %1801 = vmatpush.msra.mxu0 %v954
        %1802 = vmatpush.msra.mxu0 %v952
        %1803 = vmatpush.msra.mxu0 %v950
        %1804 = vmatpush.msra.mxu0 %v948
        %1805 = vmatpush.msra.mxu0 %v946
        %1806 = vmatpush.msra.mxu0 %v944
        %1807 = vmatpush.msra.mxu0 %v942
        %1808 = vmatpush.msra.mxu0 %v940
        %1809 = vmatmul.f32.gmra.mxu0 %v1328
        %v1810 = vpop.f32.mrf.mxu0
        %v1811 = vadd.f32 %v1791, %v1810
        %1812 = vdwg.mxu0
        %1813 = vmatpush.msra.mxu0 %v1002
        %1814 = vmatpush.msra.mxu0 %v1000
        %1815 = vmatpush.msra.mxu0 %v998
        %1816 = vmatpush.msra.mxu0 %v996
        %1817 = vmatpush.msra.mxu0 %v994
        %1818 = vmatpush.msra.mxu0 %v992
        %1819 = vmatpush.msra.mxu0 %v990
        %1820 = vmatpush.msra.mxu0 %v988
        %1821 = vmatpush.msra.mxu0 %v986
        %1822 = vmatpush.msra.mxu0 %v984
        %1823 = vmatpush.msra.mxu0 %v982
        %1824 = vmatpush.msra.mxu0 %v980
        %1825 = vmatpush.msra.mxu0 %v978
        %1826 = vmatpush.msra.mxu0 %v976
        %1827 = vmatpush.msra.mxu0 %v974
        %1828 = vmatpush.msra.mxu0 %v972
        %1829 = vmatmul.f32.gmra.mxu0 %v1329
        %v1830 = vpop.f32.mrf.mxu0
        %v1831 = vadd.f32 %v1811, %v1830
        %1832 = vdwg.mxu0
        %1833 = vmatpush.msra.mxu0 %v1034
        %1834 = vmatpush.msra.mxu0 %v1032
        %1835 = vmatpush.msra.mxu0 %v1030
        %1836 = vmatpush.msra.mxu0 %v1028
        %1837 = vmatpush.msra.mxu0 %v1026
        %1838 = vmatpush.msra.mxu0 %v1024
        %1839 = vmatpush.msra.mxu0 %v1022
        %1840 = vmatpush.msra.mxu0 %v1020
        %1841 = vmatpush.msra.mxu0 %v1018
        %1842 = vmatpush.msra.mxu0 %v1016
        %1843 = vmatpush.msra.mxu0 %v1014
        %1844 = vmatpush.msra.mxu0 %v1012
        %1845 = vmatpush.msra.mxu0 %v1010
        %1846 = vmatpush.msra.mxu0 %v1008
        %1847 = vmatpush.msra.mxu0 %v1006
        %1848 = vmatpush.msra.mxu0 %v1004
        %1849 = vmatmul.f32.gmra.mxu0 %v1330
        %v1850 = vpop.f32.mrf.mxu0
        %v1851 = vadd.f32 %v1831, %v1850
        %1852 = vdwg.mxu0
        %1853 = vmatpush.msra.mxu0 %v1066
        %1854 = vmatpush.msra.mxu0 %v1064
        %1855 = vmatpush.msra.mxu0 %v1062
        %1856 = vmatpush.msra.mxu0 %v1060
        %1857 = vmatpush.msra.mxu0 %v1058
        %1858 = vmatpush.msra.mxu0 %v1056
        %1859 = vmatpush.msra.mxu0 %v1054
        %1860 = vmatpush.msra.mxu0 %v1052
        %1861 = vmatpush.msra.mxu0 %v1050
        %1862 = vmatpush.msra.mxu0 %v1048
        %1863 = vmatpush.msra.mxu0 %v1046
        %1864 = vmatpush.msra.mxu0 %v1044
        %1865 = vmatpush.msra.mxu0 %v1042
        %1866 = vmatpush.msra.mxu0 %v1040
        %1867 = vmatpush.msra.mxu0 %v1038
        %1868 = vmatpush.msra.mxu0 %v1036
        %1869 = vmatmul.f32.gmra.mxu0 %v1333
        %v1870 = vpop.f32.mrf.mxu0
        %v1871 = vadd.f32 %v1851, %v1870
        %1872 = vdwg.mxu0
        %1873 = vmatpush.msra.mxu0 %v1098
        %1874 = vmatpush.msra.mxu0 %v1096
        %1875 = vmatpush.msra.mxu0 %v1094
        %1876 = vmatpush.msra.mxu0 %v1092
        %1877 = vmatpush.msra.mxu0 %v1090
        %1878 = vmatpush.msra.mxu0 %v1088
        %1879 = vmatpush.msra.mxu0 %v1086
        %1880 = vmatpush.msra.mxu0 %v1084
        %1881 = vmatpush.msra.mxu0 %v1082
        %1882 = vmatpush.msra.mxu0 %v1080
        %1883 = vmatpush.msra.mxu0 %v1078
        %1884 = vmatpush.msra.mxu0 %v1076
        %1885 = vmatpush.msra.mxu0 %v1074
        %1886 = vmatpush.msra.mxu0 %v1072
        %1887 = vmatpush.msra.mxu0 %v1070
        %1888 = vmatpush.msra.mxu0 %v1068
        %1889 = vmatmul.f32.gmra.mxu0 %v1334
        %v1890 = vpop.f32.mrf.mxu0
        %v1891 = vadd.f32 %v1871, %v1890
        %1892 = vdwg.mxu0
        %1893 = vmatpush.msra.mxu0 %v1130
        %1894 = vmatpush.msra.mxu0 %v1128
        %1895 = vmatpush.msra.mxu0 %v1126
        %1896 = vmatpush.msra.mxu0 %v1124
        %1897 = vmatpush.msra.mxu0 %v1122
        %1898 = vmatpush.msra.mxu0 %v1120
        %1899 = vmatpush.msra.mxu0 %v1118
        %1900 = vmatpush.msra.mxu0 %v1116
        %1901 = vmatpush.msra.mxu0 %v1114
        %1902 = vmatpush.msra.mxu0 %v1112
        %1903 = vmatpush.msra.mxu0 %v1110
        %1904 = vmatpush.msra.mxu0 %v1108
        %1905 = vmatpush.msra.mxu0 %v1106
        %1906 = vmatpush.msra.mxu0 %v1104
        %1907 = vmatpush.msra.mxu0 %v1102
        %1908 = vmatpush.msra.mxu0 %v1100
        %1909 = vmatmul.f32.gmra.mxu0 %v1335
        %v1910 = vpop.f32.mrf.mxu0
        %v1911 = vadd.f32 %v1891, %v1910
        %1912 = vdwg.mxu0
        %1913 = vmatpush.msra.mxu0 %v1162
        %1914 = vmatpush.msra.mxu0 %v1160
        %1915 = vmatpush.msra.mxu0 %v1158
        %1916 = vmatpush.msra.mxu0 %v1156
        %1917 = vmatpush.msra.mxu0 %v1154
        %1918 = vmatpush.msra.mxu0 %v1152
        %1919 = vmatpush.msra.mxu0 %v1150
        %1920 = vmatpush.msra.mxu0 %v1148
        %1921 = vmatpush.msra.mxu0 %v1146
        %1922 = vmatpush.msra.mxu0 %v1144
        %1923 = vmatpush.msra.mxu0 %v1142
        %1924 = vmatpush.msra.mxu0 %v1140
        %1925 = vmatpush.msra.mxu0 %v1138
        %1926 = vmatpush.msra.mxu0 %v1136
        %1927 = vmatpush.msra.mxu0 %v1134
        %1928 = vmatpush.msra.mxu0 %v1132
        %1929 = vmatmul.f32.gmra.mxu0 %v1336
        %v1930 = vpop.f32.mrf.mxu0
        %v1931 = vadd.f32 %v1911, %v1930
        %1932 = vdwg.mxu0
        %1933 = vmatpush.msra.mxu0 %v1194
        %1934 = vmatpush.msra.mxu0 %v1192
        %1935 = vmatpush.msra.mxu0 %v1190
        %1936 = vmatpush.msra.mxu0 %v1188
        %1937 = vmatpush.msra.mxu0 %v1186
        %1938 = vmatpush.msra.mxu0 %v1184
        %1939 = vmatpush.msra.mxu0 %v1182
        %1940 = vmatpush.msra.mxu0 %v1180
        %1941 = vmatpush.msra.mxu0 %v1178
        %1942 = vmatpush.msra.mxu0 %v1176
        %1943 = vmatpush.msra.mxu0 %v1174
        %1944 = vmatpush.msra.mxu0 %v1172
        %1945 = vmatpush.msra.mxu0 %v1170
        %1946 = vmatpush.msra.mxu0 %v1168
        %1947 = vmatpush.msra.mxu0 %v1166
        %1948 = vmatpush.msra.mxu0 %v1164
        %1949 = vmatmul.f32.gmra.mxu0 %v1337
        %v1950 = vpop.f32.mrf.mxu0
        %v1951 = vadd.f32 %v1931, %v1950
        %1952 = vdwg.mxu0
        %1953 = vmatpush.msra.mxu0 %v1226
        %1954 = vmatpush.msra.mxu0 %v1224
        %1955 = vmatpush.msra.mxu0 %v1222
        %1956 = vmatpush.msra.mxu0 %v1220
        %1957 = vmatpush.msra.mxu0 %v1218
        %1958 = vmatpush.msra.mxu0 %v1216
        %1959 = vmatpush.msra.mxu0 %v1214
        %1960 = vmatpush.msra.mxu0 %v1212
        %1961 = vmatpush.msra.mxu0 %v1210
        %1962 = vmatpush.msra.mxu0 %v1208
        %1963 = vmatpush.msra.mxu0 %v1206
        %1964 = vmatpush.msra.mxu0 %v1204
        %1965 = vmatpush.msra.mxu0 %v1202
        %1966 = vmatpush.msra.mxu0 %v1200
        %1967 = vmatpush.msra.mxu0 %v1198
        %1968 = vmatpush.msra.mxu0 %v1196
        %1969 = vmatmul.f32.gmra.mxu0 %v1338
        %v1970 = vpop.f32.mrf.mxu0
        %v1971 = vadd.f32 %v1951, %v1970
        %1972 = vdwg.mxu0
        %1973 = vmatpush.msra.mxu0 %v1258
        %1974 = vmatpush.msra.mxu0 %v1256
        %1975 = vmatpush.msra.mxu0 %v1254
        %1976 = vmatpush.msra.mxu0 %v1252
        %1977 = vmatpush.msra.mxu0 %v1250
        %1978 = vmatpush.msra.mxu0 %v1248
        %1979 = vmatpush.msra.mxu0 %v1246
        %1980 = vmatpush.msra.mxu0 %v1244
        %1981 = vmatpush.msra.mxu0 %v1242
        %1982 = vmatpush.msra.mxu0 %v1240
        %1983 = vmatpush.msra.mxu0 %v1238
        %1984 = vmatpush.msra.mxu0 %v1236
        %1985 = vmatpush.msra.mxu0 %v1234
        %1986 = vmatpush.msra.mxu0 %v1232
        %1987 = vmatpush.msra.mxu0 %v1230
        %1988 = vmatpush.msra.mxu0 %v1228
        %1989 = vmatmul.f32.gmra.mxu0 %v1339
        %v1990 = vpop.f32.mrf.mxu0
        %v1991 = vadd.f32 %v1971, %v1990
        %1992 = vdwg.mxu0
        %1993 = vmatpush.msra.mxu0 %v1290
        %1994 = vmatpush.msra.mxu0 %v1288
        %1995 = vmatpush.msra.mxu0 %v1286
        %1996 = vmatpush.msra.mxu0 %v1284
        %1997 = vmatpush.msra.mxu0 %v1282
        %1998 = vmatpush.msra.mxu0 %v1280
        %1999 = vmatpush.msra.mxu0 %v1278
        %2000 = vmatpush.msra.mxu0 %v1276
        %2001 = vmatpush.msra.mxu0 %v1274
        %2002 = vmatpush.msra.mxu0 %v1272
        %2003 = vmatpush.msra.mxu0 %v1270
        %2004 = vmatpush.msra.mxu0 %v1268
        %2005 = vmatpush.msra.mxu0 %v1266
        %2006 = vmatpush.msra.mxu0 %v1264
        %2007 = vmatpush.msra.mxu0 %v1262
        %2008 = vmatpush.msra.mxu0 %v1260
        %2009 = vmatmul.f32.gmra.mxu0 %v1340
        %v2010 = vpop.f32.mrf.mxu0
        %v2011 = vadd.f32 %v1991, %v2010
        %2012 = vdwg.mxu0
        %2013 = vmatpush.msra.mxu0 %v299
        %2014 = vmatpush.msra.mxu0 %v297
        %2015 = vmatpush.msra.mxu0 %v295
        %2016 = vmatpush.msra.mxu0 %v293
        %2017 = vmatpush.msra.mxu0 %v291
        %2018 = vmatpush.msra.mxu0 %v289
        %2019 = vmatpush.msra.mxu0 %v287
        %2020 = vmatpush.msra.mxu0 %v285
        %2021 = vmatpush.msra.mxu0 %v283
        %2022 = vmatpush.msra.mxu0 %v281
        %2023 = vmatpush.msra.mxu0 %v279
        %2024 = vmatpush.msra.mxu0 %v277
        %2025 = vmatpush.msra.mxu0 %v275
        %2026 = vmatpush.msra.mxu0 %v273
        %2027 = vmatpush.msra.mxu0 %v271
        %2028 = vmatpush.msra.mxu0 %v269
        %2029 = vmatmul.f32.gmra.mxu0 %v1303
        %v2030 = vpop.f32.mrf.mxu0
        %v2031 = vadd.f32 0.0, %v2030
        %2032 = vdwg.mxu0
        %2033 = vmatpush.msra.mxu0 %v331
        %2034 = vmatpush.msra.mxu0 %v329
        %2035 = vmatpush.msra.mxu0 %v327
        %2036 = vmatpush.msra.mxu0 %v325
        %2037 = vmatpush.msra.mxu0 %v323
        %2038 = vmatpush.msra.mxu0 %v321
        %2039 = vmatpush.msra.mxu0 %v319
        %2040 = vmatpush.msra.mxu0 %v317
        %2041 = vmatpush.msra.mxu0 %v315
        %2042 = vmatpush.msra.mxu0 %v313
        %2043 = vmatpush.msra.mxu0 %v311
        %2044 = vmatpush.msra.mxu0 %v309
        %2045 = vmatpush.msra.mxu0 %v307
        %2046 = vmatpush.msra.mxu0 %v305
        %2047 = vmatpush.msra.mxu0 %v303
        %2048 = vmatpush.msra.mxu0 %v301
        %2049 = vmatmul.f32.gmra.mxu0 %v1304
        %v2050 = vpop.f32.mrf.mxu0
        %v2051 = vadd.f32 %v2031, %v2050
        %2052 = vdwg.mxu0
        %2053 = vmatpush.msra.mxu0 %v363
        %2054 = vmatpush.msra.mxu0 %v361
        %2055 = vmatpush.msra.mxu0 %v359
        %2056 = vmatpush.msra.mxu0 %v357
        %2057 = vmatpush.msra.mxu0 %v355
        %2058 = vmatpush.msra.mxu0 %v353
        %2059 = vmatpush.msra.mxu0 %v351
        %2060 = vmatpush.msra.mxu0 %v349
        %2061 = vmatpush.msra.mxu0 %v347
        %2062 = vmatpush.msra.mxu0 %v345
        %2063 = vmatpush.msra.mxu0 %v343
        %2064 = vmatpush.msra.mxu0 %v341
        %2065 = vmatpush.msra.mxu0 %v339
        %2066 = vmatpush.msra.mxu0 %v337
        %2067 = vmatpush.msra.mxu0 %v335
        %2068 = vmatpush.msra.mxu0 %v333
        %2069 = vmatmul.f32.gmra.mxu0 %v1305
        %v2070 = vpop.f32.mrf.mxu0
        %v2071 = vadd.f32 %v2051, %v2070
        %2072 = vdwg.mxu0
        %2073 = vmatpush.msra.mxu0 %v395
        %2074 = vmatpush.msra.mxu0 %v393
        %2075 = vmatpush.msra.mxu0 %v391
        %2076 = vmatpush.msra.mxu0 %v389
        %2077 = vmatpush.msra.mxu0 %v387
        %2078 = vmatpush.msra.mxu0 %v385
        %2079 = vmatpush.msra.mxu0 %v383
        %2080 = vmatpush.msra.mxu0 %v381
        %2081 = vmatpush.msra.mxu0 %v379
        %2082 = vmatpush.msra.mxu0 %v377
        %2083 = vmatpush.msra.mxu0 %v375
        %2084 = vmatpush.msra.mxu0 %v373
        %2085 = vmatpush.msra.mxu0 %v371
        %2086 = vmatpush.msra.mxu0 %v369
        %2087 = vmatpush.msra.mxu0 %v367
        %2088 = vmatpush.msra.mxu0 %v365
        %2089 = vmatmul.f32.gmra.mxu0 %v1306
        %v2090 = vpop.f32.mrf.mxu0
        %v2091 = vadd.f32 %v2071, %v2090
        %2092 = vdwg.mxu0
        %2093 = vmatpush.msra.mxu0 %v427
        %2094 = vmatpush.msra.mxu0 %v425
        %2095 = vmatpush.msra.mxu0 %v423
        %2096 = vmatpush.msra.mxu0 %v421
        %2097 = vmatpush.msra.mxu0 %v419
        %2098 = vmatpush.msra.mxu0 %v417
        %2099 = vmatpush.msra.mxu0 %v415
        %2100 = vmatpush.msra.mxu0 %v413
        %2101 = vmatpush.msra.mxu0 %v411
        %2102 = vmatpush.msra.mxu0 %v409
        %2103 = vmatpush.msra.mxu0 %v407
        %2104 = vmatpush.msra.mxu0 %v405
        %2105 = vmatpush.msra.mxu0 %v403
        %2106 = vmatpush.msra.mxu0 %v401
        %2107 = vmatpush.msra.mxu0 %v399
        %2108 = vmatpush.msra.mxu0 %v397
        %2109 = vmatmul.f32.gmra.mxu0 %v1307
        %v2110 = vpop.f32.mrf.mxu0
        %v2111 = vadd.f32 %v2091, %v2110
        %2112 = vdwg.mxu0
        %2113 = vmatpush.msra.mxu0 %v459
        %2114 = vmatpush.msra.mxu0 %v457
        %2115 = vmatpush.msra.mxu0 %v455
        %2116 = vmatpush.msra.mxu0 %v453
        %2117 = vmatpush.msra.mxu0 %v451
        %2118 = vmatpush.msra.mxu0 %v449
        %2119 = vmatpush.msra.mxu0 %v447
        %2120 = vmatpush.msra.mxu0 %v445
        %2121 = vmatpush.msra.mxu0 %v443
        %2122 = vmatpush.msra.mxu0 %v441
        %2123 = vmatpush.msra.mxu0 %v439
        %2124 = vmatpush.msra.mxu0 %v437
        %2125 = vmatpush.msra.mxu0 %v435
        %2126 = vmatpush.msra.mxu0 %v433
        %2127 = vmatpush.msra.mxu0 %v431
        %2128 = vmatpush.msra.mxu0 %v429
        %2129 = vmatmul.f32.gmra.mxu0 %v1308
        %v2130 = vpop.f32.mrf.mxu0
        %v2131 = vadd.f32 %v2111, %v2130
        %2132 = vdwg.mxu0
        %2133 = vmatpush.msra.mxu0 %v491
        %2134 = vmatpush.msra.mxu0 %v489
        %2135 = vmatpush.msra.mxu0 %v487
        %2136 = vmatpush.msra.mxu0 %v485
        %2137 = vmatpush.msra.mxu0 %v483
        %2138 = vmatpush.msra.mxu0 %v481
        %2139 = vmatpush.msra.mxu0 %v479
        %2140 = vmatpush.msra.mxu0 %v477
        %2141 = vmatpush.msra.mxu0 %v475
        %2142 = vmatpush.msra.mxu0 %v473
        %2143 = vmatpush.msra.mxu0 %v471
        %2144 = vmatpush.msra.mxu0 %v469
        %2145 = vmatpush.msra.mxu0 %v467
        %2146 = vmatpush.msra.mxu0 %v465
        %2147 = vmatpush.msra.mxu0 %v463
        %2148 = vmatpush.msra.mxu0 %v461
        %2149 = vmatmul.f32.gmra.mxu0 %v1309
        %v2150 = vpop.f32.mrf.mxu0
        %v2151 = vadd.f32 %v2131, %v2150
        %2152 = vdwg.mxu0
        %2153 = vmatpush.msra.mxu0 %v523
        %2154 = vmatpush.msra.mxu0 %v521
        %2155 = vmatpush.msra.mxu0 %v519
        %2156 = vmatpush.msra.mxu0 %v517
        %2157 = vmatpush.msra.mxu0 %v515
        %2158 = vmatpush.msra.mxu0 %v513
        %2159 = vmatpush.msra.mxu0 %v511
        %2160 = vmatpush.msra.mxu0 %v509
        %2161 = vmatpush.msra.mxu0 %v507
        %2162 = vmatpush.msra.mxu0 %v505
        %2163 = vmatpush.msra.mxu0 %v503
        %2164 = vmatpush.msra.mxu0 %v501
        %2165 = vmatpush.msra.mxu0 %v499
        %2166 = vmatpush.msra.mxu0 %v497
        %2167 = vmatpush.msra.mxu0 %v495
        %2168 = vmatpush.msra.mxu0 %v493
        %2169 = vmatmul.f32.gmra.mxu0 %v1310
        %v2170 = vpop.f32.mrf.mxu0
        %v2171 = vadd.f32 %v2151, %v2170
        %2172 = vdwg.mxu0
        %2173 = vmatpush.msra.mxu0 %v555
        %2174 = vmatpush.msra.mxu0 %v553
        %2175 = vmatpush.msra.mxu0 %v551
        %2176 = vmatpush.msra.mxu0 %v549
        %2177 = vmatpush.msra.mxu0 %v547
        %2178 = vmatpush.msra.mxu0 %v545
        %2179 = vmatpush.msra.mxu0 %v543
        %2180 = vmatpush.msra.mxu0 %v541
        %2181 = vmatpush.msra.mxu0 %v539
        %2182 = vmatpush.msra.mxu0 %v537
        %2183 = vmatpush.msra.mxu0 %v535
        %2184 = vmatpush.msra.mxu0 %v533
        %2185 = vmatpush.msra.mxu0 %v531
        %2186 = vmatpush.msra.mxu0 %v529
        %2187 = vmatpush.msra.mxu0 %v527
        %2188 = vmatpush.msra.mxu0 %v525
        %2189 = vmatmul.f32.gmra.mxu0 %v1313
        %v2190 = vpop.f32.mrf.mxu0
        %v2191 = vadd.f32 %v2171, %v2190
        %2192 = vdwg.mxu0
        %2193 = vmatpush.msra.mxu0 %v587
        %2194 = vmatpush.msra.mxu0 %v585
        %2195 = vmatpush.msra.mxu0 %v583
        %2196 = vmatpush.msra.mxu0 %v581
        %2197 = vmatpush.msra.mxu0 %v579
        %2198 = vmatpush.msra.mxu0 %v577
        %2199 = vmatpush.msra.mxu0 %v575
        %2200 = vmatpush.msra.mxu0 %v573
        %2201 = vmatpush.msra.mxu0 %v571
        %2202 = vmatpush.msra.mxu0 %v569
        %2203 = vmatpush.msra.mxu0 %v567
        %2204 = vmatpush.msra.mxu0 %v565
        %2205 = vmatpush.msra.mxu0 %v563
        %2206 = vmatpush.msra.mxu0 %v561
        %2207 = vmatpush.msra.mxu0 %v559
        %2208 = vmatpush.msra.mxu0 %v557
        %2209 = vmatmul.f32.gmra.mxu0 %v1314
        %v2210 = vpop.f32.mrf.mxu0
        %v2211 = vadd.f32 %v2191, %v2210
        %2212 = vdwg.mxu0
        %2213 = vmatpush.msra.mxu0 %v619
        %2214 = vmatpush.msra.mxu0 %v617
        %2215 = vmatpush.msra.mxu0 %v615
        %2216 = vmatpush.msra.mxu0 %v613
        %2217 = vmatpush.msra.mxu0 %v611
        %2218 = vmatpush.msra.mxu0 %v609
        %2219 = vmatpush.msra.mxu0 %v607
        %2220 = vmatpush.msra.mxu0 %v605
        %2221 = vmatpush.msra.mxu0 %v603
        %2222 = vmatpush.msra.mxu0 %v601
        %2223 = vmatpush.msra.mxu0 %v599
        %2224 = vmatpush.msra.mxu0 %v597
        %2225 = vmatpush.msra.mxu0 %v595
        %2226 = vmatpush.msra.mxu0 %v593
        %2227 = vmatpush.msra.mxu0 %v591
        %2228 = vmatpush.msra.mxu0 %v589
        %2229 = vmatmul.f32.gmra.mxu0 %v1315
        %v2230 = vpop.f32.mrf.mxu0
        %v2231 = vadd.f32 %v2211, %v2230
        %2232 = vdwg.mxu0
        %2233 = vmatpush.msra.mxu0 %v651
        %2234 = vmatpush.msra.mxu0 %v649
        %2235 = vmatpush.msra.mxu0 %v647
        %2236 = vmatpush.msra.mxu0 %v645
        %2237 = vmatpush.msra.mxu0 %v643
        %2238 = vmatpush.msra.mxu0 %v641
        %2239 = vmatpush.msra.mxu0 %v639
        %2240 = vmatpush.msra.mxu0 %v637
        %2241 = vmatpush.msra.mxu0 %v635
        %2242 = vmatpush.msra.mxu0 %v633
        %2243 = vmatpush.msra.mxu0 %v631
        %2244 = vmatpush.msra.mxu0 %v629
        %2245 = vmatpush.msra.mxu0 %v627
        %2246 = vmatpush.msra.mxu0 %v625
        %2247 = vmatpush.msra.mxu0 %v623
        %2248 = vmatpush.msra.mxu0 %v621
        %2249 = vmatmul.f32.gmra.mxu0 %v1316
        %v2250 = vpop.f32.mrf.mxu0
        %v2251 = vadd.f32 %v2231, %v2250
        %2252 = vdwg.mxu0
        %2253 = vmatpush.msra.mxu0 %v683
        %2254 = vmatpush.msra.mxu0 %v681
        %2255 = vmatpush.msra.mxu0 %v679
        %2256 = vmatpush.msra.mxu0 %v677
        %2257 = vmatpush.msra.mxu0 %v675
        %2258 = vmatpush.msra.mxu0 %v673
        %2259 = vmatpush.msra.mxu0 %v671
        %2260 = vmatpush.msra.mxu0 %v669
        %2261 = vmatpush.msra.mxu0 %v667
        %2262 = vmatpush.msra.mxu0 %v665
        %2263 = vmatpush.msra.mxu0 %v663
        %2264 = vmatpush.msra.mxu0 %v661
        %2265 = vmatpush.msra.mxu0 %v659
        %2266 = vmatpush.msra.mxu0 %v657
        %2267 = vmatpush.msra.mxu0 %v655
        %2268 = vmatpush.msra.mxu0 %v653
        %2269 = vmatmul.f32.gmra.mxu0 %v1317
        %v2270 = vpop.f32.mrf.mxu0
        %v2271 = vadd.f32 %v2251, %v2270
        %2272 = vdwg.mxu0
        %2273 = vmatpush.msra.mxu0 %v715
        %2274 = vmatpush.msra.mxu0 %v713
        %2275 = vmatpush.msra.mxu0 %v711
        %2276 = vmatpush.msra.mxu0 %v709
        %2277 = vmatpush.msra.mxu0 %v707
        %2278 = vmatpush.msra.mxu0 %v705
        %2279 = vmatpush.msra.mxu0 %v703
        %2280 = vmatpush.msra.mxu0 %v701
        %2281 = vmatpush.msra.mxu0 %v699
        %2282 = vmatpush.msra.mxu0 %v697
        %2283 = vmatpush.msra.mxu0 %v695
        %2284 = vmatpush.msra.mxu0 %v693
        %2285 = vmatpush.msra.mxu0 %v691
        %2286 = vmatpush.msra.mxu0 %v689
        %2287 = vmatpush.msra.mxu0 %v687
        %2288 = vmatpush.msra.mxu0 %v685
        %2289 = vmatmul.f32.gmra.mxu0 %v1318
        %v2290 = vpop.f32.mrf.mxu0
        %v2291 = vadd.f32 %v2271, %v2290
        %2292 = vdwg.mxu0
        %2293 = vmatpush.msra.mxu0 %v747
        %2294 = vmatpush.msra.mxu0 %v745
        %2295 = vmatpush.msra.mxu0 %v743
        %2296 = vmatpush.msra.mxu0 %v741
        %2297 = vmatpush.msra.mxu0 %v739
        %2298 = vmatpush.msra.mxu0 %v737
        %2299 = vmatpush.msra.mxu0 %v735
        %2300 = vmatpush.msra.mxu0 %v733
        %2301 = vmatpush.msra.mxu0 %v731
        %2302 = vmatpush.msra.mxu0 %v729
        %2303 = vmatpush.msra.mxu0 %v727
        %2304 = vmatpush.msra.mxu0 %v725
        %2305 = vmatpush.msra.mxu0 %v723
        %2306 = vmatpush.msra.mxu0 %v721
        %2307 = vmatpush.msra.mxu0 %v719
        %2308 = vmatpush.msra.mxu0 %v717
        %2309 = vmatmul.f32.gmra.mxu0 %v1319
        %v2310 = vpop.f32.mrf.mxu0
        %v2311 = vadd.f32 %v2291, %v2310
        %2312 = vdwg.mxu0
        %2313 = vmatpush.msra.mxu0 %v779
        %2314 = vmatpush.msra.mxu0 %v777
        %2315 = vmatpush.msra.mxu0 %v775
        %2316 = vmatpush.msra.mxu0 %v773
        %2317 = vmatpush.msra.mxu0 %v771
        %2318 = vmatpush.msra.mxu0 %v769
        %2319 = vmatpush.msra.mxu0 %v767
        %2320 = vmatpush.msra.mxu0 %v765
        %2321 = vmatpush.msra.mxu0 %v763
        %2322 = vmatpush.msra.mxu0 %v761
        %2323 = vmatpush.msra.mxu0 %v759
        %2324 = vmatpush.msra.mxu0 %v757
        %2325 = vmatpush.msra.mxu0 %v755
        %2326 = vmatpush.msra.mxu0 %v753
        %2327 = vmatpush.msra.mxu0 %v751
        %2328 = vmatpush.msra.mxu0 %v749
        %2329 = vmatmul.f32.gmra.mxu0 %v1320
        %v2330 = vpop.f32.mrf.mxu0
        %v2331 = vadd.f32 %v2311, %v2330
        %2332 = vdwg.mxu0
        %2333 = vmatpush.msra.mxu0 %v811
        %2334 = vmatpush.msra.mxu0 %v809
        %2335 = vmatpush.msra.mxu0 %v807
        %2336 = vmatpush.msra.mxu0 %v805
        %2337 = vmatpush.msra.mxu0 %v803
        %2338 = vmatpush.msra.mxu0 %v801
        %2339 = vmatpush.msra.mxu0 %v799
        %2340 = vmatpush.msra.mxu0 %v797
        %2341 = vmatpush.msra.mxu0 %v795
        %2342 = vmatpush.msra.mxu0 %v793
        %2343 = vmatpush.msra.mxu0 %v791
        %2344 = vmatpush.msra.mxu0 %v789
        %2345 = vmatpush.msra.mxu0 %v787
        %2346 = vmatpush.msra.mxu0 %v785
        %2347 = vmatpush.msra.mxu0 %v783
        %2348 = vmatpush.msra.mxu0 %v781
        %2349 = vmatmul.f32.gmra.mxu0 %v1323
        %v2350 = vpop.f32.mrf.mxu0
        %v2351 = vadd.f32 %v2331, %v2350
        %2352 = vdwg.mxu0
        %2353 = vmatpush.msra.mxu0 %v843
        %2354 = vmatpush.msra.mxu0 %v841
        %2355 = vmatpush.msra.mxu0 %v839
        %2356 = vmatpush.msra.mxu0 %v837
        %2357 = vmatpush.msra.mxu0 %v835
        %2358 = vmatpush.msra.mxu0 %v833
        %2359 = vmatpush.msra.mxu0 %v831
        %2360 = vmatpush.msra.mxu0 %v829
        %2361 = vmatpush.msra.mxu0 %v827
        %2362 = vmatpush.msra.mxu0 %v825
        %2363 = vmatpush.msra.mxu0 %v823
        %2364 = vmatpush.msra.mxu0 %v821
        %2365 = vmatpush.msra.mxu0 %v819
        %2366 = vmatpush.msra.mxu0 %v817
        %2367 = vmatpush.msra.mxu0 %v815
        %2368 = vmatpush.msra.mxu0 %v813
        %2369 = vmatmul.f32.gmra.mxu0 %v1324
        %v2370 = vpop.f32.mrf.mxu0
        %v2371 = vadd.f32 %v2351, %v2370
        %2372 = vdwg.mxu0
        %2373 = vmatpush.msra.mxu0 %v875
        %2374 = vmatpush.msra.mxu0 %v873
        %2375 = vmatpush.msra.mxu0 %v871
        %2376 = vmatpush.msra.mxu0 %v869
        %2377 = vmatpush.msra.mxu0 %v867
        %2378 = vmatpush.msra.mxu0 %v865
        %2379 = vmatpush.msra.mxu0 %v863
        %2380 = vmatpush.msra.mxu0 %v861
        %2381 = vmatpush.msra.mxu0 %v859
        %2382 = vmatpush.msra.mxu0 %v857
        %2383 = vmatpush.msra.mxu0 %v855
        %2384 = vmatpush.msra.mxu0 %v853
        %2385 = vmatpush.msra.mxu0 %v851
        %2386 = vmatpush.msra.mxu0 %v849
        %2387 = vmatpush.msra.mxu0 %v847
        %2388 = vmatpush.msra.mxu0 %v845
        %2389 = vmatmul.f32.gmra.mxu0 %v1325
        %v2390 = vpop.f32.mrf.mxu0
        %v2391 = vadd.f32 %v2371, %v2390
        %2392 = vdwg.mxu0
        %2393 = vmatpush.msra.mxu0 %v907
        %2394 = vmatpush.msra.mxu0 %v905
        %2395 = vmatpush.msra.mxu0 %v903
        %2396 = vmatpush.msra.mxu0 %v901
        %2397 = vmatpush.msra.mxu0 %v899
        %2398 = vmatpush.msra.mxu0 %v897
        %2399 = vmatpush.msra.mxu0 %v895
        %2400 = vmatpush.msra.mxu0 %v893
        %2401 = vmatpush.msra.mxu0 %v891
        %2402 = vmatpush.msra.mxu0 %v889
        %2403 = vmatpush.msra.mxu0 %v887
        %2404 = vmatpush.msra.mxu0 %v885
        %2405 = vmatpush.msra.mxu0 %v883
        %2406 = vmatpush.msra.mxu0 %v881
        %2407 = vmatpush.msra.mxu0 %v879
        %2408 = vmatpush.msra.mxu0 %v877
        %2409 = vmatmul.f32.gmra.mxu0 %v1326
        %v2410 = vpop.f32.mrf.mxu0
        %v2411 = vadd.f32 %v2391, %v2410
        %2412 = vdwg.mxu0
        %2413 = vmatpush.msra.mxu0 %v939
        %2414 = vmatpush.msra.mxu0 %v937
        %2415 = vmatpush.msra.mxu0 %v935
        %2416 = vmatpush.msra.mxu0 %v933
        %2417 = vmatpush.msra.mxu0 %v931
        %2418 = vmatpush.msra.mxu0 %v929
        %2419 = vmatpush.msra.mxu0 %v927
        %2420 = vmatpush.msra.mxu0 %v925
        %2421 = vmatpush.msra.mxu0 %v923
        %2422 = vmatpush.msra.mxu0 %v921
        %2423 = vmatpush.msra.mxu0 %v919
        %2424 = vmatpush.msra.mxu0 %v917
        %2425 = vmatpush.msra.mxu0 %v915
        %2426 = vmatpush.msra.mxu0 %v913
        %2427 = vmatpush.msra.mxu0 %v911
        %2428 = vmatpush.msra.mxu0 %v909
        %2429 = vmatmul.f32.gmra.mxu0 %v1327
        %v2430 = vpop.f32.mrf.mxu0
        %v2431 = vadd.f32 %v2411, %v2430
        %2432 = vdwg.mxu0
        %2433 = vmatpush.msra.mxu0 %v971
        %2434 = vmatpush.msra.mxu0 %v969
        %2435 = vmatpush.msra.mxu0 %v967
        %2436 = vmatpush.msra.mxu0 %v965
        %2437 = vmatpush.msra.mxu0 %v963
        %2438 = vmatpush.msra.mxu0 %v961
        %2439 = vmatpush.msra.mxu0 %v959
        %2440 = vmatpush.msra.mxu0 %v957
        %2441 = vmatpush.msra.mxu0 %v955
        %2442 = vmatpush.msra.mxu0 %v953
        %2443 = vmatpush.msra.mxu0 %v951
        %2444 = vmatpush.msra.mxu0 %v949
        %2445 = vmatpush.msra.mxu0 %v947
        %2446 = vmatpush.msra.mxu0 %v945
        %2447 = vmatpush.msra.mxu0 %v943
        %2448 = vmatpush.msra.mxu0 %v941
        %2449 = vmatmul.f32.gmra.mxu0 %v1328
        %v2450 = vpop.f32.mrf.mxu0
        %v2451 = vadd.f32 %v2431, %v2450
        %2452 = vdwg.mxu0
        %2453 = vmatpush.msra.mxu0 %v1003
        %2454 = vmatpush.msra.mxu0 %v1001
        %2455 = vmatpush.msra.mxu0 %v999
        %2456 = vmatpush.msra.mxu0 %v997
        %2457 = vmatpush.msra.mxu0 %v995
        %2458 = vmatpush.msra.mxu0 %v993
        %2459 = vmatpush.msra.mxu0 %v991
        %2460 = vmatpush.msra.mxu0 %v989
        %2461 = vmatpush.msra.mxu0 %v987
        %2462 = vmatpush.msra.mxu0 %v985
        %2463 = vmatpush.msra.mxu0 %v983
        %2464 = vmatpush.msra.mxu0 %v981
        %2465 = vmatpush.msra.mxu0 %v979
        %2466 = vmatpush.msra.mxu0 %v977
        %2467 = vmatpush.msra.mxu0 %v975
        %2468 = vmatpush.msra.mxu0 %v973
        %2469 = vmatmul.f32.gmra.mxu0 %v1329
        %v2470 = vpop.f32.mrf.mxu0
        %v2471 = vadd.f32 %v2451, %v2470
        %2472 = vdwg.mxu0
        %2473 = vmatpush.msra.mxu0 %v1035
        %2474 = vmatpush.msra.mxu0 %v1033
        %2475 = vmatpush.msra.mxu0 %v1031
        %2476 = vmatpush.msra.mxu0 %v1029
        %2477 = vmatpush.msra.mxu0 %v1027
        %2478 = vmatpush.msra.mxu0 %v1025
        %2479 = vmatpush.msra.mxu0 %v1023
        %2480 = vmatpush.msra.mxu0 %v1021
        %2481 = vmatpush.msra.mxu0 %v1019
        %2482 = vmatpush.msra.mxu0 %v1017
        %2483 = vmatpush.msra.mxu0 %v1015
        %2484 = vmatpush.msra.mxu0 %v1013
        %2485 = vmatpush.msra.mxu0 %v1011
        %2486 = vmatpush.msra.mxu0 %v1009
        %2487 = vmatpush.msra.mxu0 %v1007
        %2488 = vmatpush.msra.mxu0 %v1005
        %2489 = vmatmul.f32.gmra.mxu0 %v1330
        %v2490 = vpop.f32.mrf.mxu0
        %v2491 = vadd.f32 %v2471, %v2490
        %2492 = vdwg.mxu0
        %2493 = vmatpush.msra.mxu0 %v1067
        %2494 = vmatpush.msra.mxu0 %v1065
        %2495 = vmatpush.msra.mxu0 %v1063
        %2496 = vmatpush.msra.mxu0 %v1061
        %2497 = vmatpush.msra.mxu0 %v1059
        %2498 = vmatpush.msra.mxu0 %v1057
        %2499 = vmatpush.msra.mxu0 %v1055
        %2500 = vmatpush.msra.mxu0 %v1053
        %2501 = vmatpush.msra.mxu0 %v1051
        %2502 = vmatpush.msra.mxu0 %v1049
        %2503 = vmatpush.msra.mxu0 %v1047
        %2504 = vmatpush.msra.mxu0 %v1045
        %2505 = vmatpush.msra.mxu0 %v1043
        %2506 = vmatpush.msra.mxu0 %v1041
        %2507 = vmatpush.msra.mxu0 %v1039
        %2508 = vmatpush.msra.mxu0 %v1037
        %2509 = vmatmul.f32.gmra.mxu0 %v1333
        %v2510 = vpop.f32.mrf.mxu0
        %v2511 = vadd.f32 %v2491, %v2510
        %2512 = vdwg.mxu0
        %2513 = vmatpush.msra.mxu0 %v1099
        %2514 = vmatpush.msra.mxu0 %v1097
        %2515 = vmatpush.msra.mxu0 %v1095
        %2516 = vmatpush.msra.mxu0 %v1093
        %2517 = vmatpush.msra.mxu0 %v1091
        %2518 = vmatpush.msra.mxu0 %v1089
        %2519 = vmatpush.msra.mxu0 %v1087
        %2520 = vmatpush.msra.mxu0 %v1085
        %2521 = vmatpush.msra.mxu0 %v1083
        %2522 = vmatpush.msra.mxu0 %v1081
        %2523 = vmatpush.msra.mxu0 %v1079
        %2524 = vmatpush.msra.mxu0 %v1077
        %2525 = vmatpush.msra.mxu0 %v1075
        %2526 = vmatpush.msra.mxu0 %v1073
        %2527 = vmatpush.msra.mxu0 %v1071
        %2528 = vmatpush.msra.mxu0 %v1069
        %2529 = vmatmul.f32.gmra.mxu0 %v1334
        %v2530 = vpop.f32.mrf.mxu0
        %v2531 = vadd.f32 %v2511, %v2530
        %2532 = vdwg.mxu0
        %2533 = vmatpush.msra.mxu0 %v1131
        %2534 = vmatpush.msra.mxu0 %v1129
        %2535 = vmatpush.msra.mxu0 %v1127
        %2536 = vmatpush.msra.mxu0 %v1125
        %2537 = vmatpush.msra.mxu0 %v1123
        %2538 = vmatpush.msra.mxu0 %v1121
        %2539 = vmatpush.msra.mxu0 %v1119
        %2540 = vmatpush.msra.mxu0 %v1117
        %2541 = vmatpush.msra.mxu0 %v1115
        %2542 = vmatpush.msra.mxu0 %v1113
        %2543 = vmatpush.msra.mxu0 %v1111
        %2544 = vmatpush.msra.mxu0 %v1109
        %2545 = vmatpush.msra.mxu0 %v1107
        %2546 = vmatpush.msra.mxu0 %v1105
        %2547 = vmatpush.msra.mxu0 %v1103
        %2548 = vmatpush.msra.mxu0 %v1101
        %2549 = vmatmul.f32.gmra.mxu0 %v1335
        %v2550 = vpop.f32.mrf.mxu0
        %v2551 = vadd.f32 %v2531, %v2550
        %2552 = vdwg.mxu0
        %2553 = vmatpush.msra.mxu0 %v1163
        %2554 = vmatpush.msra.mxu0 %v1161
        %2555 = vmatpush.msra.mxu0 %v1159
        %2556 = vmatpush.msra.mxu0 %v1157
        %2557 = vmatpush.msra.mxu0 %v1155
        %2558 = vmatpush.msra.mxu0 %v1153
        %2559 = vmatpush.msra.mxu0 %v1151
        %2560 = vmatpush.msra.mxu0 %v1149
        %2561 = vmatpush.msra.mxu0 %v1147
        %2562 = vmatpush.msra.mxu0 %v1145
        %2563 = vmatpush.msra.mxu0 %v1143
        %2564 = vmatpush.msra.mxu0 %v1141
        %2565 = vmatpush.msra.mxu0 %v1139
        %2566 = vmatpush.msra.mxu0 %v1137
        %2567 = vmatpush.msra.mxu0 %v1135
        %2568 = vmatpush.msra.mxu0 %v1133
        %2569 = vmatmul.f32.gmra.mxu0 %v1336
        %v2570 = vpop.f32.mrf.mxu0
        %v2571 = vadd.f32 %v2551, %v2570
        %2572 = vdwg.mxu0
        %2573 = vmatpush.msra.mxu0 %v1195
        %2574 = vmatpush.msra.mxu0 %v1193
        %2575 = vmatpush.msra.mxu0 %v1191
        %2576 = vmatpush.msra.mxu0 %v1189
        %2577 = vmatpush.msra.mxu0 %v1187
        %2578 = vmatpush.msra.mxu0 %v1185
        %2579 = vmatpush.msra.mxu0 %v1183
        %2580 = vmatpush.msra.mxu0 %v1181
        %2581 = vmatpush.msra.mxu0 %v1179
        %2582 = vmatpush.msra.mxu0 %v1177
        %2583 = vmatpush.msra.mxu0 %v1175
        %2584 = vmatpush.msra.mxu0 %v1173
        %2585 = vmatpush.msra.mxu0 %v1171
        %2586 = vmatpush.msra.mxu0 %v1169
        %2587 = vmatpush.msra.mxu0 %v1167
        %2588 = vmatpush.msra.mxu0 %v1165
        %2589 = vmatmul.f32.gmra.mxu0 %v1337
        %v2590 = vpop.f32.mrf.mxu0
        %v2591 = vadd.f32 %v2571, %v2590
        %2592 = vdwg.mxu0
        %2593 = vmatpush.msra.mxu0 %v1227
        %2594 = vmatpush.msra.mxu0 %v1225
        %2595 = vmatpush.msra.mxu0 %v1223
        %2596 = vmatpush.msra.mxu0 %v1221
        %2597 = vmatpush.msra.mxu0 %v1219
        %2598 = vmatpush.msra.mxu0 %v1217
        %2599 = vmatpush.msra.mxu0 %v1215
        %2600 = vmatpush.msra.mxu0 %v1213
        %2601 = vmatpush.msra.mxu0 %v1211
        %2602 = vmatpush.msra.mxu0 %v1209
        %2603 = vmatpush.msra.mxu0 %v1207
        %2604 = vmatpush.msra.mxu0 %v1205
        %2605 = vmatpush.msra.mxu0 %v1203
        %2606 = vmatpush.msra.mxu0 %v1201
        %2607 = vmatpush.msra.mxu0 %v1199
        %2608 = vmatpush.msra.mxu0 %v1197
        %2609 = vmatmul.f32.gmra.mxu0 %v1338
        %v2610 = vpop.f32.mrf.mxu0
        %v2611 = vadd.f32 %v2591, %v2610
        %2612 = vdwg.mxu0
        %2613 = vmatpush.msra.mxu0 %v1259
        %2614 = vmatpush.msra.mxu0 %v1257
        %2615 = vmatpush.msra.mxu0 %v1255
        %2616 = vmatpush.msra.mxu0 %v1253
        %2617 = vmatpush.msra.mxu0 %v1251
        %2618 = vmatpush.msra.mxu0 %v1249
        %2619 = vmatpush.msra.mxu0 %v1247
        %2620 = vmatpush.msra.mxu0 %v1245
        %2621 = vmatpush.msra.mxu0 %v1243
        %2622 = vmatpush.msra.mxu0 %v1241
        %2623 = vmatpush.msra.mxu0 %v1239
        %2624 = vmatpush.msra.mxu0 %v1237
        %2625 = vmatpush.msra.mxu0 %v1235
        %2626 = vmatpush.msra.mxu0 %v1233
        %2627 = vmatpush.msra.mxu0 %v1231
        %2628 = vmatpush.msra.mxu0 %v1229
        %2629 = vmatmul.f32.gmra.mxu0 %v1339
        %v2630 = vpop.f32.mrf.mxu0
        %v2631 = vadd.f32 %v2611, %v2630
        %2632 = vdwg.mxu0
        %2633 = vmatpush.msra.mxu0 %v1291
        %2634 = vmatpush.msra.mxu0 %v1289
        %2635 = vmatpush.msra.mxu0 %v1287
        %2636 = vmatpush.msra.mxu0 %v1285
        %2637 = vmatpush.msra.mxu0 %v1283
        %2638 = vmatpush.msra.mxu0 %v1281
        %2639 = vmatpush.msra.mxu0 %v1279
        %2640 = vmatpush.msra.mxu0 %v1277
        %2641 = vmatpush.msra.mxu0 %v1275
        %2642 = vmatpush.msra.mxu0 %v1273
        %2643 = vmatpush.msra.mxu0 %v1271
        %2644 = vmatpush.msra.mxu0 %v1269
        %2645 = vmatpush.msra.mxu0 %v1267
        %2646 = vmatpush.msra.mxu0 %v1265
        %2647 = vmatpush.msra.mxu0 %v1263
        %2648 = vmatpush.msra.mxu0 %v1261
        %2649 = vmatmul.f32.gmra.mxu0 %v1340
        %v2650 = vpop.f32.mrf.mxu0
        %v2651 = vadd.f32 %v2631, %v2650
        %2652 = vdwg.mxu0
        %v2655 = vrot.slane %v2651, 6
        %vm2656 = vcmask 1041408
        %v2657 = vsel %vm2656, %v2011, %v2655
        %v2659 = vadd.f32 %v259, %v2657
        %2660 = vst [vmem:[#allocation2] sm:$0xf] %v2659
        %p2661 = scmp.eq.s32.totalorder %s22, 34
        // Predicated region
        $region41: #{deep_mlp_forward.2} parent=31 // pred_check
          %p2662 = pneg %p2661
        $region42: #{deep_mlp_forward.2} parent=31 // pred_check_branch
          %2664 = sbr.rel (%p2662) target = $region44
        $region43: #{deep_mlp_forward.2} parent=31 // pred_region
          %v2665 = vld [vmem:[#allocation2] sm:$0xf]
          %v2666 = vld [vmem:[%s246] sm:$0x3]
          %v2668 = vperm.slane %v2666, 0
          %v2669 = vperm.slane %v2666, 1
          %v2670 = vrot.slane %v2669, 6
          %v2671 = vsel %vm2656, %v2668, %v2670
          %v2673 = vadd.f32 %v2665, %v2671
          %v2674 = vmax.f32 %v2673, 0.0
          %2675 = vst [vmem:[%s252] sm:$0xf] %v2674
        $region44: #{deep_mlp_forward.2} parent=31 // pred_fallthru
          _
        %s2676 = smul.u32 2, %s21
        %p2677 = scmp.lt.s32.totalorder %s2676, 3
        %s2678 = scalar_select %p2677, %s2676, 3
        %s2679 = smul.addr %s2678, 2
        %s2680 = scalar_lea.vmem %s3, %s2679
        // Predicated region
        $region45: #{deep_mlp_forward.2} parent=31 // pred_check
          %p2681 = pneg %p127
        $region46: #{deep_mlp_forward.2} parent=31 // pred_check_branch
          %2683 = sbr.rel (%p2681) target = $region48
        $region47: #{deep_mlp_forward.2} parent=31 // pred_region
          %s2684 = smul.u32 2, %s21
        $region48: #{deep_mlp_forward.2} parent=31 // pred_fallthru
          _
      $region32: #{deep_mlp_forward.2} parent=5 // pred_fallthru
        _
      %p2685 = scmp.le.s32.totalorder 2, %s12
      // Predicated region
      $region49: #{deep_mlp_forward.2} parent=5 // pred_check
        %p2686 = pneg %p2685
      $region50: #{deep_mlp_forward.2} parent=5 // pred_check_branch
        %2688 = sbr.rel (%p2686) target = $region52
      $region51: #{deep_mlp_forward.2} parent=5 // pred_region
        %s2689 = ssub.s32 %s12, 2
        // Predicated region
        $region53: #{deep_mlp_forward.2} parent=51 // pred_check
          %p2690 = pneg %p133
        $region54: #{deep_mlp_forward.2} parent=51 // pred_check_branch
          %2692 = sbr.rel (%p2690) target = $region56
        $region55: #{deep_mlp_forward.2} parent=51 // pred_region
          %s2693 = smul.u32 2, %s23
          %p2694 = scmp.lt.s32.totalorder %s2693, 3
          %s2695 = scalar_select %p2694, %s2693, 3
          %s2696 = smul.addr %s2695, 2
          %s2697 = scalar_lea.vmem %s3, %s2696
        $region56: #{deep_mlp_forward.2} parent=51 // pred_fallthru
          _
      $region52: #{deep_mlp_forward.2} parent=5 // pred_fallthru
        _
    $region6: #{deep_mlp_forward.2} parent=1 // loop_footer
      %s16 = sadd.s32 1, %s12
    $region7: #{deep_mlp_forward.2} parent=1 // loop_footer_branch
      %11 = sbr.rel target = $region3
    $region8: #{deep_mlp_forward.2} parent=1 // loop_exit
      _
    %2698 = vsyncpa [#allocation4], 1
    %s2699 = scalar_lea.sflag [#allocation4], 1
    %2700 = vsyncpa %s2699, 1

// kernel: deep_mlp_forward.3
$region0: #{deep_mlp_forward.3}
  #allocation0 [shape = 'u32[]', space=smem, size = 0x4, offset = 0x4, fixed_abs, tag = 'smem constant byte address 0x4 - core index']
  #allocation1 [shape = 'u32[72,128]{1,0:T(1,128)}', space=vmem, size = 0x9000, scoped, tag = 'internal scratch']
  %s0 = inlined_call_operand.vmem [shape: f32[2,512], index: 0, kind: input, shape index: {}]
  %s1 = inlined_call_operand.vmem [shape: f32[512,512], index: 1, kind: input, shape index: {}]
  %s2 = inlined_call_operand.vmem [shape: f32[1,512], index: 2, kind: input, shape index: {}]
  %s3 = inlined_call_operand.vmem [shape: f32[512,512], index: 3, kind: input, shape index: {}]
  %s4 = inlined_call_operand.vmem [shape: f32[1,512], index: 4, kind: input, shape index: {}]
  %s5 = inlined_call_operand.vmem [shape: f32[512,512], index: 5, kind: input, shape index: {}]
  %s6 = inlined_call_operand.vmem [shape: f32[1,512], index: 6, kind: input, shape index: {}]
  %s7 = inlined_call_operand.vmem [shape: f32[512,512], index: 7, kind: input, shape index: {}]
  %s8 = inlined_call_operand.vmem [shape: f32[1,512], index: 8, kind: input, shape index: {}]
  %s9 = inlined_call_operand.vmem [shape: f32[512,56], index: 9, kind: input, shape index: {}]
  %s10 = inlined_call_operand.vmem [shape: f32[1,56], index: 10, kind: input, shape index: {}]
  %s11 = inlined_call_operand.hbm [shape: f32[2,56], index: 11, kind: output, shape index: {}]
  %s12 = sld [smem:[#allocation0]]
  $region54: #{deep_mlp_forward.3} parent=0
    _
  %s14 = ssub.s32 1, %s12
  %s15 = scalar_select 0, %s14, %s12
  $region1: #{deep_mlp_forward.3} parent=0
    #allocation2 [shape = 'u8[1024]{0}', space=vmem, size = 0x400, scoped, tag = 'output window, operand 0, single buffered']
    #allocation3 [shape = 's32[1]{0}', space=sflag, size = 0x4, scoped, tag = 'scoped memory for deep_mlp_forward.3']
    %16 = vsyncpa [#allocation3], 0
    // Predicated region
    $region2: #{deep_mlp_forward.3} parent=1 // pred_check
      _
    $region3: #{deep_mlp_forward.3} parent=1 // pred_check_branch
      %18 = sbr.rel (0) target = $region5
    $region4: #{deep_mlp_forward.3} parent=1 // pred_region
      _
    $region5: #{deep_mlp_forward.3} parent=1 // pred_fallthru
      _
    // Predicated region
    $region6: #{deep_mlp_forward.3} parent=1 // pred_check
      _
    $region7: #{deep_mlp_forward.3} parent=1 // pred_check_branch
      %20 = sbr.rel (0) target = $region9
    $region8: #{deep_mlp_forward.3} parent=1 // pred_region
      _
    $region9: #{deep_mlp_forward.3} parent=1 // pred_fallthru
      _
    // Predicated region
    $region10: #{deep_mlp_forward.3} parent=1 // pred_check
      _
    $region11: #{deep_mlp_forward.3} parent=1 // pred_check_branch
      %22 = sbr.rel (0) target = $region13
    $region12: #{deep_mlp_forward.3} parent=1 // pred_region
      _
    $region13: #{deep_mlp_forward.3} parent=1 // pred_fallthru
      _
    // Predicated region
    $region14: #{deep_mlp_forward.3} parent=1 // pred_check
      _
    $region15: #{deep_mlp_forward.3} parent=1 // pred_check_branch
      %24 = sbr.rel (0) target = $region17
    $region16: #{deep_mlp_forward.3} parent=1 // pred_region
      _
    $region17: #{deep_mlp_forward.3} parent=1 // pred_fallthru
      _
    // Predicated region
    $region18: #{deep_mlp_forward.3} parent=1 // pred_check
      _
    $region19: #{deep_mlp_forward.3} parent=1 // pred_check_branch
      %26 = sbr.rel (0) target = $region21
    $region20: #{deep_mlp_forward.3} parent=1 // pred_region
      _
    $region21: #{deep_mlp_forward.3} parent=1 // pred_fallthru
      _
    // Predicated region
    $region22: #{deep_mlp_forward.3} parent=1 // pred_check
      _
    $region23: #{deep_mlp_forward.3} parent=1 // pred_check_branch
      %28 = sbr.rel (0) target = $region25
    $region24: #{deep_mlp_forward.3} parent=1 // pred_region
      _
    $region25: #{deep_mlp_forward.3} parent=1 // pred_fallthru
      _
    // Predicated region
    $region26: #{deep_mlp_forward.3} parent=1 // pred_check
      _
    $region27: #{deep_mlp_forward.3} parent=1 // pred_check_branch
      %30 = sbr.rel (0) target = $region29
    $region28: #{deep_mlp_forward.3} parent=1 // pred_region
      _
    $region29: #{deep_mlp_forward.3} parent=1 // pred_fallthru
      _
    // Predicated region
    $region30: #{deep_mlp_forward.3} parent=1 // pred_check
      _
    $region31: #{deep_mlp_forward.3} parent=1 // pred_check_branch
      %32 = sbr.rel (0) target = $region33
    $region32: #{deep_mlp_forward.3} parent=1 // pred_region
      _
    $region33: #{deep_mlp_forward.3} parent=1 // pred_fallthru
      _
    // Predicated region
    $region34: #{deep_mlp_forward.3} parent=1 // pred_check
      _
    $region35: #{deep_mlp_forward.3} parent=1 // pred_check_branch
      %34 = sbr.rel (0) target = $region37
    $region36: #{deep_mlp_forward.3} parent=1 // pred_region
      _
    $region37: #{deep_mlp_forward.3} parent=1 // pred_fallthru
      _
    // Predicated region
    $region38: #{deep_mlp_forward.3} parent=1 // pred_check
      _
    $region39: #{deep_mlp_forward.3} parent=1 // pred_check_branch
      %36 = sbr.rel (0) target = $region41
    $region40: #{deep_mlp_forward.3} parent=1 // pred_region
      _
    $region41: #{deep_mlp_forward.3} parent=1 // pred_fallthru
      _
    // Predicated region
    $region42: #{deep_mlp_forward.3} parent=1 // pred_check
      _
    $region43: #{deep_mlp_forward.3} parent=1 // pred_check_branch
      %38 = sbr.rel (0) target = $region45
    $region44: #{deep_mlp_forward.3} parent=1 // pred_region
      _
    $region45: #{deep_mlp_forward.3} parent=1 // pred_fallthru
      _
    %v39 = vld [vmem:[%s0] sm:$0xff]
    %v40 = vld [vmem:[%s1] sm:$0xff]
    %v41 = vld [vmem:[%s1 + $0x8] sm:$0xff]
    %v42 = vld [vmem:[%s1 + $0x10] sm:$0xff]
    %v43 = vld [vmem:[%s1 + $0x18] sm:$0xff]
    %v44 = vld [vmem:[%s1 + $0x20] sm:$0xff]
    %v45 = vld [vmem:[%s1 + $0x28] sm:$0xff]
    %v46 = vld [vmem:[%s1 + $0x30] sm:$0xff]
    %v47 = vld [vmem:[%s1 + $0x38] sm:$0xff]
    %v48 = vld [vmem:[%s1 + $0x40] sm:$0xff]
    %v49 = vld [vmem:[%s1 + $0x48] sm:$0xff]
    %v50 = vld [vmem:[%s1 + $0x50] sm:$0xff]
    %v51 = vld [vmem:[%s1 + $0x58] sm:$0xff]
    %v52 = vld [vmem:[%s1 + $0x60] sm:$0xff]
    %v53 = vld [vmem:[%s1 + $0x68] sm:$0xff]
    %v54 = vld [vmem:[%s1 + $0x70] sm:$0xff]
    %v55 = vld [vmem:[%s1 + $0x78] sm:$0xff]
    %v56 = vld [vmem:[%s1 + $0x80] sm:$0xff]
    %v57 = vld [vmem:[%s1 + $0x88] sm:$0xff]
    %v58 = vld [vmem:[%s1 + $0x90] sm:$0xff]
    %v59 = vld [vmem:[%s1 + $0x98] sm:$0xff]
    %v60 = vld [vmem:[%s1 + $0xa0] sm:$0xff]
    %v61 = vld [vmem:[%s1 + $0xa8] sm:$0xff]
    %v62 = vld [vmem:[%s1 + $0xb0] sm:$0xff]
    %v63 = vld [vmem:[%s1 + $0xb8] sm:$0xff]
    %v64 = vld [vmem:[%s1 + $0xc0] sm:$0xff]
    %v65 = vld [vmem:[%s1 + $0xc8] sm:$0xff]
    %v66 = vld [vmem:[%s1 + $0xd0] sm:$0xff]
    %v67 = vld [vmem:[%s1 + $0xd8] sm:$0xff]
    %v68 = vld [vmem:[%s1 + $0xe0] sm:$0xff]
    %v69 = vld [vmem:[%s1 + $0xe8] sm:$0xff]
    %v70 = vld [vmem:[%s1 + $0xf0] sm:$0xff]
    %v71 = vld [vmem:[%s1 + $0xf8] sm:$0xff]
    %v72 = vld [vmem:[%s1 + $0x100] sm:$0xff]
    %v73 = vld [vmem:[%s1 + $0x108] sm:$0xff]
    %v74 = vld [vmem:[%s1 + $0x110] sm:$0xff]
    %v75 = vld [vmem:[%s1 + $0x118] sm:$0xff]
    %v76 = vld [vmem:[%s1 + $0x120] sm:$0xff]
    %v77 = vld [vmem:[%s1 + $0x128] sm:$0xff]
    %v78 = vld [vmem:[%s1 + $0x130] sm:$0xff]
    %v79 = vld [vmem:[%s1 + $0x138] sm:$0xff]
    %v80 = vld [vmem:[%s1 + $0x140] sm:$0xff]
    %v81 = vld [vmem:[%s1 + $0x148] sm:$0xff]
    %v82 = vld [vmem:[%s1 + $0x150] sm:$0xff]
    %v83 = vld [vmem:[%s1 + $0x158] sm:$0xff]
    %v84 = vld [vmem:[%s1 + $0x160] sm:$0xff]
    %v85 = vld [vmem:[%s1 + $0x168] sm:$0xff]
    %v86 = vld [vmem:[%s1 + $0x170] sm:$0xff]
    %v87 = vld [vmem:[%s1 + $0x178] sm:$0xff]
    %v88 = vld [vmem:[%s1 + $0x180] sm:$0xff]
    %v89 = vld [vmem:[%s1 + $0x188] sm:$0xff]
    %v90 = vld [vmem:[%s1 + $0x190] sm:$0xff]
    %v91 = vld [vmem:[%s1 + $0x198] sm:$0xff]
    %v92 = vld [vmem:[%s1 + $0x1a0] sm:$0xff]
    %v93 = vld [vmem:[%s1 + $0x1a8] sm:$0xff]
    %v94 = vld [vmem:[%s1 + $0x1b0] sm:$0xff]
    %v95 = vld [vmem:[%s1 + $0x1b8] sm:$0xff]
    %v96 = vld [vmem:[%s1 + $0x1c0] sm:$0xff]
    %v97 = vld [vmem:[%s1 + $0x1c8] sm:$0xff]
    %v98 = vld [vmem:[%s1 + $0x1d0] sm:$0xff]
    %v99 = vld [vmem:[%s1 + $0x1d8] sm:$0xff]
    %v100 = vld [vmem:[%s1 + $0x1e0] sm:$0xff]
    %v101 = vld [vmem:[%s1 + $0x1e8] sm:$0xff]
    %v102 = vld [vmem:[%s1 + $0x1f0] sm:$0xff]
    %v103 = vld [vmem:[%s1 + $0x1f8] sm:$0xff]
    %v104 = vld [vmem:[%s1 + $0x200] sm:$0xff]
    %v105 = vld [vmem:[%s1 + $0x208] sm:$0xff]
    %v106 = vld [vmem:[%s1 + $0x210] sm:$0xff]
    %v107 = vld [vmem:[%s1 + $0x218] sm:$0xff]
    %v108 = vld [vmem:[%s1 + $0x220] sm:$0xff]
    %v109 = vld [vmem:[%s1 + $0x228] sm:$0xff]
    %v110 = vld [vmem:[%s1 + $0x230] sm:$0xff]
    %v111 = vld [vmem:[%s1 + $0x238] sm:$0xff]
    %v112 = vld [vmem:[%s1 + $0x240] sm:$0xff]
    %v113 = vld [vmem:[%s1 + $0x248] sm:$0xff]
    %v114 = vld [vmem:[%s1 + $0x250] sm:$0xff]
    %v115 = vld [vmem:[%s1 + $0x258] sm:$0xff]
    %v116 = vld [vmem:[%s1 + $0x260] sm:$0xff]
    %v117 = vld [vmem:[%s1 + $0x268] sm:$0xff]
    %v118 = vld [vmem:[%s1 + $0x270] sm:$0xff]
    %v119 = vld [vmem:[%s1 + $0x278] sm:$0xff]
    %v120 = vld [vmem:[%s1 + $0x280] sm:$0xff]
    %v121 = vld [vmem:[%s1 + $0x288] sm:$0xff]
    %v122 = vld [vmem:[%s1 + $0x290] sm:$0xff]
    %v123 = vld [vmem:[%s1 + $0x298] sm:$0xff]
    %v124 = vld [vmem:[%s1 + $0x2a0] sm:$0xff]
    %v125 = vld [vmem:[%s1 + $0x2a8] sm:$0xff]
    %v126 = vld [vmem:[%s1 + $0x2b0] sm:$0xff]
    %v127 = vld [vmem:[%s1 + $0x2b8] sm:$0xff]
    %v128 = vld [vmem:[%s1 + $0x2c0] sm:$0xff]
    %v129 = vld [vmem:[%s1 + $0x2c8] sm:$0xff]
    %v130 = vld [vmem:[%s1 + $0x2d0] sm:$0xff]
    %v131 = vld [vmem:[%s1 + $0x2d8] sm:$0xff]
    %v132 = vld [vmem:[%s1 + $0x2e0] sm:$0xff]
    %v133 = vld [vmem:[%s1 + $0x2e8] sm:$0xff]
    %v134 = vld [vmem:[%s1 + $0x2f0] sm:$0xff]
    %v135 = vld [vmem:[%s1 + $0x2f8] sm:$0xff]
    %v136 = vld [vmem:[%s1 + $0x300] sm:$0xff]
    %v137 = vld [vmem:[%s1 + $0x308] sm:$0xff]
    %v138 = vld [vmem:[%s1 + $0x310] sm:$0xff]
    %v139 = vld [vmem:[%s1 + $0x318] sm:$0xff]
    %v140 = vld [vmem:[%s1 + $0x320] sm:$0xff]
    %v141 = vld [vmem:[%s1 + $0x328] sm:$0xff]
    %v142 = vld [vmem:[%s1 + $0x330] sm:$0xff]
    %v143 = vld [vmem:[%s1 + $0x338] sm:$0xff]
    %v144 = vld [vmem:[%s1 + $0x340] sm:$0xff]
    %v145 = vld [vmem:[%s1 + $0x348] sm:$0xff]
    %v146 = vld [vmem:[%s1 + $0x350] sm:$0xff]
    %v147 = vld [vmem:[%s1 + $0x358] sm:$0xff]
    %v148 = vld [vmem:[%s1 + $0x360] sm:$0xff]
    %v149 = vld [vmem:[%s1 + $0x368] sm:$0xff]
    %v150 = vld [vmem:[%s1 + $0x370] sm:$0xff]
    %v151 = vld [vmem:[%s1 + $0x378] sm:$0xff]
    %v152 = vld [vmem:[%s1 + $0x380] sm:$0xff]
    %v153 = vld [vmem:[%s1 + $0x388] sm:$0xff]
    %v154 = vld [vmem:[%s1 + $0x390] sm:$0xff]
    %v155 = vld [vmem:[%s1 + $0x398] sm:$0xff]
    %v156 = vld [vmem:[%s1 + $0x3a0] sm:$0xff]
    %v157 = vld [vmem:[%s1 + $0x3a8] sm:$0xff]
    %v158 = vld [vmem:[%s1 + $0x3b0] sm:$0xff]
    %v159 = vld [vmem:[%s1 + $0x3b8] sm:$0xff]
    %v160 = vld [vmem:[%s1 + $0x3c0] sm:$0xff]
    %v161 = vld [vmem:[%s1 + $0x3c8] sm:$0xff]
    %v162 = vld [vmem:[%s1 + $0x3d0] sm:$0xff]
    %v163 = vld [vmem:[%s1 + $0x3d8] sm:$0xff]
    %v164 = vld [vmem:[%s1 + $0x3e0] sm:$0xff]
    %v165 = vld [vmem:[%s1 + $0x3e8] sm:$0xff]
    %v166 = vld [vmem:[%s1 + $0x3f0] sm:$0xff]
    %v167 = vld [vmem:[%s1 + $0x3f8] sm:$0xff]
    %v168 = vld [vmem:[%s1 + $0x400] sm:$0xff]
    %v169 = vld [vmem:[%s1 + $0x408] sm:$0xff]
    %v170 = vld [vmem:[%s1 + $0x410] sm:$0xff]
    %v171 = vld [vmem:[%s1 + $0x418] sm:$0xff]
    %v172 = vld [vmem:[%s1 + $0x420] sm:$0xff]
    %v173 = vld [vmem:[%s1 + $0x428] sm:$0xff]
    %v174 = vld [vmem:[%s1 + $0x430] sm:$0xff]
    %v175 = vld [vmem:[%s1 + $0x438] sm:$0xff]
    %v176 = vld [vmem:[%s1 + $0x440] sm:$0xff]
    %v177 = vld [vmem:[%s1 + $0x448] sm:$0xff]
    %v178 = vld [vmem:[%s1 + $0x450] sm:$0xff]
    %v179 = vld [vmem:[%s1 + $0x458] sm:$0xff]
    %v180 = vld [vmem:[%s1 + $0x460] sm:$0xff]
    %v181 = vld [vmem:[%s1 + $0x468] sm:$0xff]
    %v182 = vld [vmem:[%s1 + $0x470] sm:$0xff]
    %v183 = vld [vmem:[%s1 + $0x478] sm:$0xff]
    %v184 = vld [vmem:[%s1 + $0x480] sm:$0xff]
    %v185 = vld [vmem:[%s1 + $0x488] sm:$0xff]
    %v186 = vld [vmem:[%s1 + $0x490] sm:$0xff]
    %v187 = vld [vmem:[%s1 + $0x498] sm:$0xff]
    %v188 = vld [vmem:[%s1 + $0x4a0] sm:$0xff]
    %v189 = vld [vmem:[%s1 + $0x4a8] sm:$0xff]
    %v190 = vld [vmem:[%s1 + $0x4b0] sm:$0xff]
    %v191 = vld [vmem:[%s1 + $0x4b8] sm:$0xff]
    %v192 = vld [vmem:[%s1 + $0x4c0] sm:$0xff]
    %v193 = vld [vmem:[%s1 + $0x4c8] sm:$0xff]
    %v194 = vld [vmem:[%s1 + $0x4d0] sm:$0xff]
    %v195 = vld [vmem:[%s1 + $0x4d8] sm:$0xff]
    %v196 = vld [vmem:[%s1 + $0x4e0] sm:$0xff]
    %v197 = vld [vmem:[%s1 + $0x4e8] sm:$0xff]
    %v198 = vld [vmem:[%s1 + $0x4f0] sm:$0xff]
    %v199 = vld [vmem:[%s1 + $0x4f8] sm:$0xff]
    %v200 = vld [vmem:[%s1 + $0x500] sm:$0xff]
    %v201 = vld [vmem:[%s1 + $0x508] sm:$0xff]
    %v202 = vld [vmem:[%s1 + $0x510] sm:$0xff]
    %v203 = vld [vmem:[%s1 + $0x518] sm:$0xff]
    %v204 = vld [vmem:[%s1 + $0x520] sm:$0xff]
    %v205 = vld [vmem:[%s1 + $0x528] sm:$0xff]
    %v206 = vld [vmem:[%s1 + $0x530] sm:$0xff]
    %v207 = vld [vmem:[%s1 + $0x538] sm:$0xff]
    %v208 = vld [vmem:[%s1 + $0x540] sm:$0xff]
    %v209 = vld [vmem:[%s1 + $0x548] sm:$0xff]
    %v210 = vld [vmem:[%s1 + $0x550] sm:$0xff]
    %v211 = vld [vmem:[%s1 + $0x558] sm:$0xff]
    %v212 = vld [vmem:[%s1 + $0x560] sm:$0xff]
    %v213 = vld [vmem:[%s1 + $0x568] sm:$0xff]
    %v214 = vld [vmem:[%s1 + $0x570] sm:$0xff]
    %v215 = vld [vmem:[%s1 + $0x578] sm:$0xff]
    %v216 = vld [vmem:[%s1 + $0x580] sm:$0xff]
    %v217 = vld [vmem:[%s1 + $0x588] sm:$0xff]
    %v218 = vld [vmem:[%s1 + $0x590] sm:$0xff]
    %v219 = vld [vmem:[%s1 + $0x598] sm:$0xff]
    %v220 = vld [vmem:[%s1 + $0x5a0] sm:$0xff]
    %v221 = vld [vmem:[%s1 + $0x5a8] sm:$0xff]
    %v222 = vld [vmem:[%s1 + $0x5b0] sm:$0xff]
    %v223 = vld [vmem:[%s1 + $0x5b8] sm:$0xff]
    %v224 = vld [vmem:[%s1 + $0x5c0] sm:$0xff]
    %v225 = vld [vmem:[%s1 + $0x5c8] sm:$0xff]
    %v226 = vld [vmem:[%s1 + $0x5d0] sm:$0xff]
    %v227 = vld [vmem:[%s1 + $0x5d8] sm:$0xff]
    %v228 = vld [vmem:[%s1 + $0x5e0] sm:$0xff]
    %v229 = vld [vmem:[%s1 + $0x5e8] sm:$0xff]
    %v230 = vld [vmem:[%s1 + $0x5f0] sm:$0xff]
    %v231 = vld [vmem:[%s1 + $0x5f8] sm:$0xff]
    %v232 = vld [vmem:[%s1 + $0x600] sm:$0xff]
    %v233 = vld [vmem:[%s1 + $0x608] sm:$0xff]
    %v234 = vld [vmem:[%s1 + $0x610] sm:$0xff]
    %v235 = vld [vmem:[%s1 + $0x618] sm:$0xff]
    %v236 = vld [vmem:[%s1 + $0x620] sm:$0xff]
    %v237 = vld [vmem:[%s1 + $0x628] sm:$0xff]
    %v238 = vld [vmem:[%s1 + $0x630] sm:$0xff]
    %v239 = vld [vmem:[%s1 + $0x638] sm:$0xff]
    %v240 = vld [vmem:[%s1 + $0x640] sm:$0xff]
    %v241 = vld [vmem:[%s1 + $0x648] sm:$0xff]
    %v242 = vld [vmem:[%s1 + $0x650] sm:$0xff]
    %v243 = vld [vmem:[%s1 + $0x658] sm:$0xff]
    %v244 = vld [vmem:[%s1 + $0x660] sm:$0xff]
    %v245 = vld [vmem:[%s1 + $0x668] sm:$0xff]
    %v246 = vld [vmem:[%s1 + $0x670] sm:$0xff]
    %v247 = vld [vmem:[%s1 + $0x678] sm:$0xff]
    %v248 = vld [vmem:[%s1 + $0x680] sm:$0xff]
    %v249 = vld [vmem:[%s1 + $0x688] sm:$0xff]
    %v250 = vld [vmem:[%s1 + $0x690] sm:$0xff]
    %v251 = vld [vmem:[%s1 + $0x698] sm:$0xff]
    %v252 = vld [vmem:[%s1 + $0x6a0] sm:$0xff]
    %v253 = vld [vmem:[%s1 + $0x6a8] sm:$0xff]
    %v254 = vld [vmem:[%s1 + $0x6b0] sm:$0xff]
    %v255 = vld [vmem:[%s1 + $0x6b8] sm:$0xff]
    %v256 = vld [vmem:[%s1 + $0x6c0] sm:$0xff]
    %v257 = vld [vmem:[%s1 + $0x6c8] sm:$0xff]
    %v258 = vld [vmem:[%s1 + $0x6d0] sm:$0xff]
    %v259 = vld [vmem:[%s1 + $0x6d8] sm:$0xff]
    %v260 = vld [vmem:[%s1 + $0x6e0] sm:$0xff]
    %v261 = vld [vmem:[%s1 + $0x6e8] sm:$0xff]
    %v262 = vld [vmem:[%s1 + $0x6f0] sm:$0xff]
    %v263 = vld [vmem:[%s1 + $0x6f8] sm:$0xff]
    %v264 = vld [vmem:[%s1 + $0x700] sm:$0xff]
    %v265 = vld [vmem:[%s1 + $0x708] sm:$0xff]
    %v266 = vld [vmem:[%s1 + $0x710] sm:$0xff]
    %v267 = vld [vmem:[%s1 + $0x718] sm:$0xff]
    %v268 = vld [vmem:[%s1 + $0x720] sm:$0xff]
    %v269 = vld [vmem:[%s1 + $0x728] sm:$0xff]
    %v270 = vld [vmem:[%s1 + $0x730] sm:$0xff]
    %v271 = vld [vmem:[%s1 + $0x738] sm:$0xff]
    %v272 = vld [vmem:[%s1 + $0x740] sm:$0xff]
    %v273 = vld [vmem:[%s1 + $0x748] sm:$0xff]
    %v274 = vld [vmem:[%s1 + $0x750] sm:$0xff]
    %v275 = vld [vmem:[%s1 + $0x758] sm:$0xff]
    %v276 = vld [vmem:[%s1 + $0x760] sm:$0xff]
    %v277 = vld [vmem:[%s1 + $0x768] sm:$0xff]
    %v278 = vld [vmem:[%s1 + $0x770] sm:$0xff]
    %v279 = vld [vmem:[%s1 + $0x778] sm:$0xff]
    %v280 = vld [vmem:[%s1 + $0x780] sm:$0xff]
    %v281 = vld [vmem:[%s1 + $0x788] sm:$0xff]
    %v282 = vld [vmem:[%s1 + $0x790] sm:$0xff]
    %v283 = vld [vmem:[%s1 + $0x798] sm:$0xff]
    %v284 = vld [vmem:[%s1 + $0x7a0] sm:$0xff]
    %v285 = vld [vmem:[%s1 + $0x7a8] sm:$0xff]
    %v286 = vld [vmem:[%s1 + $0x7b0] sm:$0xff]
    %v287 = vld [vmem:[%s1 + $0x7b8] sm:$0xff]
    %v288 = vld [vmem:[%s1 + $0x7c0] sm:$0xff]
    %v289 = vld [vmem:[%s1 + $0x7c8] sm:$0xff]
    %v290 = vld [vmem:[%s1 + $0x7d0] sm:$0xff]
    %v291 = vld [vmem:[%s1 + $0x7d8] sm:$0xff]
    %v292 = vld [vmem:[%s1 + $0x7e0] sm:$0xff]
    %v293 = vld [vmem:[%s1 + $0x7e8] sm:$0xff]
    %v294 = vld [vmem:[%s1 + $0x7f0] sm:$0xff]
    %v295 = vld [vmem:[%s1 + $0x7f8] sm:$0xff]
    %v296 = vld [vmem:[%s2] sm:$0xf]
    %v298 = vperm.slane %v296, 0
    %v299 = vperm.slane %v296, 1
    %v300 = vperm.slane %v296, 2
    %v301 = vperm.slane %v296, 3
    %307 = vst [vmem:[#allocation1] ss:$4 sm:$0xff] %v39
    %v308 = vld.sshfl [vmem:[#allocation1] sm:$0xff pattern:$0x73625140]
    %v309 = vld.sshfl [vmem:[#allocation1 + $0x8] sm:$0xff pattern:$0x73625140]
    %v310 = vld.sshfl [vmem:[#allocation1 + $0x10] sm:$0xff pattern:$0x73625140]
    %v311 = vld.sshfl [vmem:[#allocation1 + $0x18] sm:$0xff pattern:$0x73625140]
    %316 = vmatpush.msra.mxu0 %v100
    %317 = vmatpush.msra.mxu0 %v96
    %318 = vmatpush.msra.mxu0 %v92
    %319 = vmatpush.msra.mxu0 %v88
    %320 = vmatpush.msra.mxu0 %v84
    %321 = vmatpush.msra.mxu0 %v80
    %322 = vmatpush.msra.mxu0 %v76
    %323 = vmatpush.msra.mxu0 %v72
    %324 = vmatpush.msra.mxu0 %v68
    %325 = vmatpush.msra.mxu0 %v64
    %326 = vmatpush.msra.mxu0 %v60
    %327 = vmatpush.msra.mxu0 %v56
    %328 = vmatpush.msra.mxu0 %v52
    %329 = vmatpush.msra.mxu0 %v48
    %330 = vmatpush.msra.mxu0 %v44
    %331 = vmatpush.msra.mxu0 %v40
    %332 = vmatmul.f32.gmra.mxu0 %v308
    %v333 = vpop.f32.mrf.mxu0
    %v334 = vadd.f32 %v298, %v333
    %335 = vdwg.mxu0
    %336 = vmatpush.msra.mxu0 %v164
    %337 = vmatpush.msra.mxu0 %v160
    %338 = vmatpush.msra.mxu0 %v156
    %339 = vmatpush.msra.mxu0 %v152
    %340 = vmatpush.msra.mxu0 %v148
    %341 = vmatpush.msra.mxu0 %v144
    %342 = vmatpush.msra.mxu0 %v140
    %343 = vmatpush.msra.mxu0 %v136
    %344 = vmatpush.msra.mxu0 %v132
    %345 = vmatpush.msra.mxu0 %v128
    %346 = vmatpush.msra.mxu0 %v124
    %347 = vmatpush.msra.mxu0 %v120
    %348 = vmatpush.msra.mxu0 %v116
    %349 = vmatpush.msra.mxu0 %v112
    %350 = vmatpush.msra.mxu0 %v108
    %351 = vmatpush.msra.mxu0 %v104
    %352 = vmatmul.f32.gmra.mxu0 %v309
    %v353 = vpop.f32.mrf.mxu0
    %v354 = vadd.f32 %v334, %v353
    %355 = vdwg.mxu0
    %356 = vmatpush.msra.mxu0 %v228
    %357 = vmatpush.msra.mxu0 %v224
    %358 = vmatpush.msra.mxu0 %v220
    %359 = vmatpush.msra.mxu0 %v216
    %360 = vmatpush.msra.mxu0 %v212
    %361 = vmatpush.msra.mxu0 %v208
    %362 = vmatpush.msra.mxu0 %v204
    %363 = vmatpush.msra.mxu0 %v200
    %364 = vmatpush.msra.mxu0 %v196
    %365 = vmatpush.msra.mxu0 %v192
    %366 = vmatpush.msra.mxu0 %v188
    %367 = vmatpush.msra.mxu0 %v184
    %368 = vmatpush.msra.mxu0 %v180
    %369 = vmatpush.msra.mxu0 %v176
    %370 = vmatpush.msra.mxu0 %v172
    %371 = vmatpush.msra.mxu0 %v168
    %372 = vmatmul.f32.gmra.mxu0 %v310
    %v373 = vpop.f32.mrf.mxu0
    %v374 = vadd.f32 %v354, %v373
    %375 = vdwg.mxu0
    %376 = vmatpush.msra.mxu0 %v292
    %377 = vmatpush.msra.mxu0 %v288
    %378 = vmatpush.msra.mxu0 %v284
    %379 = vmatpush.msra.mxu0 %v280
    %380 = vmatpush.msra.mxu0 %v276
    %381 = vmatpush.msra.mxu0 %v272
    %382 = vmatpush.msra.mxu0 %v268
    %383 = vmatpush.msra.mxu0 %v264
    %384 = vmatpush.msra.mxu0 %v260
    %385 = vmatpush.msra.mxu0 %v256
    %386 = vmatpush.msra.mxu0 %v252
    %387 = vmatpush.msra.mxu0 %v248
    %388 = vmatpush.msra.mxu0 %v244
    %389 = vmatpush.msra.mxu0 %v240
    %390 = vmatpush.msra.mxu0 %v236
    %391 = vmatpush.msra.mxu0 %v232
    %392 = vmatmul.f32.gmra.mxu0 %v311
    %v393 = vpop.f32.mrf.mxu0
    %v394 = vadd.f32 %v374, %v393
    %395 = vdwg.mxu0
    %396 = vmatpush.msra.mxu0 %v101
    %397 = vmatpush.msra.mxu0 %v97
    %398 = vmatpush.msra.mxu0 %v93
    %399 = vmatpush.msra.mxu0 %v89
    %400 = vmatpush.msra.mxu0 %v85
    %401 = vmatpush.msra.mxu0 %v81
    %402 = vmatpush.msra.mxu0 %v77
    %403 = vmatpush.msra.mxu0 %v73
    %404 = vmatpush.msra.mxu0 %v69
    %405 = vmatpush.msra.mxu0 %v65
    %406 = vmatpush.msra.mxu0 %v61
    %407 = vmatpush.msra.mxu0 %v57
    %408 = vmatpush.msra.mxu0 %v53
    %409 = vmatpush.msra.mxu0 %v49
    %410 = vmatpush.msra.mxu0 %v45
    %411 = vmatpush.msra.mxu0 %v41
    %412 = vmatmul.f32.gmra.mxu0 %v308
    %v413 = vpop.f32.mrf.mxu0
    %v414 = vadd.f32 %v299, %v413
    %415 = vdwg.mxu0
    %416 = vmatpush.msra.mxu0 %v165
    %417 = vmatpush.msra.mxu0 %v161
    %418 = vmatpush.msra.mxu0 %v157
    %419 = vmatpush.msra.mxu0 %v153
    %420 = vmatpush.msra.mxu0 %v149
    %421 = vmatpush.msra.mxu0 %v145
    %422 = vmatpush.msra.mxu0 %v141
    %423 = vmatpush.msra.mxu0 %v137
    %424 = vmatpush.msra.mxu0 %v133
    %425 = vmatpush.msra.mxu0 %v129
    %426 = vmatpush.msra.mxu0 %v125
    %427 = vmatpush.msra.mxu0 %v121
    %428 = vmatpush.msra.mxu0 %v117
    %429 = vmatpush.msra.mxu0 %v113
    %430 = vmatpush.msra.mxu0 %v109
    %431 = vmatpush.msra.mxu0 %v105
    %432 = vmatmul.f32.gmra.mxu0 %v309
    %v433 = vpop.f32.mrf.mxu0
    %v434 = vadd.f32 %v414, %v433
    %435 = vdwg.mxu0
    %436 = vmatpush.msra.mxu0 %v229
    %437 = vmatpush.msra.mxu0 %v225
    %438 = vmatpush.msra.mxu0 %v221
    %439 = vmatpush.msra.mxu0 %v217
    %440 = vmatpush.msra.mxu0 %v213
    %441 = vmatpush.msra.mxu0 %v209
    %442 = vmatpush.msra.mxu0 %v205
    %443 = vmatpush.msra.mxu0 %v201
    %444 = vmatpush.msra.mxu0 %v197
    %445 = vmatpush.msra.mxu0 %v193
    %446 = vmatpush.msra.mxu0 %v189
    %447 = vmatpush.msra.mxu0 %v185
    %448 = vmatpush.msra.mxu0 %v181
    %449 = vmatpush.msra.mxu0 %v177
    %450 = vmatpush.msra.mxu0 %v173
    %451 = vmatpush.msra.mxu0 %v169
    %452 = vmatmul.f32.gmra.mxu0 %v310
    %v453 = vpop.f32.mrf.mxu0
    %v454 = vadd.f32 %v434, %v453
    %455 = vdwg.mxu0
    %456 = vmatpush.msra.mxu0 %v293
    %457 = vmatpush.msra.mxu0 %v289
    %458 = vmatpush.msra.mxu0 %v285
    %459 = vmatpush.msra.mxu0 %v281
    %460 = vmatpush.msra.mxu0 %v277
    %461 = vmatpush.msra.mxu0 %v273
    %462 = vmatpush.msra.mxu0 %v269
    %463 = vmatpush.msra.mxu0 %v265
    %464 = vmatpush.msra.mxu0 %v261
    %465 = vmatpush.msra.mxu0 %v257
    %466 = vmatpush.msra.mxu0 %v253
    %467 = vmatpush.msra.mxu0 %v249
    %468 = vmatpush.msra.mxu0 %v245
    %469 = vmatpush.msra.mxu0 %v241
    %470 = vmatpush.msra.mxu0 %v237
    %471 = vmatpush.msra.mxu0 %v233
    %472 = vmatmul.f32.gmra.mxu0 %v311
    %v473 = vpop.f32.mrf.mxu0
    %v474 = vadd.f32 %v454, %v473
    %475 = vdwg.mxu0
    %476 = vmatpush.msra.mxu0 %v102
    %477 = vmatpush.msra.mxu0 %v98
    %478 = vmatpush.msra.mxu0 %v94
    %479 = vmatpush.msra.mxu0 %v90
    %480 = vmatpush.msra.mxu0 %v86
    %481 = vmatpush.msra.mxu0 %v82
    %482 = vmatpush.msra.mxu0 %v78
    %483 = vmatpush.msra.mxu0 %v74
    %484 = vmatpush.msra.mxu0 %v70
    %485 = vmatpush.msra.mxu0 %v66
    %486 = vmatpush.msra.mxu0 %v62
    %487 = vmatpush.msra.mxu0 %v58
    %488 = vmatpush.msra.mxu0 %v54
    %489 = vmatpush.msra.mxu0 %v50
    %490 = vmatpush.msra.mxu0 %v46
    %491 = vmatpush.msra.mxu0 %v42
    %492 = vmatmul.f32.gmra.mxu0 %v308
    %v493 = vpop.f32.mrf.mxu0
    %v494 = vadd.f32 %v300, %v493
    %495 = vdwg.mxu0
    %496 = vmatpush.msra.mxu0 %v166
    %497 = vmatpush.msra.mxu0 %v162
    %498 = vmatpush.msra.mxu0 %v158
    %499 = vmatpush.msra.mxu0 %v154
    %500 = vmatpush.msra.mxu0 %v150
    %501 = vmatpush.msra.mxu0 %v146
    %502 = vmatpush.msra.mxu0 %v142
    %503 = vmatpush.msra.mxu0 %v138
    %504 = vmatpush.msra.mxu0 %v134
    %505 = vmatpush.msra.mxu0 %v130
    %506 = vmatpush.msra.mxu0 %v126
    %507 = vmatpush.msra.mxu0 %v122
    %508 = vmatpush.msra.mxu0 %v118
    %509 = vmatpush.msra.mxu0 %v114
    %510 = vmatpush.msra.mxu0 %v110
    %511 = vmatpush.msra.mxu0 %v106
    %512 = vmatmul.f32.gmra.mxu0 %v309
    %v513 = vpop.f32.mrf.mxu0
    %v514 = vadd.f32 %v494, %v513
    %515 = vdwg.mxu0
    %516 = vmatpush.msra.mxu0 %v230
    %517 = vmatpush.msra.mxu0 %v226
    %518 = vmatpush.msra.mxu0 %v222
    %519 = vmatpush.msra.mxu0 %v218
    %520 = vmatpush.msra.mxu0 %v214
    %521 = vmatpush.msra.mxu0 %v210
    %522 = vmatpush.msra.mxu0 %v206
    %523 = vmatpush.msra.mxu0 %v202
    %524 = vmatpush.msra.mxu0 %v198
    %525 = vmatpush.msra.mxu0 %v194
    %526 = vmatpush.msra.mxu0 %v190
    %527 = vmatpush.msra.mxu0 %v186
    %528 = vmatpush.msra.mxu0 %v182
    %529 = vmatpush.msra.mxu0 %v178
    %530 = vmatpush.msra.mxu0 %v174
    %531 = vmatpush.msra.mxu0 %v170
    %532 = vmatmul.f32.gmra.mxu0 %v310
    %v533 = vpop.f32.mrf.mxu0
    %v534 = vadd.f32 %v514, %v533
    %535 = vdwg.mxu0
    %536 = vmatpush.msra.mxu0 %v294
    %537 = vmatpush.msra.mxu0 %v290
    %538 = vmatpush.msra.mxu0 %v286
    %539 = vmatpush.msra.mxu0 %v282
    %540 = vmatpush.msra.mxu0 %v278
    %541 = vmatpush.msra.mxu0 %v274
    %542 = vmatpush.msra.mxu0 %v270
    %543 = vmatpush.msra.mxu0 %v266
    %544 = vmatpush.msra.mxu0 %v262
    %545 = vmatpush.msra.mxu0 %v258
    %546 = vmatpush.msra.mxu0 %v254
    %547 = vmatpush.msra.mxu0 %v250
    %548 = vmatpush.msra.mxu0 %v246
    %549 = vmatpush.msra.mxu0 %v242
    %550 = vmatpush.msra.mxu0 %v238
    %551 = vmatpush.msra.mxu0 %v234
    %552 = vmatmul.f32.gmra.mxu0 %v311
    %v553 = vpop.f32.mrf.mxu0
    %v554 = vadd.f32 %v534, %v553
    %555 = vdwg.mxu0
    %556 = vmatpush.msra.mxu0 %v103
    %557 = vmatpush.msra.mxu0 %v99
    %558 = vmatpush.msra.mxu0 %v95
    %559 = vmatpush.msra.mxu0 %v91
    %560 = vmatpush.msra.mxu0 %v87
    %561 = vmatpush.msra.mxu0 %v83
    %562 = vmatpush.msra.mxu0 %v79
    %563 = vmatpush.msra.mxu0 %v75
    %564 = vmatpush.msra.mxu0 %v71
    %565 = vmatpush.msra.mxu0 %v67
    %566 = vmatpush.msra.mxu0 %v63
    %567 = vmatpush.msra.mxu0 %v59
    %568 = vmatpush.msra.mxu0 %v55
    %569 = vmatpush.msra.mxu0 %v51
    %570 = vmatpush.msra.mxu0 %v47
    %571 = vmatpush.msra.mxu0 %v43
    %572 = vmatmul.f32.gmra.mxu0 %v308
    %v573 = vpop.f32.mrf.mxu0
    %v574 = vadd.f32 %v301, %v573
    %575 = vdwg.mxu0
    %576 = vmatpush.msra.mxu0 %v167
    %577 = vmatpush.msra.mxu0 %v163
    %578 = vmatpush.msra.mxu0 %v159
    %579 = vmatpush.msra.mxu0 %v155
    %580 = vmatpush.msra.mxu0 %v151
    %581 = vmatpush.msra.mxu0 %v147
    %582 = vmatpush.msra.mxu0 %v143
    %583 = vmatpush.msra.mxu0 %v139
    %584 = vmatpush.msra.mxu0 %v135
    %585 = vmatpush.msra.mxu0 %v131
    %586 = vmatpush.msra.mxu0 %v127
    %587 = vmatpush.msra.mxu0 %v123
    %588 = vmatpush.msra.mxu0 %v119
    %589 = vmatpush.msra.mxu0 %v115
    %590 = vmatpush.msra.mxu0 %v111
    %591 = vmatpush.msra.mxu0 %v107
    %592 = vmatmul.f32.gmra.mxu0 %v309
    %v593 = vpop.f32.mrf.mxu0
    %v594 = vadd.f32 %v574, %v593
    %595 = vdwg.mxu0
    %596 = vmatpush.msra.mxu0 %v231
    %597 = vmatpush.msra.mxu0 %v227
    %598 = vmatpush.msra.mxu0 %v223
    %599 = vmatpush.msra.mxu0 %v219
    %600 = vmatpush.msra.mxu0 %v215
    %601 = vmatpush.msra.mxu0 %v211
    %602 = vmatpush.msra.mxu0 %v207
    %603 = vmatpush.msra.mxu0 %v203
    %604 = vmatpush.msra.mxu0 %v199
    %605 = vmatpush.msra.mxu0 %v195
    %606 = vmatpush.msra.mxu0 %v191
    %607 = vmatpush.msra.mxu0 %v187
    %608 = vmatpush.msra.mxu0 %v183
    %609 = vmatpush.msra.mxu0 %v179
    %610 = vmatpush.msra.mxu0 %v175
    %611 = vmatpush.msra.mxu0 %v171
    %612 = vmatmul.f32.gmra.mxu0 %v310
    %v613 = vpop.f32.mrf.mxu0
    %v614 = vadd.f32 %v594, %v613
    %615 = vdwg.mxu0
    %616 = vmatpush.msra.mxu0 %v295
    %617 = vmatpush.msra.mxu0 %v291
    %618 = vmatpush.msra.mxu0 %v287
    %619 = vmatpush.msra.mxu0 %v283
    %620 = vmatpush.msra.mxu0 %v279
    %621 = vmatpush.msra.mxu0 %v275
    %622 = vmatpush.msra.mxu0 %v271
    %623 = vmatpush.msra.mxu0 %v267
    %624 = vmatpush.msra.mxu0 %v263
    %625 = vmatpush.msra.mxu0 %v259
    %626 = vmatpush.msra.mxu0 %v255
    %627 = vmatpush.msra.mxu0 %v251
    %628 = vmatpush.msra.mxu0 %v247
    %629 = vmatpush.msra.mxu0 %v243
    %630 = vmatpush.msra.mxu0 %v239
    %631 = vmatpush.msra.mxu0 %v235
    %632 = vmatmul.f32.gmra.mxu0 %v311
    %v633 = vpop.f32.mrf.mxu0
    %v634 = vadd.f32 %v614, %v633
    %635 = vdwg.mxu0
    %v636 = vmax.f32 %v394, 0.0
    %v637 = vmax.f32 %v474, 0.0
    %v638 = vmax.f32 %v554, 0.0
    %v639 = vmax.f32 %v634, 0.0
    %v640 = vld [vmem:[%s3] sm:$0xff]
    %v641 = vld [vmem:[%s3 + $0x8] sm:$0xff]
    %v642 = vld [vmem:[%s3 + $0x10] sm:$0xff]
    %v643 = vld [vmem:[%s3 + $0x18] sm:$0xff]
    %v644 = vld [vmem:[%s3 + $0x20] sm:$0xff]
    %v645 = vld [vmem:[%s3 + $0x28] sm:$0xff]
    %v646 = vld [vmem:[%s3 + $0x30] sm:$0xff]
    %v647 = vld [vmem:[%s3 + $0x38] sm:$0xff]
    %v648 = vld [vmem:[%s3 + $0x40] sm:$0xff]
    %v649 = vld [vmem:[%s3 + $0x48] sm:$0xff]
    %v650 = vld [vmem:[%s3 + $0x50] sm:$0xff]
    %v651 = vld [vmem:[%s3 + $0x58] sm:$0xff]
    %v652 = vld [vmem:[%s3 + $0x60] sm:$0xff]
    %v653 = vld [vmem:[%s3 + $0x68] sm:$0xff]
    %v654 = vld [vmem:[%s3 + $0x70] sm:$0xff]
    %v655 = vld [vmem:[%s3 + $0x78] sm:$0xff]
    %v656 = vld [vmem:[%s3 + $0x80] sm:$0xff]
    %v657 = vld [vmem:[%s3 + $0x88] sm:$0xff]
    %v658 = vld [vmem:[%s3 + $0x90] sm:$0xff]
    %v659 = vld [vmem:[%s3 + $0x98] sm:$0xff]
    %v660 = vld [vmem:[%s3 + $0xa0] sm:$0xff]
    %v661 = vld [vmem:[%s3 + $0xa8] sm:$0xff]
    %v662 = vld [vmem:[%s3 + $0xb0] sm:$0xff]
    %v663 = vld [vmem:[%s3 + $0xb8] sm:$0xff]
    %v664 = vld [vmem:[%s3 + $0xc0] sm:$0xff]
    %v665 = vld [vmem:[%s3 + $0xc8] sm:$0xff]
    %v666 = vld [vmem:[%s3 + $0xd0] sm:$0xff]
    %v667 = vld [vmem:[%s3 + $0xd8] sm:$0xff]
    %v668 = vld [vmem:[%s3 + $0xe0] sm:$0xff]
    %v669 = vld [vmem:[%s3 + $0xe8] sm:$0xff]
    %v670 = vld [vmem:[%s3 + $0xf0] sm:$0xff]
    %v671 = vld [vmem:[%s3 + $0xf8] sm:$0xff]
    %v672 = vld [vmem:[%s3 + $0x100] sm:$0xff]
    %v673 = vld [vmem:[%s3 + $0x108] sm:$0xff]
    %v674 = vld [vmem:[%s3 + $0x110] sm:$0xff]
    %v675 = vld [vmem:[%s3 + $0x118] sm:$0xff]
    %v676 = vld [vmem:[%s3 + $0x120] sm:$0xff]
    %v677 = vld [vmem:[%s3 + $0x128] sm:$0xff]
    %v678 = vld [vmem:[%s3 + $0x130] sm:$0xff]
    %v679 = vld [vmem:[%s3 + $0x138] sm:$0xff]
    %v680 = vld [vmem:[%s3 + $0x140] sm:$0xff]
    %v681 = vld [vmem:[%s3 + $0x148] sm:$0xff]
    %v682 = vld [vmem:[%s3 + $0x150] sm:$0xff]
    %v683 = vld [vmem:[%s3 + $0x158] sm:$0xff]
    %v684 = vld [vmem:[%s3 + $0x160] sm:$0xff]
    %v685 = vld [vmem:[%s3 + $0x168] sm:$0xff]
    %v686 = vld [vmem:[%s3 + $0x170] sm:$0xff]
    %v687 = vld [vmem:[%s3 + $0x178] sm:$0xff]
    %v688 = vld [vmem:[%s3 + $0x180] sm:$0xff]
    %v689 = vld [vmem:[%s3 + $0x188] sm:$0xff]
    %v690 = vld [vmem:[%s3 + $0x190] sm:$0xff]
    %v691 = vld [vmem:[%s3 + $0x198] sm:$0xff]
    %v692 = vld [vmem:[%s3 + $0x1a0] sm:$0xff]
    %v693 = vld [vmem:[%s3 + $0x1a8] sm:$0xff]
    %v694 = vld [vmem:[%s3 + $0x1b0] sm:$0xff]
    %v695 = vld [vmem:[%s3 + $0x1b8] sm:$0xff]
    %v696 = vld [vmem:[%s3 + $0x1c0] sm:$0xff]
    %v697 = vld [vmem:[%s3 + $0x1c8] sm:$0xff]
    %v698 = vld [vmem:[%s3 + $0x1d0] sm:$0xff]
    %v699 = vld [vmem:[%s3 + $0x1d8] sm:$0xff]
    %v700 = vld [vmem:[%s3 + $0x1e0] sm:$0xff]
    %v701 = vld [vmem:[%s3 + $0x1e8] sm:$0xff]
    %v702 = vld [vmem:[%s3 + $0x1f0] sm:$0xff]
    %v703 = vld [vmem:[%s3 + $0x1f8] sm:$0xff]
    %v704 = vld [vmem:[%s3 + $0x200] sm:$0xff]
    %v705 = vld [vmem:[%s3 + $0x208] sm:$0xff]
    %v706 = vld [vmem:[%s3 + $0x210] sm:$0xff]
    %v707 = vld [vmem:[%s3 + $0x218] sm:$0xff]
    %v708 = vld [vmem:[%s3 + $0x220] sm:$0xff]
    %v709 = vld [vmem:[%s3 + $0x228] sm:$0xff]
    %v710 = vld [vmem:[%s3 + $0x230] sm:$0xff]
    %v711 = vld [vmem:[%s3 + $0x238] sm:$0xff]
    %v712 = vld [vmem:[%s3 + $0x240] sm:$0xff]
    %v713 = vld [vmem:[%s3 + $0x248] sm:$0xff]
    %v714 = vld [vmem:[%s3 + $0x250] sm:$0xff]
    %v715 = vld [vmem:[%s3 + $0x258] sm:$0xff]
    %v716 = vld [vmem:[%s3 + $0x260] sm:$0xff]
    %v717 = vld [vmem:[%s3 + $0x268] sm:$0xff]
    %v718 = vld [vmem:[%s3 + $0x270] sm:$0xff]
    %v719 = vld [vmem:[%s3 + $0x278] sm:$0xff]
    %v720 = vld [vmem:[%s3 + $0x280] sm:$0xff]
    %v721 = vld [vmem:[%s3 + $0x288] sm:$0xff]
    %v722 = vld [vmem:[%s3 + $0x290] sm:$0xff]
    %v723 = vld [vmem:[%s3 + $0x298] sm:$0xff]
    %v724 = vld [vmem:[%s3 + $0x2a0] sm:$0xff]
    %v725 = vld [vmem:[%s3 + $0x2a8] sm:$0xff]
    %v726 = vld [vmem:[%s3 + $0x2b0] sm:$0xff]
    %v727 = vld [vmem:[%s3 + $0x2b8] sm:$0xff]
    %v728 = vld [vmem:[%s3 + $0x2c0] sm:$0xff]
    %v729 = vld [vmem:[%s3 + $0x2c8] sm:$0xff]
    %v730 = vld [vmem:[%s3 + $0x2d0] sm:$0xff]
    %v731 = vld [vmem:[%s3 + $0x2d8] sm:$0xff]
    %v732 = vld [vmem:[%s3 + $0x2e0] sm:$0xff]
    %v733 = vld [vmem:[%s3 + $0x2e8] sm:$0xff]
    %v734 = vld [vmem:[%s3 + $0x2f0] sm:$0xff]
    %v735 = vld [vmem:[%s3 + $0x2f8] sm:$0xff]
    %v736 = vld [vmem:[%s3 + $0x300] sm:$0xff]
    %v737 = vld [vmem:[%s3 + $0x308] sm:$0xff]
    %v738 = vld [vmem:[%s3 + $0x310] sm:$0xff]
    %v739 = vld [vmem:[%s3 + $0x318] sm:$0xff]
    %v740 = vld [vmem:[%s3 + $0x320] sm:$0xff]
    %v741 = vld [vmem:[%s3 + $0x328] sm:$0xff]
    %v742 = vld [vmem:[%s3 + $0x330] sm:$0xff]
    %v743 = vld [vmem:[%s3 + $0x338] sm:$0xff]
    %v744 = vld [vmem:[%s3 + $0x340] sm:$0xff]
    %v745 = vld [vmem:[%s3 + $0x348] sm:$0xff]
    %v746 = vld [vmem:[%s3 + $0x350] sm:$0xff]
    %v747 = vld [vmem:[%s3 + $0x358] sm:$0xff]
    %v748 = vld [vmem:[%s3 + $0x360] sm:$0xff]
    %v749 = vld [vmem:[%s3 + $0x368] sm:$0xff]
    %v750 = vld [vmem:[%s3 + $0x370] sm:$0xff]
    %v751 = vld [vmem:[%s3 + $0x378] sm:$0xff]
    %v752 = vld [vmem:[%s3 + $0x380] sm:$0xff]
    %v753 = vld [vmem:[%s3 + $0x388] sm:$0xff]
    %v754 = vld [vmem:[%s3 + $0x390] sm:$0xff]
    %v755 = vld [vmem:[%s3 + $0x398] sm:$0xff]
    %v756 = vld [vmem:[%s3 + $0x3a0] sm:$0xff]
    %v757 = vld [vmem:[%s3 + $0x3a8] sm:$0xff]
    %v758 = vld [vmem:[%s3 + $0x3b0] sm:$0xff]
    %v759 = vld [vmem:[%s3 + $0x3b8] sm:$0xff]
    %v760 = vld [vmem:[%s3 + $0x3c0] sm:$0xff]
    %v761 = vld [vmem:[%s3 + $0x3c8] sm:$0xff]
    %v762 = vld [vmem:[%s3 + $0x3d0] sm:$0xff]
    %v763 = vld [vmem:[%s3 + $0x3d8] sm:$0xff]
    %v764 = vld [vmem:[%s3 + $0x3e0] sm:$0xff]
    %v765 = vld [vmem:[%s3 + $0x3e8] sm:$0xff]
    %v766 = vld [vmem:[%s3 + $0x3f0] sm:$0xff]
    %v767 = vld [vmem:[%s3 + $0x3f8] sm:$0xff]
    %v768 = vld [vmem:[%s3 + $0x400] sm:$0xff]
    %v769 = vld [vmem:[%s3 + $0x408] sm:$0xff]
    %v770 = vld [vmem:[%s3 + $0x410] sm:$0xff]
    %v771 = vld [vmem:[%s3 + $0x418] sm:$0xff]
    %v772 = vld [vmem:[%s3 + $0x420] sm:$0xff]
    %v773 = vld [vmem:[%s3 + $0x428] sm:$0xff]
    %v774 = vld [vmem:[%s3 + $0x430] sm:$0xff]
    %v775 = vld [vmem:[%s3 + $0x438] sm:$0xff]
    %v776 = vld [vmem:[%s3 + $0x440] sm:$0xff]
    %v777 = vld [vmem:[%s3 + $0x448] sm:$0xff]
    %v778 = vld [vmem:[%s3 + $0x450] sm:$0xff]
    %v779 = vld [vmem:[%s3 + $0x458] sm:$0xff]
    %v780 = vld [vmem:[%s3 + $0x460] sm:$0xff]
    %v781 = vld [vmem:[%s3 + $0x468] sm:$0xff]
    %v782 = vld [vmem:[%s3 + $0x470] sm:$0xff]
    %v783 = vld [vmem:[%s3 + $0x478] sm:$0xff]
    %v784 = vld [vmem:[%s3 + $0x480] sm:$0xff]
    %v785 = vld [vmem:[%s3 + $0x488] sm:$0xff]
    %v786 = vld [vmem:[%s3 + $0x490] sm:$0xff]
    %v787 = vld [vmem:[%s3 + $0x498] sm:$0xff]
    %v788 = vld [vmem:[%s3 + $0x4a0] sm:$0xff]
    %v789 = vld [vmem:[%s3 + $0x4a8] sm:$0xff]
    %v790 = vld [vmem:[%s3 + $0x4b0] sm:$0xff]
    %v791 = vld [vmem:[%s3 + $0x4b8] sm:$0xff]
    %v792 = vld [vmem:[%s3 + $0x4c0] sm:$0xff]
    %v793 = vld [vmem:[%s3 + $0x4c8] sm:$0xff]
    %v794 = vld [vmem:[%s3 + $0x4d0] sm:$0xff]
    %v795 = vld [vmem:[%s3 + $0x4d8] sm:$0xff]
    %v796 = vld [vmem:[%s3 + $0x4e0] sm:$0xff]
    %v797 = vld [vmem:[%s3 + $0x4e8] sm:$0xff]
    %v798 = vld [vmem:[%s3 + $0x4f0] sm:$0xff]
    %v799 = vld [vmem:[%s3 + $0x4f8] sm:$0xff]
    %v800 = vld [vmem:[%s3 + $0x500] sm:$0xff]
    %v801 = vld [vmem:[%s3 + $0x508] sm:$0xff]
    %v802 = vld [vmem:[%s3 + $0x510] sm:$0xff]
    %v803 = vld [vmem:[%s3 + $0x518] sm:$0xff]
    %v804 = vld [vmem:[%s3 + $0x520] sm:$0xff]
    %v805 = vld [vmem:[%s3 + $0x528] sm:$0xff]
    %v806 = vld [vmem:[%s3 + $0x530] sm:$0xff]
    %v807 = vld [vmem:[%s3 + $0x538] sm:$0xff]
    %v808 = vld [vmem:[%s3 + $0x540] sm:$0xff]
    %v809 = vld [vmem:[%s3 + $0x548] sm:$0xff]
    %v810 = vld [vmem:[%s3 + $0x550] sm:$0xff]
    %v811 = vld [vmem:[%s3 + $0x558] sm:$0xff]
    %v812 = vld [vmem:[%s3 + $0x560] sm:$0xff]
    %v813 = vld [vmem:[%s3 + $0x568] sm:$0xff]
    %v814 = vld [vmem:[%s3 + $0x570] sm:$0xff]
    %v815 = vld [vmem:[%s3 + $0x578] sm:$0xff]
    %v816 = vld [vmem:[%s3 + $0x580] sm:$0xff]
    %v817 = vld [vmem:[%s3 + $0x588] sm:$0xff]
    %v818 = vld [vmem:[%s3 + $0x590] sm:$0xff]
    %v819 = vld [vmem:[%s3 + $0x598] sm:$0xff]
    %v820 = vld [vmem:[%s3 + $0x5a0] sm:$0xff]
    %v821 = vld [vmem:[%s3 + $0x5a8] sm:$0xff]
    %v822 = vld [vmem:[%s3 + $0x5b0] sm:$0xff]
    %v823 = vld [vmem:[%s3 + $0x5b8] sm:$0xff]
    %v824 = vld [vmem:[%s3 + $0x5c0] sm:$0xff]
    %v825 = vld [vmem:[%s3 + $0x5c8] sm:$0xff]
    %v826 = vld [vmem:[%s3 + $0x5d0] sm:$0xff]
    %v827 = vld [vmem:[%s3 + $0x5d8] sm:$0xff]
    %v828 = vld [vmem:[%s3 + $0x5e0] sm:$0xff]
    %v829 = vld [vmem:[%s3 + $0x5e8] sm:$0xff]
    %v830 = vld [vmem:[%s3 + $0x5f0] sm:$0xff]
    %v831 = vld [vmem:[%s3 + $0x5f8] sm:$0xff]
    %v832 = vld [vmem:[%s3 + $0x600] sm:$0xff]
    %v833 = vld [vmem:[%s3 + $0x608] sm:$0xff]
    %v834 = vld [vmem:[%s3 + $0x610] sm:$0xff]
    %v835 = vld [vmem:[%s3 + $0x618] sm:$0xff]
    %v836 = vld [vmem:[%s3 + $0x620] sm:$0xff]
    %v837 = vld [vmem:[%s3 + $0x628] sm:$0xff]
    %v838 = vld [vmem:[%s3 + $0x630] sm:$0xff]
    %v839 = vld [vmem:[%s3 + $0x638] sm:$0xff]
    %v840 = vld [vmem:[%s3 + $0x640] sm:$0xff]
    %v841 = vld [vmem:[%s3 + $0x648] sm:$0xff]
    %v842 = vld [vmem:[%s3 + $0x650] sm:$0xff]
    %v843 = vld [vmem:[%s3 + $0x658] sm:$0xff]
    %v844 = vld [vmem:[%s3 + $0x660] sm:$0xff]
    %v845 = vld [vmem:[%s3 + $0x668] sm:$0xff]
    %v846 = vld [vmem:[%s3 + $0x670] sm:$0xff]
    %v847 = vld [vmem:[%s3 + $0x678] sm:$0xff]
    %v848 = vld [vmem:[%s3 + $0x680] sm:$0xff]
    %v849 = vld [vmem:[%s3 + $0x688] sm:$0xff]
    %v850 = vld [vmem:[%s3 + $0x690] sm:$0xff]
    %v851 = vld [vmem:[%s3 + $0x698] sm:$0xff]
    %v852 = vld [vmem:[%s3 + $0x6a0] sm:$0xff]
    %v853 = vld [vmem:[%s3 + $0x6a8] sm:$0xff]
    %v854 = vld [vmem:[%s3 + $0x6b0] sm:$0xff]
    %v855 = vld [vmem:[%s3 + $0x6b8] sm:$0xff]
    %v856 = vld [vmem:[%s3 + $0x6c0] sm:$0xff]
    %v857 = vld [vmem:[%s3 + $0x6c8] sm:$0xff]
    %v858 = vld [vmem:[%s3 + $0x6d0] sm:$0xff]
    %v859 = vld [vmem:[%s3 + $0x6d8] sm:$0xff]
    %v860 = vld [vmem:[%s3 + $0x6e0] sm:$0xff]
    %v861 = vld [vmem:[%s3 + $0x6e8] sm:$0xff]
    %v862 = vld [vmem:[%s3 + $0x6f0] sm:$0xff]
    %v863 = vld [vmem:[%s3 + $0x6f8] sm:$0xff]
    %v864 = vld [vmem:[%s3 + $0x700] sm:$0xff]
    %v865 = vld [vmem:[%s3 + $0x708] sm:$0xff]
    %v866 = vld [vmem:[%s3 + $0x710] sm:$0xff]
    %v867 = vld [vmem:[%s3 + $0x718] sm:$0xff]
    %v868 = vld [vmem:[%s3 + $0x720] sm:$0xff]
    %v869 = vld [vmem:[%s3 + $0x728] sm:$0xff]
    %v870 = vld [vmem:[%s3 + $0x730] sm:$0xff]
    %v871 = vld [vmem:[%s3 + $0x738] sm:$0xff]
    %v872 = vld [vmem:[%s3 + $0x740] sm:$0xff]
    %v873 = vld [vmem:[%s3 + $0x748] sm:$0xff]
    %v874 = vld [vmem:[%s3 + $0x750] sm:$0xff]
    %v875 = vld [vmem:[%s3 + $0x758] sm:$0xff]
    %v876 = vld [vmem:[%s3 + $0x760] sm:$0xff]
    %v877 = vld [vmem:[%s3 + $0x768] sm:$0xff]
    %v878 = vld [vmem:[%s3 + $0x770] sm:$0xff]
    %v879 = vld [vmem:[%s3 + $0x778] sm:$0xff]
    %v880 = vld [vmem:[%s3 + $0x780] sm:$0xff]
    %v881 = vld [vmem:[%s3 + $0x788] sm:$0xff]
    %v882 = vld [vmem:[%s3 + $0x790] sm:$0xff]
    %v883 = vld [vmem:[%s3 + $0x798] sm:$0xff]
    %v884 = vld [vmem:[%s3 + $0x7a0] sm:$0xff]
    %v885 = vld [vmem:[%s3 + $0x7a8] sm:$0xff]
    %v886 = vld [vmem:[%s3 + $0x7b0] sm:$0xff]
    %v887 = vld [vmem:[%s3 + $0x7b8] sm:$0xff]
    %v888 = vld [vmem:[%s3 + $0x7c0] sm:$0xff]
    %v889 = vld [vmem:[%s3 + $0x7c8] sm:$0xff]
    %v890 = vld [vmem:[%s3 + $0x7d0] sm:$0xff]
    %v891 = vld [vmem:[%s3 + $0x7d8] sm:$0xff]
    %v892 = vld [vmem:[%s3 + $0x7e0] sm:$0xff]
    %v893 = vld [vmem:[%s3 + $0x7e8] sm:$0xff]
    %v894 = vld [vmem:[%s3 + $0x7f0] sm:$0xff]
    %v895 = vld [vmem:[%s3 + $0x7f8] sm:$0xff]
    %v896 = vld [vmem:[%s4] sm:$0xf]
    %v898 = vperm.slane %v896, 0
    %v899 = vperm.slane %v896, 1
    %v900 = vperm.slane %v896, 2
    %v901 = vperm.slane %v896, 3
    %906 = vmatpush.msra.mxu0 %v700
    %907 = vmatpush.msra.mxu0 %v696
    %908 = vmatpush.msra.mxu0 %v692
    %909 = vmatpush.msra.mxu0 %v688
    %910 = vmatpush.msra.mxu0 %v684
    %911 = vmatpush.msra.mxu0 %v680
    %912 = vmatpush.msra.mxu0 %v676
    %913 = vmatpush.msra.mxu0 %v672
    %914 = vmatpush.msra.mxu0 %v668
    %915 = vmatpush.msra.mxu0 %v664
    %916 = vmatpush.msra.mxu0 %v660
    %917 = vmatpush.msra.mxu0 %v656
    %918 = vmatpush.msra.mxu0 %v652
    %919 = vmatpush.msra.mxu0 %v648
    %920 = vmatpush.msra.mxu0 %v644
    %921 = vmatpush.msra.mxu0 %v640
    %922 = vmatmul.f32.gmra.mxu0 %v636
    %v923 = vpop.f32.mrf.mxu0
    %v924 = vadd.f32 %v898, %v923
    %925 = vdwg.mxu0
    %926 = vmatpush.msra.mxu0 %v764
    %927 = vmatpush.msra.mxu0 %v760
    %928 = vmatpush.msra.mxu0 %v756
    %929 = vmatpush.msra.mxu0 %v752
    %930 = vmatpush.msra.mxu0 %v748
    %931 = vmatpush.msra.mxu0 %v744
    %932 = vmatpush.msra.mxu0 %v740
    %933 = vmatpush.msra.mxu0 %v736
    %934 = vmatpush.msra.mxu0 %v732
    %935 = vmatpush.msra.mxu0 %v728
    %936 = vmatpush.msra.mxu0 %v724
    %937 = vmatpush.msra.mxu0 %v720
    %938 = vmatpush.msra.mxu0 %v716
    %939 = vmatpush.msra.mxu0 %v712
    %940 = vmatpush.msra.mxu0 %v708
    %941 = vmatpush.msra.mxu0 %v704
    %942 = vmatmul.f32.gmra.mxu0 %v637
    %v943 = vpop.f32.mrf.mxu0
    %v944 = vadd.f32 %v924, %v943
    %945 = vdwg.mxu0
    %946 = vmatpush.msra.mxu0 %v828
    %947 = vmatpush.msra.mxu0 %v824
    %948 = vmatpush.msra.mxu0 %v820
    %949 = vmatpush.msra.mxu0 %v816
    %950 = vmatpush.msra.mxu0 %v812
    %951 = vmatpush.msra.mxu0 %v808
    %952 = vmatpush.msra.mxu0 %v804
    %953 = vmatpush.msra.mxu0 %v800
    %954 = vmatpush.msra.mxu0 %v796
    %955 = vmatpush.msra.mxu0 %v792
    %956 = vmatpush.msra.mxu0 %v788
    %957 = vmatpush.msra.mxu0 %v784
    %958 = vmatpush.msra.mxu0 %v780
    %959 = vmatpush.msra.mxu0 %v776
    %960 = vmatpush.msra.mxu0 %v772
    %961 = vmatpush.msra.mxu0 %v768
    %962 = vmatmul.f32.gmra.mxu0 %v638
    %v963 = vpop.f32.mrf.mxu0
    %v964 = vadd.f32 %v944, %v963
    %965 = vdwg.mxu0
    %966 = vmatpush.msra.mxu0 %v892
    %967 = vmatpush.msra.mxu0 %v888
    %968 = vmatpush.msra.mxu0 %v884
    %969 = vmatpush.msra.mxu0 %v880
    %970 = vmatpush.msra.mxu0 %v876
    %971 = vmatpush.msra.mxu0 %v872
    %972 = vmatpush.msra.mxu0 %v868
    %973 = vmatpush.msra.mxu0 %v864
    %974 = vmatpush.msra.mxu0 %v860
    %975 = vmatpush.msra.mxu0 %v856
    %976 = vmatpush.msra.mxu0 %v852
    %977 = vmatpush.msra.mxu0 %v848
    %978 = vmatpush.msra.mxu0 %v844
    %979 = vmatpush.msra.mxu0 %v840
    %980 = vmatpush.msra.mxu0 %v836
    %981 = vmatpush.msra.mxu0 %v832
    %982 = vmatmul.f32.gmra.mxu0 %v639
    %v983 = vpop.f32.mrf.mxu0
    %v984 = vadd.f32 %v964, %v983
    %985 = vdwg.mxu0
    %986 = vmatpush.msra.mxu0 %v701
    %987 = vmatpush.msra.mxu0 %v697
    %988 = vmatpush.msra.mxu0 %v693
    %989 = vmatpush.msra.mxu0 %v689
    %990 = vmatpush.msra.mxu0 %v685
    %991 = vmatpush.msra.mxu0 %v681
    %992 = vmatpush.msra.mxu0 %v677
    %993 = vmatpush.msra.mxu0 %v673
    %994 = vmatpush.msra.mxu0 %v669
    %995 = vmatpush.msra.mxu0 %v665
    %996 = vmatpush.msra.mxu0 %v661
    %997 = vmatpush.msra.mxu0 %v657
    %998 = vmatpush.msra.mxu0 %v653
    %999 = vmatpush.msra.mxu0 %v649
    %1000 = vmatpush.msra.mxu0 %v645
    %1001 = vmatpush.msra.mxu0 %v641
    %1002 = vmatmul.f32.gmra.mxu0 %v636
    %v1003 = vpop.f32.mrf.mxu0
    %v1004 = vadd.f32 %v899, %v1003
    %1005 = vdwg.mxu0
    %1006 = vmatpush.msra.mxu0 %v765
    %1007 = vmatpush.msra.mxu0 %v761
    %1008 = vmatpush.msra.mxu0 %v757
    %1009 = vmatpush.msra.mxu0 %v753
    %1010 = vmatpush.msra.mxu0 %v749
    %1011 = vmatpush.msra.mxu0 %v745
    %1012 = vmatpush.msra.mxu0 %v741
    %1013 = vmatpush.msra.mxu0 %v737
    %1014 = vmatpush.msra.mxu0 %v733
    %1015 = vmatpush.msra.mxu0 %v729
    %1016 = vmatpush.msra.mxu0 %v725
    %1017 = vmatpush.msra.mxu0 %v721
    %1018 = vmatpush.msra.mxu0 %v717
    %1019 = vmatpush.msra.mxu0 %v713
    %1020 = vmatpush.msra.mxu0 %v709
    %1021 = vmatpush.msra.mxu0 %v705
    %1022 = vmatmul.f32.gmra.mxu0 %v637
    %v1023 = vpop.f32.mrf.mxu0
    %v1024 = vadd.f32 %v1004, %v1023
    %1025 = vdwg.mxu0
    %1026 = vmatpush.msra.mxu0 %v829
    %1027 = vmatpush.msra.mxu0 %v825
    %1028 = vmatpush.msra.mxu0 %v821
    %1029 = vmatpush.msra.mxu0 %v817
    %1030 = vmatpush.msra.mxu0 %v813
    %1031 = vmatpush.msra.mxu0 %v809
    %1032 = vmatpush.msra.mxu0 %v805
    %1033 = vmatpush.msra.mxu0 %v801
    %1034 = vmatpush.msra.mxu0 %v797
    %1035 = vmatpush.msra.mxu0 %v793
    %1036 = vmatpush.msra.mxu0 %v789
    %1037 = vmatpush.msra.mxu0 %v785
    %1038 = vmatpush.msra.mxu0 %v781
    %1039 = vmatpush.msra.mxu0 %v777
    %1040 = vmatpush.msra.mxu0 %v773
    %1041 = vmatpush.msra.mxu0 %v769
    %1042 = vmatmul.f32.gmra.mxu0 %v638
    %v1043 = vpop.f32.mrf.mxu0
    %v1044 = vadd.f32 %v1024, %v1043
    %1045 = vdwg.mxu0
    %1046 = vmatpush.msra.mxu0 %v893
    %1047 = vmatpush.msra.mxu0 %v889
    %1048 = vmatpush.msra.mxu0 %v885
    %1049 = vmatpush.msra.mxu0 %v881
    %1050 = vmatpush.msra.mxu0 %v877
    %1051 = vmatpush.msra.mxu0 %v873
    %1052 = vmatpush.msra.mxu0 %v869
    %1053 = vmatpush.msra.mxu0 %v865
    %1054 = vmatpush.msra.mxu0 %v861
    %1055 = vmatpush.msra.mxu0 %v857
    %1056 = vmatpush.msra.mxu0 %v853
    %1057 = vmatpush.msra.mxu0 %v849
    %1058 = vmatpush.msra.mxu0 %v845
    %1059 = vmatpush.msra.mxu0 %v841
    %1060 = vmatpush.msra.mxu0 %v837
    %1061 = vmatpush.msra.mxu0 %v833
    %1062 = vmatmul.f32.gmra.mxu0 %v639
    %v1063 = vpop.f32.mrf.mxu0
    %v1064 = vadd.f32 %v1044, %v1063
    %1065 = vdwg.mxu0
    %1066 = vmatpush.msra.mxu0 %v702
    %1067 = vmatpush.msra.mxu0 %v698
    %1068 = vmatpush.msra.mxu0 %v694
    %1069 = vmatpush.msra.mxu0 %v690
    %1070 = vmatpush.msra.mxu0 %v686
    %1071 = vmatpush.msra.mxu0 %v682
    %1072 = vmatpush.msra.mxu0 %v678
    %1073 = vmatpush.msra.mxu0 %v674
    %1074 = vmatpush.msra.mxu0 %v670
    %1075 = vmatpush.msra.mxu0 %v666
    %1076 = vmatpush.msra.mxu0 %v662
    %1077 = vmatpush.msra.mxu0 %v658
    %1078 = vmatpush.msra.mxu0 %v654
    %1079 = vmatpush.msra.mxu0 %v650
    %1080 = vmatpush.msra.mxu0 %v646
    %1081 = vmatpush.msra.mxu0 %v642
    %1082 = vmatmul.f32.gmra.mxu0 %v636
    %v1083 = vpop.f32.mrf.mxu0
    %v1084 = vadd.f32 %v900, %v1083
    %1085 = vdwg.mxu0
    %1086 = vmatpush.msra.mxu0 %v766
    %1087 = vmatpush.msra.mxu0 %v762
    %1088 = vmatpush.msra.mxu0 %v758
    %1089 = vmatpush.msra.mxu0 %v754
    %1090 = vmatpush.msra.mxu0 %v750
    %1091 = vmatpush.msra.mxu0 %v746
    %1092 = vmatpush.msra.mxu0 %v742
    %1093 = vmatpush.msra.mxu0 %v738
    %1094 = vmatpush.msra.mxu0 %v734
    %1095 = vmatpush.msra.mxu0 %v730
    %1096 = vmatpush.msra.mxu0 %v726
    %1097 = vmatpush.msra.mxu0 %v722
    %1098 = vmatpush.msra.mxu0 %v718
    %1099 = vmatpush.msra.mxu0 %v714
    %1100 = vmatpush.msra.mxu0 %v710
    %1101 = vmatpush.msra.mxu0 %v706
    %1102 = vmatmul.f32.gmra.mxu0 %v637
    %v1103 = vpop.f32.mrf.mxu0
    %v1104 = vadd.f32 %v1084, %v1103
    %1105 = vdwg.mxu0
    %1106 = vmatpush.msra.mxu0 %v830
    %1107 = vmatpush.msra.mxu0 %v826
    %1108 = vmatpush.msra.mxu0 %v822
    %1109 = vmatpush.msra.mxu0 %v818
    %1110 = vmatpush.msra.mxu0 %v814
    %1111 = vmatpush.msra.mxu0 %v810
    %1112 = vmatpush.msra.mxu0 %v806
    %1113 = vmatpush.msra.mxu0 %v802
    %1114 = vmatpush.msra.mxu0 %v798
    %1115 = vmatpush.msra.mxu0 %v794
    %1116 = vmatpush.msra.mxu0 %v790
    %1117 = vmatpush.msra.mxu0 %v786
    %1118 = vmatpush.msra.mxu0 %v782
    %1119 = vmatpush.msra.mxu0 %v778
    %1120 = vmatpush.msra.mxu0 %v774
    %1121 = vmatpush.msra.mxu0 %v770
    %1122 = vmatmul.f32.gmra.mxu0 %v638
    %v1123 = vpop.f32.mrf.mxu0
    %v1124 = vadd.f32 %v1104, %v1123
    %1125 = vdwg.mxu0
    %1126 = vmatpush.msra.mxu0 %v894
    %1127 = vmatpush.msra.mxu0 %v890
    %1128 = vmatpush.msra.mxu0 %v886
    %1129 = vmatpush.msra.mxu0 %v882
    %1130 = vmatpush.msra.mxu0 %v878
    %1131 = vmatpush.msra.mxu0 %v874
    %1132 = vmatpush.msra.mxu0 %v870
    %1133 = vmatpush.msra.mxu0 %v866
    %1134 = vmatpush.msra.mxu0 %v862
    %1135 = vmatpush.msra.mxu0 %v858
    %1136 = vmatpush.msra.mxu0 %v854
    %1137 = vmatpush.msra.mxu0 %v850
    %1138 = vmatpush.msra.mxu0 %v846
    %1139 = vmatpush.msra.mxu0 %v842
    %1140 = vmatpush.msra.mxu0 %v838
    %1141 = vmatpush.msra.mxu0 %v834
    %1142 = vmatmul.f32.gmra.mxu0 %v639
    %v1143 = vpop.f32.mrf.mxu0
    %v1144 = vadd.f32 %v1124, %v1143
    %1145 = vdwg.mxu0
    %1146 = vmatpush.msra.mxu0 %v703
    %1147 = vmatpush.msra.mxu0 %v699
    %1148 = vmatpush.msra.mxu0 %v695
    %1149 = vmatpush.msra.mxu0 %v691
    %1150 = vmatpush.msra.mxu0 %v687
    %1151 = vmatpush.msra.mxu0 %v683
    %1152 = vmatpush.msra.mxu0 %v679
    %1153 = vmatpush.msra.mxu0 %v675
    %1154 = vmatpush.msra.mxu0 %v671
    %1155 = vmatpush.msra.mxu0 %v667
    %1156 = vmatpush.msra.mxu0 %v663
    %1157 = vmatpush.msra.mxu0 %v659
    %1158 = vmatpush.msra.mxu0 %v655
    %1159 = vmatpush.msra.mxu0 %v651
    %1160 = vmatpush.msra.mxu0 %v647
    %1161 = vmatpush.msra.mxu0 %v643
    %1162 = vmatmul.f32.gmra.mxu0 %v636
    %v1163 = vpop.f32.mrf.mxu0
    %v1164 = vadd.f32 %v901, %v1163
    %1165 = vdwg.mxu0
    %1166 = vmatpush.msra.mxu0 %v767
    %1167 = vmatpush.msra.mxu0 %v763
    %1168 = vmatpush.msra.mxu0 %v759
    %1169 = vmatpush.msra.mxu0 %v755
    %1170 = vmatpush.msra.mxu0 %v751
    %1171 = vmatpush.msra.mxu0 %v747
    %1172 = vmatpush.msra.mxu0 %v743
    %1173 = vmatpush.msra.mxu0 %v739
    %1174 = vmatpush.msra.mxu0 %v735
    %1175 = vmatpush.msra.mxu0 %v731
    %1176 = vmatpush.msra.mxu0 %v727
    %1177 = vmatpush.msra.mxu0 %v723
    %1178 = vmatpush.msra.mxu0 %v719
    %1179 = vmatpush.msra.mxu0 %v715
    %1180 = vmatpush.msra.mxu0 %v711
    %1181 = vmatpush.msra.mxu0 %v707
    %1182 = vmatmul.f32.gmra.mxu0 %v637
    %v1183 = vpop.f32.mrf.mxu0
    %v1184 = vadd.f32 %v1164, %v1183
    %1185 = vdwg.mxu0
    %1186 = vmatpush.msra.mxu0 %v831
    %1187 = vmatpush.msra.mxu0 %v827
    %1188 = vmatpush.msra.mxu0 %v823
    %1189 = vmatpush.msra.mxu0 %v819
    %1190 = vmatpush.msra.mxu0 %v815
    %1191 = vmatpush.msra.mxu0 %v811
    %1192 = vmatpush.msra.mxu0 %v807
    %1193 = vmatpush.msra.mxu0 %v803
    %1194 = vmatpush.msra.mxu0 %v799
    %1195 = vmatpush.msra.mxu0 %v795
    %1196 = vmatpush.msra.mxu0 %v791
    %1197 = vmatpush.msra.mxu0 %v787
    %1198 = vmatpush.msra.mxu0 %v783
    %1199 = vmatpush.msra.mxu0 %v779
    %1200 = vmatpush.msra.mxu0 %v775
    %1201 = vmatpush.msra.mxu0 %v771
    %1202 = vmatmul.f32.gmra.mxu0 %v638
    %v1203 = vpop.f32.mrf.mxu0
    %v1204 = vadd.f32 %v1184, %v1203
    %1205 = vdwg.mxu0
    %1206 = vmatpush.msra.mxu0 %v895
    %1207 = vmatpush.msra.mxu0 %v891
    %1208 = vmatpush.msra.mxu0 %v887
    %1209 = vmatpush.msra.mxu0 %v883
    %1210 = vmatpush.msra.mxu0 %v879
    %1211 = vmatpush.msra.mxu0 %v875
    %1212 = vmatpush.msra.mxu0 %v871
    %1213 = vmatpush.msra.mxu0 %v867
    %1214 = vmatpush.msra.mxu0 %v863
    %1215 = vmatpush.msra.mxu0 %v859
    %1216 = vmatpush.msra.mxu0 %v855
    %1217 = vmatpush.msra.mxu0 %v851
    %1218 = vmatpush.msra.mxu0 %v847
    %1219 = vmatpush.msra.mxu0 %v843
    %1220 = vmatpush.msra.mxu0 %v839
    %1221 = vmatpush.msra.mxu0 %v835
    %1222 = vmatmul.f32.gmra.mxu0 %v639
    %v1223 = vpop.f32.mrf.mxu0
    %v1224 = vadd.f32 %v1204, %v1223
    %1225 = vdwg.mxu0
    %v1226 = vmax.f32 %v984, 0.0
    %v1227 = vmax.f32 %v1064, 0.0
    %v1228 = vmax.f32 %v1144, 0.0
    %v1229 = vmax.f32 %v1224, 0.0
    %v1230 = vld [vmem:[%s5] sm:$0xff]
    %v1231 = vld [vmem:[%s5 + $0x8] sm:$0xff]
    %v1232 = vld [vmem:[%s5 + $0x10] sm:$0xff]
    %v1233 = vld [vmem:[%s5 + $0x18] sm:$0xff]
    %v1234 = vld [vmem:[%s5 + $0x20] sm:$0xff]
    %v1235 = vld [vmem:[%s5 + $0x28] sm:$0xff]
    %v1236 = vld [vmem:[%s5 + $0x30] sm:$0xff]
    %v1237 = vld [vmem:[%s5 + $0x38] sm:$0xff]
    %v1238 = vld [vmem:[%s5 + $0x40] sm:$0xff]
    %v1239 = vld [vmem:[%s5 + $0x48] sm:$0xff]
    %v1240 = vld [vmem:[%s5 + $0x50] sm:$0xff]
    %v1241 = vld [vmem:[%s5 + $0x58] sm:$0xff]
    %v1242 = vld [vmem:[%s5 + $0x60] sm:$0xff]
    %v1243 = vld [vmem:[%s5 + $0x68] sm:$0xff]
    %v1244 = vld [vmem:[%s5 + $0x70] sm:$0xff]
    %v1245 = vld [vmem:[%s5 + $0x78] sm:$0xff]
    %v1246 = vld [vmem:[%s5 + $0x80] sm:$0xff]
    %v1247 = vld [vmem:[%s5 + $0x88] sm:$0xff]
    %v1248 = vld [vmem:[%s5 + $0x90] sm:$0xff]
    %v1249 = vld [vmem:[%s5 + $0x98] sm:$0xff]
    %v1250 = vld [vmem:[%s5 + $0xa0] sm:$0xff]
    %v1251 = vld [vmem:[%s5 + $0xa8] sm:$0xff]
    %v1252 = vld [vmem:[%s5 + $0xb0] sm:$0xff]
    %v1253 = vld [vmem:[%s5 + $0xb8] sm:$0xff]
    %v1254 = vld [vmem:[%s5 + $0xc0] sm:$0xff]
    %v1255 = vld [vmem:[%s5 + $0xc8] sm:$0xff]
    %v1256 = vld [vmem:[%s5 + $0xd0] sm:$0xff]
    %v1257 = vld [vmem:[%s5 + $0xd8] sm:$0xff]
    %v1258 = vld [vmem:[%s5 + $0xe0] sm:$0xff]
    %v1259 = vld [vmem:[%s5 + $0xe8] sm:$0xff]
    %v1260 = vld [vmem:[%s5 + $0xf0] sm:$0xff]
    %v1261 = vld [vmem:[%s5 + $0xf8] sm:$0xff]
    %v1262 = vld [vmem:[%s5 + $0x100] sm:$0xff]
    %v1263 = vld [vmem:[%s5 + $0x108] sm:$0xff]
    %v1264 = vld [vmem:[%s5 + $0x110] sm:$0xff]
    %v1265 = vld [vmem:[%s5 + $0x118] sm:$0xff]
    %v1266 = vld [vmem:[%s5 + $0x120] sm:$0xff]
    %v1267 = vld [vmem:[%s5 + $0x128] sm:$0xff]
    %v1268 = vld [vmem:[%s5 + $0x130] sm:$0xff]
    %v1269 = vld [vmem:[%s5 + $0x138] sm:$0xff]
    %v1270 = vld [vmem:[%s5 + $0x140] sm:$0xff]
    %v1271 = vld [vmem:[%s5 + $0x148] sm:$0xff]
    %v1272 = vld [vmem:[%s5 + $0x150] sm:$0xff]
    %v1273 = vld [vmem:[%s5 + $0x158] sm:$0xff]
    %v1274 = vld [vmem:[%s5 + $0x160] sm:$0xff]
    %v1275 = vld [vmem:[%s5 + $0x168] sm:$0xff]
    %v1276 = vld [vmem:[%s5 + $0x170] sm:$0xff]
    %v1277 = vld [vmem:[%s5 + $0x178] sm:$0xff]
    %v1278 = vld [vmem:[%s5 + $0x180] sm:$0xff]
    %v1279 = vld [vmem:[%s5 + $0x188] sm:$0xff]
    %v1280 = vld [vmem:[%s5 + $0x190] sm:$0xff]
    %v1281 = vld [vmem:[%s5 + $0x198] sm:$0xff]
    %v1282 = vld [vmem:[%s5 + $0x1a0] sm:$0xff]
    %v1283 = vld [vmem:[%s5 + $0x1a8] sm:$0xff]
    %v1284 = vld [vmem:[%s5 + $0x1b0] sm:$0xff]
    %v1285 = vld [vmem:[%s5 + $0x1b8] sm:$0xff]
    %v1286 = vld [vmem:[%s5 + $0x1c0] sm:$0xff]
    %v1287 = vld [vmem:[%s5 + $0x1c8] sm:$0xff]
    %v1288 = vld [vmem:[%s5 + $0x1d0] sm:$0xff]
    %v1289 = vld [vmem:[%s5 + $0x1d8] sm:$0xff]
    %v1290 = vld [vmem:[%s5 + $0x1e0] sm:$0xff]
    %v1291 = vld [vmem:[%s5 + $0x1e8] sm:$0xff]
    %v1292 = vld [vmem:[%s5 + $0x1f0] sm:$0xff]
    %v1293 = vld [vmem:[%s5 + $0x1f8] sm:$0xff]
    %v1294 = vld [vmem:[%s5 + $0x200] sm:$0xff]
    %v1295 = vld [vmem:[%s5 + $0x208] sm:$0xff]
    %v1296 = vld [vmem:[%s5 + $0x210] sm:$0xff]
    %v1297 = vld [vmem:[%s5 + $0x218] sm:$0xff]
    %v1298 = vld [vmem:[%s5 + $0x220] sm:$0xff]
    %v1299 = vld [vmem:[%s5 + $0x228] sm:$0xff]
    %v1300 = vld [vmem:[%s5 + $0x230] sm:$0xff]
    %v1301 = vld [vmem:[%s5 + $0x238] sm:$0xff]
    %v1302 = vld [vmem:[%s5 + $0x240] sm:$0xff]
    %v1303 = vld [vmem:[%s5 + $0x248] sm:$0xff]
    %v1304 = vld [vmem:[%s5 + $0x250] sm:$0xff]
    %v1305 = vld [vmem:[%s5 + $0x258] sm:$0xff]
    %v1306 = vld [vmem:[%s5 + $0x260] sm:$0xff]
    %v1307 = vld [vmem:[%s5 + $0x268] sm:$0xff]
    %v1308 = vld [vmem:[%s5 + $0x270] sm:$0xff]
    %v1309 = vld [vmem:[%s5 + $0x278] sm:$0xff]
    %v1310 = vld [vmem:[%s5 + $0x280] sm:$0xff]
    %v1311 = vld [vmem:[%s5 + $0x288] sm:$0xff]
    %v1312 = vld [vmem:[%s5 + $0x290] sm:$0xff]
    %v1313 = vld [vmem:[%s5 + $0x298] sm:$0xff]
    %v1314 = vld [vmem:[%s5 + $0x2a0] sm:$0xff]
    %v1315 = vld [vmem:[%s5 + $0x2a8] sm:$0xff]
    %v1316 = vld [vmem:[%s5 + $0x2b0] sm:$0xff]
    %v1317 = vld [vmem:[%s5 + $0x2b8] sm:$0xff]
    %v1318 = vld [vmem:[%s5 + $0x2c0] sm:$0xff]
    %v1319 = vld [vmem:[%s5 + $0x2c8] sm:$0xff]
    %v1320 = vld [vmem:[%s5 + $0x2d0] sm:$0xff]
    %v1321 = vld [vmem:[%s5 + $0x2d8] sm:$0xff]
    %v1322 = vld [vmem:[%s5 + $0x2e0] sm:$0xff]
    %v1323 = vld [vmem:[%s5 + $0x2e8] sm:$0xff]
    %v1324 = vld [vmem:[%s5 + $0x2f0] sm:$0xff]
    %v1325 = vld [vmem:[%s5 + $0x2f8] sm:$0xff]
    %v1326 = vld [vmem:[%s5 + $0x300] sm:$0xff]
    %v1327 = vld [vmem:[%s5 + $0x308] sm:$0xff]
    %v1328 = vld [vmem:[%s5 + $0x310] sm:$0xff]
    %v1329 = vld [vmem:[%s5 + $0x318] sm:$0xff]
    %v1330 = vld [vmem:[%s5 + $0x320] sm:$0xff]
    %v1331 = vld [vmem:[%s5 + $0x328] sm:$0xff]
    %v1332 = vld [vmem:[%s5 + $0x330] sm:$0xff]
    %v1333 = vld [vmem:[%s5 + $0x338] sm:$0xff]
    %v1334 = vld [vmem:[%s5 + $0x340] sm:$0xff]
    %v1335 = vld [vmem:[%s5 + $0x348] sm:$0xff]
    %v1336 = vld [vmem:[%s5 + $0x350] sm:$0xff]
    %v1337 = vld [vmem:[%s5 + $0x358] sm:$0xff]
    %v1338 = vld [vmem:[%s5 + $0x360] sm:$0xff]
    %v1339 = vld [vmem:[%s5 + $0x368] sm:$0xff]
    %v1340 = vld [vmem:[%s5 + $0x370] sm:$0xff]
    %v1341 = vld [vmem:[%s5 + $0x378] sm:$0xff]
    %v1342 = vld [vmem:[%s5 + $0x380] sm:$0xff]
    %v1343 = vld [vmem:[%s5 + $0x388] sm:$0xff]
    %v1344 = vld [vmem:[%s5 + $0x390] sm:$0xff]
    %v1345 = vld [vmem:[%s5 + $0x398] sm:$0xff]
    %v1346 = vld [vmem:[%s5 + $0x3a0] sm:$0xff]
    %v1347 = vld [vmem:[%s5 + $0x3a8] sm:$0xff]
    %v1348 = vld [vmem:[%s5 + $0x3b0] sm:$0xff]
    %v1349 = vld [vmem:[%s5 + $0x3b8] sm:$0xff]
    %v1350 = vld [vmem:[%s5 + $0x3c0] sm:$0xff]
    %v1351 = vld [vmem:[%s5 + $0x3c8] sm:$0xff]
    %v1352 = vld [vmem:[%s5 + $0x3d0] sm:$0xff]
    %v1353 = vld [vmem:[%s5 + $0x3d8] sm:$0xff]
    %v1354 = vld [vmem:[%s5 + $0x3e0] sm:$0xff]
    %v1355 = vld [vmem:[%s5 + $0x3e8] sm:$0xff]
    %v1356 = vld [vmem:[%s5 + $0x3f0] sm:$0xff]
    %v1357 = vld [vmem:[%s5 + $0x3f8] sm:$0xff]
    %v1358 = vld [vmem:[%s5 + $0x400] sm:$0xff]
    %v1359 = vld [vmem:[%s5 + $0x408] sm:$0xff]
    %v1360 = vld [vmem:[%s5 + $0x410] sm:$0xff]
    %v1361 = vld [vmem:[%s5 + $0x418] sm:$0xff]
    %v1362 = vld [vmem:[%s5 + $0x420] sm:$0xff]
    %v1363 = vld [vmem:[%s5 + $0x428] sm:$0xff]
    %v1364 = vld [vmem:[%s5 + $0x430] sm:$0xff]
    %v1365 = vld [vmem:[%s5 + $0x438] sm:$0xff]
    %v1366 = vld [vmem:[%s5 + $0x440] sm:$0xff]
    %v1367 = vld [vmem:[%s5 + $0x448] sm:$0xff]
    %v1368 = vld [vmem:[%s5 + $0x450] sm:$0xff]
    %v1369 = vld [vmem:[%s5 + $0x458] sm:$0xff]
    %v1370 = vld [vmem:[%s5 + $0x460] sm:$0xff]
    %v1371 = vld [vmem:[%s5 + $0x468] sm:$0xff]
    %v1372 = vld [vmem:[%s5 + $0x470] sm:$0xff]
    %v1373 = vld [vmem:[%s5 + $0x478] sm:$0xff]
    %v1374 = vld [vmem:[%s5 + $0x480] sm:$0xff]
    %v1375 = vld [vmem:[%s5 + $0x488] sm:$0xff]
    %v1376 = vld [vmem:[%s5 + $0x490] sm:$0xff]
    %v1377 = vld [vmem:[%s5 + $0x498] sm:$0xff]
    %v1378 = vld [vmem:[%s5 + $0x4a0] sm:$0xff]
    %v1379 = vld [vmem:[%s5 + $0x4a8] sm:$0xff]
    %v1380 = vld [vmem:[%s5 + $0x4b0] sm:$0xff]
    %v1381 = vld [vmem:[%s5 + $0x4b8] sm:$0xff]
    %v1382 = vld [vmem:[%s5 + $0x4c0] sm:$0xff]
    %v1383 = vld [vmem:[%s5 + $0x4c8] sm:$0xff]
    %v1384 = vld [vmem:[%s5 + $0x4d0] sm:$0xff]
    %v1385 = vld [vmem:[%s5 + $0x4d8] sm:$0xff]
    %v1386 = vld [vmem:[%s5 + $0x4e0] sm:$0xff]
    %v1387 = vld [vmem:[%s5 + $0x4e8] sm:$0xff]
    %v1388 = vld [vmem:[%s5 + $0x4f0] sm:$0xff]
    %v1389 = vld [vmem:[%s5 + $0x4f8] sm:$0xff]
    %v1390 = vld [vmem:[%s5 + $0x500] sm:$0xff]
    %v1391 = vld [vmem:[%s5 + $0x508] sm:$0xff]
    %v1392 = vld [vmem:[%s5 + $0x510] sm:$0xff]
    %v1393 = vld [vmem:[%s5 + $0x518] sm:$0xff]
    %v1394 = vld [vmem:[%s5 + $0x520] sm:$0xff]
    %v1395 = vld [vmem:[%s5 + $0x528] sm:$0xff]
    %v1396 = vld [vmem:[%s5 + $0x530] sm:$0xff]
    %v1397 = vld [vmem:[%s5 + $0x538] sm:$0xff]
    %v1398 = vld [vmem:[%s5 + $0x540] sm:$0xff]
    %v1399 = vld [vmem:[%s5 + $0x548] sm:$0xff]
    %v1400 = vld [vmem:[%s5 + $0x550] sm:$0xff]
    %v1401 = vld [vmem:[%s5 + $0x558] sm:$0xff]
    %v1402 = vld [vmem:[%s5 + $0x560] sm:$0xff]
    %v1403 = vld [vmem:[%s5 + $0x568] sm:$0xff]
    %v1404 = vld [vmem:[%s5 + $0x570] sm:$0xff]
    %v1405 = vld [vmem:[%s5 + $0x578] sm:$0xff]
    %v1406 = vld [vmem:[%s5 + $0x580] sm:$0xff]
    %v1407 = vld [vmem:[%s5 + $0x588] sm:$0xff]
    %v1408 = vld [vmem:[%s5 + $0x590] sm:$0xff]
    %v1409 = vld [vmem:[%s5 + $0x598] sm:$0xff]
    %v1410 = vld [vmem:[%s5 + $0x5a0] sm:$0xff]
    %v1411 = vld [vmem:[%s5 + $0x5a8] sm:$0xff]
    %v1412 = vld [vmem:[%s5 + $0x5b0] sm:$0xff]
    %v1413 = vld [vmem:[%s5 + $0x5b8] sm:$0xff]
    %v1414 = vld [vmem:[%s5 + $0x5c0] sm:$0xff]
    %v1415 = vld [vmem:[%s5 + $0x5c8] sm:$0xff]
    %v1416 = vld [vmem:[%s5 + $0x5d0] sm:$0xff]
    %v1417 = vld [vmem:[%s5 + $0x5d8] sm:$0xff]
    %v1418 = vld [vmem:[%s5 + $0x5e0] sm:$0xff]
    %v1419 = vld [vmem:[%s5 + $0x5e8] sm:$0xff]
    %v1420 = vld [vmem:[%s5 + $0x5f0] sm:$0xff]
    %v1421 = vld [vmem:[%s5 + $0x5f8] sm:$0xff]
    %v1422 = vld [vmem:[%s5 + $0x600] sm:$0xff]
    %v1423 = vld [vmem:[%s5 + $0x608] sm:$0xff]
    %v1424 = vld [vmem:[%s5 + $0x610] sm:$0xff]
    %v1425 = vld [vmem:[%s5 + $0x618] sm:$0xff]
    %v1426 = vld [vmem:[%s5 + $0x620] sm:$0xff]
    %v1427 = vld [vmem:[%s5 + $0x628] sm:$0xff]
    %v1428 = vld [vmem:[%s5 + $0x630] sm:$0xff]
    %v1429 = vld [vmem:[%s5 + $0x638] sm:$0xff]
    %v1430 = vld [vmem:[%s5 + $0x640] sm:$0xff]
    %v1431 = vld [vmem:[%s5 + $0x648] sm:$0xff]
    %v1432 = vld [vmem:[%s5 + $0x650] sm:$0xff]
    %v1433 = vld [vmem:[%s5 + $0x658] sm:$0xff]
    %v1434 = vld [vmem:[%s5 + $0x660] sm:$0xff]
    %v1435 = vld [vmem:[%s5 + $0x668] sm:$0xff]
    %v1436 = vld [vmem:[%s5 + $0x670] sm:$0xff]
    %v1437 = vld [vmem:[%s5 + $0x678] sm:$0xff]
    %v1438 = vld [vmem:[%s5 + $0x680] sm:$0xff]
    %v1439 = vld [vmem:[%s5 + $0x688] sm:$0xff]
    %v1440 = vld [vmem:[%s5 + $0x690] sm:$0xff]
    %v1441 = vld [vmem:[%s5 + $0x698] sm:$0xff]
    %v1442 = vld [vmem:[%s5 + $0x6a0] sm:$0xff]
    %v1443 = vld [vmem:[%s5 + $0x6a8] sm:$0xff]
    %v1444 = vld [vmem:[%s5 + $0x6b0] sm:$0xff]
    %v1445 = vld [vmem:[%s5 + $0x6b8] sm:$0xff]
    %v1446 = vld [vmem:[%s5 + $0x6c0] sm:$0xff]
    %v1447 = vld [vmem:[%s5 + $0x6c8] sm:$0xff]
    %v1448 = vld [vmem:[%s5 + $0x6d0] sm:$0xff]
    %v1449 = vld [vmem:[%s5 + $0x6d8] sm:$0xff]
    %v1450 = vld [vmem:[%s5 + $0x6e0] sm:$0xff]
    %v1451 = vld [vmem:[%s5 + $0x6e8] sm:$0xff]
    %v1452 = vld [vmem:[%s5 + $0x6f0] sm:$0xff]
    %v1453 = vld [vmem:[%s5 + $0x6f8] sm:$0xff]
    %v1454 = vld [vmem:[%s5 + $0x700] sm:$0xff]
    %v1455 = vld [vmem:[%s5 + $0x708] sm:$0xff]
    %v1456 = vld [vmem:[%s5 + $0x710] sm:$0xff]
    %v1457 = vld [vmem:[%s5 + $0x718] sm:$0xff]
    %v1458 = vld [vmem:[%s5 + $0x720] sm:$0xff]
    %v1459 = vld [vmem:[%s5 + $0x728] sm:$0xff]
    %v1460 = vld [vmem:[%s5 + $0x730] sm:$0xff]
    %v1461 = vld [vmem:[%s5 + $0x738] sm:$0xff]
    %v1462 = vld [vmem:[%s5 + $0x740] sm:$0xff]
    %v1463 = vld [vmem:[%s5 + $0x748] sm:$0xff]
    %v1464 = vld [vmem:[%s5 + $0x750] sm:$0xff]
    %v1465 = vld [vmem:[%s5 + $0x758] sm:$0xff]
    %v1466 = vld [vmem:[%s5 + $0x760] sm:$0xff]
    %v1467 = vld [vmem:[%s5 + $0x768] sm:$0xff]
    %v1468 = vld [vmem:[%s5 + $0x770] sm:$0xff]
    %v1469 = vld [vmem:[%s5 + $0x778] sm:$0xff]
    %v1470 = vld [vmem:[%s5 + $0x780] sm:$0xff]
    %v1471 = vld [vmem:[%s5 + $0x788] sm:$0xff]
    %v1472 = vld [vmem:[%s5 + $0x790] sm:$0xff]
    %v1473 = vld [vmem:[%s5 + $0x798] sm:$0xff]
    %v1474 = vld [vmem:[%s5 + $0x7a0] sm:$0xff]
    %v1475 = vld [vmem:[%s5 + $0x7a8] sm:$0xff]
    %v1476 = vld [vmem:[%s5 + $0x7b0] sm:$0xff]
    %v1477 = vld [vmem:[%s5 + $0x7b8] sm:$0xff]
    %v1478 = vld [vmem:[%s5 + $0x7c0] sm:$0xff]
    %v1479 = vld [vmem:[%s5 + $0x7c8] sm:$0xff]
    %v1480 = vld [vmem:[%s5 + $0x7d0] sm:$0xff]
    %v1481 = vld [vmem:[%s5 + $0x7d8] sm:$0xff]
    %v1482 = vld [vmem:[%s5 + $0x7e0] sm:$0xff]
    %v1483 = vld [vmem:[%s5 + $0x7e8] sm:$0xff]
    %v1484 = vld [vmem:[%s5 + $0x7f0] sm:$0xff]
    %v1485 = vld [vmem:[%s5 + $0x7f8] sm:$0xff]
    %v1486 = vld [vmem:[%s6] sm:$0xf]
    %v1488 = vperm.slane %v1486, 0
    %v1489 = vperm.slane %v1486, 1
    %v1490 = vperm.slane %v1486, 2
    %v1491 = vperm.slane %v1486, 3
    %1496 = vmatpush.msra.mxu0 %v1290
    %1497 = vmatpush.msra.mxu0 %v1286
    %1498 = vmatpush.msra.mxu0 %v1282
    %1499 = vmatpush.msra.mxu0 %v1278
    %1500 = vmatpush.msra.mxu0 %v1274
    %1501 = vmatpush.msra.mxu0 %v1270
    %1502 = vmatpush.msra.mxu0 %v1266
    %1503 = vmatpush.msra.mxu0 %v1262
    %1504 = vmatpush.msra.mxu0 %v1258
    %1505 = vmatpush.msra.mxu0 %v1254
    %1506 = vmatpush.msra.mxu0 %v1250
    %1507 = vmatpush.msra.mxu0 %v1246
    %1508 = vmatpush.msra.mxu0 %v1242
    %1509 = vmatpush.msra.mxu0 %v1238
    %1510 = vmatpush.msra.mxu0 %v1234
    %1511 = vmatpush.msra.mxu0 %v1230
    %1512 = vmatmul.f32.gmra.mxu0 %v1226
    %v1513 = vpop.f32.mrf.mxu0
    %v1514 = vadd.f32 %v1488, %v1513
    %1515 = vdwg.mxu0
    %1516 = vmatpush.msra.mxu0 %v1354
    %1517 = vmatpush.msra.mxu0 %v1350
    %1518 = vmatpush.msra.mxu0 %v1346
    %1519 = vmatpush.msra.mxu0 %v1342
    %1520 = vmatpush.msra.mxu0 %v1338
    %1521 = vmatpush.msra.mxu0 %v1334
    %1522 = vmatpush.msra.mxu0 %v1330
    %1523 = vmatpush.msra.mxu0 %v1326
    %1524 = vmatpush.msra.mxu0 %v1322
    %1525 = vmatpush.msra.mxu0 %v1318
    %1526 = vmatpush.msra.mxu0 %v1314
    %1527 = vmatpush.msra.mxu0 %v1310
    %1528 = vmatpush.msra.mxu0 %v1306
    %1529 = vmatpush.msra.mxu0 %v1302
    %1530 = vmatpush.msra.mxu0 %v1298
    %1531 = vmatpush.msra.mxu0 %v1294
    %1532 = vmatmul.f32.gmra.mxu0 %v1227
    %v1533 = vpop.f32.mrf.mxu0
    %v1534 = vadd.f32 %v1514, %v1533
    %1535 = vdwg.mxu0
    %1536 = vmatpush.msra.mxu0 %v1418
    %1537 = vmatpush.msra.mxu0 %v1414
    %1538 = vmatpush.msra.mxu0 %v1410
    %1539 = vmatpush.msra.mxu0 %v1406
    %1540 = vmatpush.msra.mxu0 %v1402
    %1541 = vmatpush.msra.mxu0 %v1398
    %1542 = vmatpush.msra.mxu0 %v1394
    %1543 = vmatpush.msra.mxu0 %v1390
    %1544 = vmatpush.msra.mxu0 %v1386
    %1545 = vmatpush.msra.mxu0 %v1382
    %1546 = vmatpush.msra.mxu0 %v1378
    %1547 = vmatpush.msra.mxu0 %v1374
    %1548 = vmatpush.msra.mxu0 %v1370
    %1549 = vmatpush.msra.mxu0 %v1366
    %1550 = vmatpush.msra.mxu0 %v1362
    %1551 = vmatpush.msra.mxu0 %v1358
    %1552 = vmatmul.f32.gmra.mxu0 %v1228
    %v1553 = vpop.f32.mrf.mxu0
    %v1554 = vadd.f32 %v1534, %v1553
    %1555 = vdwg.mxu0
    %1556 = vmatpush.msra.mxu0 %v1482
    %1557 = vmatpush.msra.mxu0 %v1478
    %1558 = vmatpush.msra.mxu0 %v1474
    %1559 = vmatpush.msra.mxu0 %v1470
    %1560 = vmatpush.msra.mxu0 %v1466
    %1561 = vmatpush.msra.mxu0 %v1462
    %1562 = vmatpush.msra.mxu0 %v1458
    %1563 = vmatpush.msra.mxu0 %v1454
    %1564 = vmatpush.msra.mxu0 %v1450
    %1565 = vmatpush.msra.mxu0 %v1446
    %1566 = vmatpush.msra.mxu0 %v1442
    %1567 = vmatpush.msra.mxu0 %v1438
    %1568 = vmatpush.msra.mxu0 %v1434
    %1569 = vmatpush.msra.mxu0 %v1430
    %1570 = vmatpush.msra.mxu0 %v1426
    %1571 = vmatpush.msra.mxu0 %v1422
    %1572 = vmatmul.f32.gmra.mxu0 %v1229
    %v1573 = vpop.f32.mrf.mxu0
    %v1574 = vadd.f32 %v1554, %v1573
    %1575 = vdwg.mxu0
    %1576 = vmatpush.msra.mxu0 %v1291
    %1577 = vmatpush.msra.mxu0 %v1287
    %1578 = vmatpush.msra.mxu0 %v1283
    %1579 = vmatpush.msra.mxu0 %v1279
    %1580 = vmatpush.msra.mxu0 %v1275
    %1581 = vmatpush.msra.mxu0 %v1271
    %1582 = vmatpush.msra.mxu0 %v1267
    %1583 = vmatpush.msra.mxu0 %v1263
    %1584 = vmatpush.msra.mxu0 %v1259
    %1585 = vmatpush.msra.mxu0 %v1255
    %1586 = vmatpush.msra.mxu0 %v1251
    %1587 = vmatpush.msra.mxu0 %v1247
    %1588 = vmatpush.msra.mxu0 %v1243
    %1589 = vmatpush.msra.mxu0 %v1239
    %1590 = vmatpush.msra.mxu0 %v1235
    %1591 = vmatpush.msra.mxu0 %v1231
    %1592 = vmatmul.f32.gmra.mxu0 %v1226
    %v1593 = vpop.f32.mrf.mxu0
    %v1594 = vadd.f32 %v1489, %v1593
    %1595 = vdwg.mxu0
    %1596 = vmatpush.msra.mxu0 %v1355
    %1597 = vmatpush.msra.mxu0 %v1351
    %1598 = vmatpush.msra.mxu0 %v1347
    %1599 = vmatpush.msra.mxu0 %v1343
    %1600 = vmatpush.msra.mxu0 %v1339
    %1601 = vmatpush.msra.mxu0 %v1335
    %1602 = vmatpush.msra.mxu0 %v1331
    %1603 = vmatpush.msra.mxu0 %v1327
    %1604 = vmatpush.msra.mxu0 %v1323
    %1605 = vmatpush.msra.mxu0 %v1319
    %1606 = vmatpush.msra.mxu0 %v1315
    %1607 = vmatpush.msra.mxu0 %v1311
    %1608 = vmatpush.msra.mxu0 %v1307
    %1609 = vmatpush.msra.mxu0 %v1303
    %1610 = vmatpush.msra.mxu0 %v1299
    %1611 = vmatpush.msra.mxu0 %v1295
    %1612 = vmatmul.f32.gmra.mxu0 %v1227
    %v1613 = vpop.f32.mrf.mxu0
    %v1614 = vadd.f32 %v1594, %v1613
    %1615 = vdwg.mxu0
    %1616 = vmatpush.msra.mxu0 %v1419
    %1617 = vmatpush.msra.mxu0 %v1415
    %1618 = vmatpush.msra.mxu0 %v1411
    %1619 = vmatpush.msra.mxu0 %v1407
    %1620 = vmatpush.msra.mxu0 %v1403
    %1621 = vmatpush.msra.mxu0 %v1399
    %1622 = vmatpush.msra.mxu0 %v1395
    %1623 = vmatpush.msra.mxu0 %v1391
    %1624 = vmatpush.msra.mxu0 %v1387
    %1625 = vmatpush.msra.mxu0 %v1383
    %1626 = vmatpush.msra.mxu0 %v1379
    %1627 = vmatpush.msra.mxu0 %v1375
    %1628 = vmatpush.msra.mxu0 %v1371
    %1629 = vmatpush.msra.mxu0 %v1367
    %1630 = vmatpush.msra.mxu0 %v1363
    %1631 = vmatpush.msra.mxu0 %v1359
    %1632 = vmatmul.f32.gmra.mxu0 %v1228
    %v1633 = vpop.f32.mrf.mxu0
    %v1634 = vadd.f32 %v1614, %v1633
    %1635 = vdwg.mxu0
    %1636 = vmatpush.msra.mxu0 %v1483
    %1637 = vmatpush.msra.mxu0 %v1479
    %1638 = vmatpush.msra.mxu0 %v1475
    %1639 = vmatpush.msra.mxu0 %v1471
    %1640 = vmatpush.msra.mxu0 %v1467
    %1641 = vmatpush.msra.mxu0 %v1463
    %1642 = vmatpush.msra.mxu0 %v1459
    %1643 = vmatpush.msra.mxu0 %v1455
    %1644 = vmatpush.msra.mxu0 %v1451
    %1645 = vmatpush.msra.mxu0 %v1447
    %1646 = vmatpush.msra.mxu0 %v1443
    %1647 = vmatpush.msra.mxu0 %v1439
    %1648 = vmatpush.msra.mxu0 %v1435
    %1649 = vmatpush.msra.mxu0 %v1431
    %1650 = vmatpush.msra.mxu0 %v1427
    %1651 = vmatpush.msra.mxu0 %v1423
    %1652 = vmatmul.f32.gmra.mxu0 %v1229
    %v1653 = vpop.f32.mrf.mxu0
    %v1654 = vadd.f32 %v1634, %v1653
    %1655 = vdwg.mxu0
    %1656 = vmatpush.msra.mxu0 %v1292
    %1657 = vmatpush.msra.mxu0 %v1288
    %1658 = vmatpush.msra.mxu0 %v1284
    %1659 = vmatpush.msra.mxu0 %v1280
    %1660 = vmatpush.msra.mxu0 %v1276
    %1661 = vmatpush.msra.mxu0 %v1272
    %1662 = vmatpush.msra.mxu0 %v1268
    %1663 = vmatpush.msra.mxu0 %v1264
    %1664 = vmatpush.msra.mxu0 %v1260
    %1665 = vmatpush.msra.mxu0 %v1256
    %1666 = vmatpush.msra.mxu0 %v1252
    %1667 = vmatpush.msra.mxu0 %v1248
    %1668 = vmatpush.msra.mxu0 %v1244
    %1669 = vmatpush.msra.mxu0 %v1240
    %1670 = vmatpush.msra.mxu0 %v1236
    %1671 = vmatpush.msra.mxu0 %v1232
    %1672 = vmatmul.f32.gmra.mxu0 %v1226
    %v1673 = vpop.f32.mrf.mxu0
    %v1674 = vadd.f32 %v1490, %v1673
    %1675 = vdwg.mxu0
    %1676 = vmatpush.msra.mxu0 %v1356
    %1677 = vmatpush.msra.mxu0 %v1352
    %1678 = vmatpush.msra.mxu0 %v1348
    %1679 = vmatpush.msra.mxu0 %v1344
    %1680 = vmatpush.msra.mxu0 %v1340
    %1681 = vmatpush.msra.mxu0 %v1336
    %1682 = vmatpush.msra.mxu0 %v1332
    %1683 = vmatpush.msra.mxu0 %v1328
    %1684 = vmatpush.msra.mxu0 %v1324
    %1685 = vmatpush.msra.mxu0 %v1320
    %1686 = vmatpush.msra.mxu0 %v1316
    %1687 = vmatpush.msra.mxu0 %v1312
    %1688 = vmatpush.msra.mxu0 %v1308
    %1689 = vmatpush.msra.mxu0 %v1304
    %1690 = vmatpush.msra.mxu0 %v1300
    %1691 = vmatpush.msra.mxu0 %v1296
    %1692 = vmatmul.f32.gmra.mxu0 %v1227
    %v1693 = vpop.f32.mrf.mxu0
    %v1694 = vadd.f32 %v1674, %v1693
    %1695 = vdwg.mxu0
    %1696 = vmatpush.msra.mxu0 %v1420
    %1697 = vmatpush.msra.mxu0 %v1416
    %1698 = vmatpush.msra.mxu0 %v1412
    %1699 = vmatpush.msra.mxu0 %v1408
    %1700 = vmatpush.msra.mxu0 %v1404
    %1701 = vmatpush.msra.mxu0 %v1400
    %1702 = vmatpush.msra.mxu0 %v1396
    %1703 = vmatpush.msra.mxu0 %v1392
    %1704 = vmatpush.msra.mxu0 %v1388
    %1705 = vmatpush.msra.mxu0 %v1384
    %1706 = vmatpush.msra.mxu0 %v1380
    %1707 = vmatpush.msra.mxu0 %v1376
    %1708 = vmatpush.msra.mxu0 %v1372
    %1709 = vmatpush.msra.mxu0 %v1368
    %1710 = vmatpush.msra.mxu0 %v1364
    %1711 = vmatpush.msra.mxu0 %v1360
    %1712 = vmatmul.f32.gmra.mxu0 %v1228
    %v1713 = vpop.f32.mrf.mxu0
    %v1714 = vadd.f32 %v1694, %v1713
    %1715 = vdwg.mxu0
    %1716 = vmatpush.msra.mxu0 %v1484
    %1717 = vmatpush.msra.mxu0 %v1480
    %1718 = vmatpush.msra.mxu0 %v1476
    %1719 = vmatpush.msra.mxu0 %v1472
    %1720 = vmatpush.msra.mxu0 %v1468
    %1721 = vmatpush.msra.mxu0 %v1464
    %1722 = vmatpush.msra.mxu0 %v1460
    %1723 = vmatpush.msra.mxu0 %v1456
    %1724 = vmatpush.msra.mxu0 %v1452
    %1725 = vmatpush.msra.mxu0 %v1448
    %1726 = vmatpush.msra.mxu0 %v1444
    %1727 = vmatpush.msra.mxu0 %v1440
    %1728 = vmatpush.msra.mxu0 %v1436
    %1729 = vmatpush.msra.mxu0 %v1432
    %1730 = vmatpush.msra.mxu0 %v1428
    %1731 = vmatpush.msra.mxu0 %v1424
    %1732 = vmatmul.f32.gmra.mxu0 %v1229
    %v1733 = vpop.f32.mrf.mxu0
    %v1734 = vadd.f32 %v1714, %v1733
    %1735 = vdwg.mxu0
    %1736 = vmatpush.msra.mxu0 %v1293
    %1737 = vmatpush.msra.mxu0 %v1289
    %1738 = vmatpush.msra.mxu0 %v1285
    %1739 = vmatpush.msra.mxu0 %v1281
    %1740 = vmatpush.msra.mxu0 %v1277
    %1741 = vmatpush.msra.mxu0 %v1273
    %1742 = vmatpush.msra.mxu0 %v1269
    %1743 = vmatpush.msra.mxu0 %v1265
    %1744 = vmatpush.msra.mxu0 %v1261
    %1745 = vmatpush.msra.mxu0 %v1257
    %1746 = vmatpush.msra.mxu0 %v1253
    %1747 = vmatpush.msra.mxu0 %v1249
    %1748 = vmatpush.msra.mxu0 %v1245
    %1749 = vmatpush.msra.mxu0 %v1241
    %1750 = vmatpush.msra.mxu0 %v1237
    %1751 = vmatpush.msra.mxu0 %v1233
    %1752 = vmatmul.f32.gmra.mxu0 %v1226
    %v1753 = vpop.f32.mrf.mxu0
    %v1754 = vadd.f32 %v1491, %v1753
    %1755 = vdwg.mxu0
    %1756 = vmatpush.msra.mxu0 %v1357
    %1757 = vmatpush.msra.mxu0 %v1353
    %1758 = vmatpush.msra.mxu0 %v1349
    %1759 = vmatpush.msra.mxu0 %v1345
    %1760 = vmatpush.msra.mxu0 %v1341
    %1761 = vmatpush.msra.mxu0 %v1337
    %1762 = vmatpush.msra.mxu0 %v1333
    %1763 = vmatpush.msra.mxu0 %v1329
    %1764 = vmatpush.msra.mxu0 %v1325
    %1765 = vmatpush.msra.mxu0 %v1321
    %1766 = vmatpush.msra.mxu0 %v1317
    %1767 = vmatpush.msra.mxu0 %v1313
    %1768 = vmatpush.msra.mxu0 %v1309
    %1769 = vmatpush.msra.mxu0 %v1305
    %1770 = vmatpush.msra.mxu0 %v1301
    %1771 = vmatpush.msra.mxu0 %v1297
    %1772 = vmatmul.f32.gmra.mxu0 %v1227
    %v1773 = vpop.f32.mrf.mxu0
    %v1774 = vadd.f32 %v1754, %v1773
    %1775 = vdwg.mxu0
    %1776 = vmatpush.msra.mxu0 %v1421
    %1777 = vmatpush.msra.mxu0 %v1417
    %1778 = vmatpush.msra.mxu0 %v1413
    %1779 = vmatpush.msra.mxu0 %v1409
    %1780 = vmatpush.msra.mxu0 %v1405
    %1781 = vmatpush.msra.mxu0 %v1401
    %1782 = vmatpush.msra.mxu0 %v1397
    %1783 = vmatpush.msra.mxu0 %v1393
    %1784 = vmatpush.msra.mxu0 %v1389
    %1785 = vmatpush.msra.mxu0 %v1385
    %1786 = vmatpush.msra.mxu0 %v1381
    %1787 = vmatpush.msra.mxu0 %v1377
    %1788 = vmatpush.msra.mxu0 %v1373
    %1789 = vmatpush.msra.mxu0 %v1369
    %1790 = vmatpush.msra.mxu0 %v1365
    %1791 = vmatpush.msra.mxu0 %v1361
    %1792 = vmatmul.f32.gmra.mxu0 %v1228
    %v1793 = vpop.f32.mrf.mxu0
    %v1794 = vadd.f32 %v1774, %v1793
    %1795 = vdwg.mxu0
    %1796 = vmatpush.msra.mxu0 %v1485
    %1797 = vmatpush.msra.mxu0 %v1481
    %1798 = vmatpush.msra.mxu0 %v1477
    %1799 = vmatpush.msra.mxu0 %v1473
    %1800 = vmatpush.msra.mxu0 %v1469
    %1801 = vmatpush.msra.mxu0 %v1465
    %1802 = vmatpush.msra.mxu0 %v1461
    %1803 = vmatpush.msra.mxu0 %v1457
    %1804 = vmatpush.msra.mxu0 %v1453
    %1805 = vmatpush.msra.mxu0 %v1449
    %1806 = vmatpush.msra.mxu0 %v1445
    %1807 = vmatpush.msra.mxu0 %v1441
    %1808 = vmatpush.msra.mxu0 %v1437
    %1809 = vmatpush.msra.mxu0 %v1433
    %1810 = vmatpush.msra.mxu0 %v1429
    %1811 = vmatpush.msra.mxu0 %v1425
    %1812 = vmatmul.f32.gmra.mxu0 %v1229
    %v1813 = vpop.f32.mrf.mxu0
    %v1814 = vadd.f32 %v1794, %v1813
    %1815 = vdwg.mxu0
    %v1816 = vmax.f32 %v1574, 0.0
    %v1817 = vmax.f32 %v1654, 0.0
    %v1818 = vmax.f32 %v1734, 0.0
    %v1819 = vmax.f32 %v1814, 0.0
    %v1820 = vld [vmem:[%s7] sm:$0xff]
    %v1821 = vld [vmem:[%s7 + $0x8] sm:$0xff]
    %v1822 = vld [vmem:[%s7 + $0x10] sm:$0xff]
    %v1823 = vld [vmem:[%s7 + $0x18] sm:$0xff]
    %v1824 = vld [vmem:[%s7 + $0x20] sm:$0xff]
    %v1825 = vld [vmem:[%s7 + $0x28] sm:$0xff]
    %v1826 = vld [vmem:[%s7 + $0x30] sm:$0xff]
    %v1827 = vld [vmem:[%s7 + $0x38] sm:$0xff]
    %v1828 = vld [vmem:[%s7 + $0x40] sm:$0xff]
    %v1829 = vld [vmem:[%s7 + $0x48] sm:$0xff]
    %v1830 = vld [vmem:[%s7 + $0x50] sm:$0xff]
    %v1831 = vld [vmem:[%s7 + $0x58] sm:$0xff]
    %v1832 = vld [vmem:[%s7 + $0x60] sm:$0xff]
    %v1833 = vld [vmem:[%s7 + $0x68] sm:$0xff]
    %v1834 = vld [vmem:[%s7 + $0x70] sm:$0xff]
    %v1835 = vld [vmem:[%s7 + $0x78] sm:$0xff]
    %v1836 = vld [vmem:[%s7 + $0x80] sm:$0xff]
    %v1837 = vld [vmem:[%s7 + $0x88] sm:$0xff]
    %v1838 = vld [vmem:[%s7 + $0x90] sm:$0xff]
    %v1839 = vld [vmem:[%s7 + $0x98] sm:$0xff]
    %v1840 = vld [vmem:[%s7 + $0xa0] sm:$0xff]
    %v1841 = vld [vmem:[%s7 + $0xa8] sm:$0xff]
    %v1842 = vld [vmem:[%s7 + $0xb0] sm:$0xff]
    %v1843 = vld [vmem:[%s7 + $0xb8] sm:$0xff]
    %v1844 = vld [vmem:[%s7 + $0xc0] sm:$0xff]
    %v1845 = vld [vmem:[%s7 + $0xc8] sm:$0xff]
    %v1846 = vld [vmem:[%s7 + $0xd0] sm:$0xff]
    %v1847 = vld [vmem:[%s7 + $0xd8] sm:$0xff]
    %v1848 = vld [vmem:[%s7 + $0xe0] sm:$0xff]
    %v1849 = vld [vmem:[%s7 + $0xe8] sm:$0xff]
    %v1850 = vld [vmem:[%s7 + $0xf0] sm:$0xff]
    %v1851 = vld [vmem:[%s7 + $0xf8] sm:$0xff]
    %v1852 = vld [vmem:[%s7 + $0x100] sm:$0xff]
    %v1853 = vld [vmem:[%s7 + $0x108] sm:$0xff]
    %v1854 = vld [vmem:[%s7 + $0x110] sm:$0xff]
    %v1855 = vld [vmem:[%s7 + $0x118] sm:$0xff]
    %v1856 = vld [vmem:[%s7 + $0x120] sm:$0xff]
    %v1857 = vld [vmem:[%s7 + $0x128] sm:$0xff]
    %v1858 = vld [vmem:[%s7 + $0x130] sm:$0xff]
    %v1859 = vld [vmem:[%s7 + $0x138] sm:$0xff]
    %v1860 = vld [vmem:[%s7 + $0x140] sm:$0xff]
    %v1861 = vld [vmem:[%s7 + $0x148] sm:$0xff]
    %v1862 = vld [vmem:[%s7 + $0x150] sm:$0xff]
    %v1863 = vld [vmem:[%s7 + $0x158] sm:$0xff]
    %v1864 = vld [vmem:[%s7 + $0x160] sm:$0xff]
    %v1865 = vld [vmem:[%s7 + $0x168] sm:$0xff]
    %v1866 = vld [vmem:[%s7 + $0x170] sm:$0xff]
    %v1867 = vld [vmem:[%s7 + $0x178] sm:$0xff]
    %v1868 = vld [vmem:[%s7 + $0x180] sm:$0xff]
    %v1869 = vld [vmem:[%s7 + $0x188] sm:$0xff]
    %v1870 = vld [vmem:[%s7 + $0x190] sm:$0xff]
    %v1871 = vld [vmem:[%s7 + $0x198] sm:$0xff]
    %v1872 = vld [vmem:[%s7 + $0x1a0] sm:$0xff]
    %v1873 = vld [vmem:[%s7 + $0x1a8] sm:$0xff]
    %v1874 = vld [vmem:[%s7 + $0x1b0] sm:$0xff]
    %v1875 = vld [vmem:[%s7 + $0x1b8] sm:$0xff]
    %v1876 = vld [vmem:[%s7 + $0x1c0] sm:$0xff]
    %v1877 = vld [vmem:[%s7 + $0x1c8] sm:$0xff]
    %v1878 = vld [vmem:[%s7 + $0x1d0] sm:$0xff]
    %v1879 = vld [vmem:[%s7 + $0x1d8] sm:$0xff]
    %v1880 = vld [vmem:[%s7 + $0x1e0] sm:$0xff]
    %v1881 = vld [vmem:[%s7 + $0x1e8] sm:$0xff]
    %v1882 = vld [vmem:[%s7 + $0x1f0] sm:$0xff]
    %v1883 = vld [vmem:[%s7 + $0x1f8] sm:$0xff]
    %v1884 = vld [vmem:[%s7 + $0x200] sm:$0xff]
    %v1885 = vld [vmem:[%s7 + $0x208] sm:$0xff]
    %v1886 = vld [vmem:[%s7 + $0x210] sm:$0xff]
    %v1887 = vld [vmem:[%s7 + $0x218] sm:$0xff]
    %v1888 = vld [vmem:[%s7 + $0x220] sm:$0xff]
    %v1889 = vld [vmem:[%s7 + $0x228] sm:$0xff]
    %v1890 = vld [vmem:[%s7 + $0x230] sm:$0xff]
    %v1891 = vld [vmem:[%s7 + $0x238] sm:$0xff]
    %v1892 = vld [vmem:[%s7 + $0x240] sm:$0xff]
    %v1893 = vld [vmem:[%s7 + $0x248] sm:$0xff]
    %v1894 = vld [vmem:[%s7 + $0x250] sm:$0xff]
    %v1895 = vld [vmem:[%s7 + $0x258] sm:$0xff]
    %v1896 = vld [vmem:[%s7 + $0x260] sm:$0xff]
    %v1897 = vld [vmem:[%s7 + $0x268] sm:$0xff]
    %v1898 = vld [vmem:[%s7 + $0x270] sm:$0xff]
    %v1899 = vld [vmem:[%s7 + $0x278] sm:$0xff]
    %v1900 = vld [vmem:[%s7 + $0x280] sm:$0xff]
    %v1901 = vld [vmem:[%s7 + $0x288] sm:$0xff]
    %v1902 = vld [vmem:[%s7 + $0x290] sm:$0xff]
    %v1903 = vld [vmem:[%s7 + $0x298] sm:$0xff]
    %v1904 = vld [vmem:[%s7 + $0x2a0] sm:$0xff]
    %v1905 = vld [vmem:[%s7 + $0x2a8] sm:$0xff]
    %v1906 = vld [vmem:[%s7 + $0x2b0] sm:$0xff]
    %v1907 = vld [vmem:[%s7 + $0x2b8] sm:$0xff]
    %v1908 = vld [vmem:[%s7 + $0x2c0] sm:$0xff]
    %v1909 = vld [vmem:[%s7 + $0x2c8] sm:$0xff]
    %v1910 = vld [vmem:[%s7 + $0x2d0] sm:$0xff]
    %v1911 = vld [vmem:[%s7 + $0x2d8] sm:$0xff]
    %v1912 = vld [vmem:[%s7 + $0x2e0] sm:$0xff]
    %v1913 = vld [vmem:[%s7 + $0x2e8] sm:$0xff]
    %v1914 = vld [vmem:[%s7 + $0x2f0] sm:$0xff]
    %v1915 = vld [vmem:[%s7 + $0x2f8] sm:$0xff]
    %v1916 = vld [vmem:[%s7 + $0x300] sm:$0xff]
    %v1917 = vld [vmem:[%s7 + $0x308] sm:$0xff]
    %v1918 = vld [vmem:[%s7 + $0x310] sm:$0xff]
    %v1919 = vld [vmem:[%s7 + $0x318] sm:$0xff]
    %v1920 = vld [vmem:[%s7 + $0x320] sm:$0xff]
    %v1921 = vld [vmem:[%s7 + $0x328] sm:$0xff]
    %v1922 = vld [vmem:[%s7 + $0x330] sm:$0xff]
    %v1923 = vld [vmem:[%s7 + $0x338] sm:$0xff]
    %v1924 = vld [vmem:[%s7 + $0x340] sm:$0xff]
    %v1925 = vld [vmem:[%s7 + $0x348] sm:$0xff]
    %v1926 = vld [vmem:[%s7 + $0x350] sm:$0xff]
    %v1927 = vld [vmem:[%s7 + $0x358] sm:$0xff]
    %v1928 = vld [vmem:[%s7 + $0x360] sm:$0xff]
    %v1929 = vld [vmem:[%s7 + $0x368] sm:$0xff]
    %v1930 = vld [vmem:[%s7 + $0x370] sm:$0xff]
    %v1931 = vld [vmem:[%s7 + $0x378] sm:$0xff]
    %v1932 = vld [vmem:[%s7 + $0x380] sm:$0xff]
    %v1933 = vld [vmem:[%s7 + $0x388] sm:$0xff]
    %v1934 = vld [vmem:[%s7 + $0x390] sm:$0xff]
    %v1935 = vld [vmem:[%s7 + $0x398] sm:$0xff]
    %v1936 = vld [vmem:[%s7 + $0x3a0] sm:$0xff]
    %v1937 = vld [vmem:[%s7 + $0x3a8] sm:$0xff]
    %v1938 = vld [vmem:[%s7 + $0x3b0] sm:$0xff]
    %v1939 = vld [vmem:[%s7 + $0x3b8] sm:$0xff]
    %v1940 = vld [vmem:[%s7 + $0x3c0] sm:$0xff]
    %v1941 = vld [vmem:[%s7 + $0x3c8] sm:$0xff]
    %v1942 = vld [vmem:[%s7 + $0x3d0] sm:$0xff]
    %v1943 = vld [vmem:[%s7 + $0x3d8] sm:$0xff]
    %v1944 = vld [vmem:[%s7 + $0x3e0] sm:$0xff]
    %v1945 = vld [vmem:[%s7 + $0x3e8] sm:$0xff]
    %v1946 = vld [vmem:[%s7 + $0x3f0] sm:$0xff]
    %v1947 = vld [vmem:[%s7 + $0x3f8] sm:$0xff]
    %v1948 = vld [vmem:[%s7 + $0x400] sm:$0xff]
    %v1949 = vld [vmem:[%s7 + $0x408] sm:$0xff]
    %v1950 = vld [vmem:[%s7 + $0x410] sm:$0xff]
    %v1951 = vld [vmem:[%s7 + $0x418] sm:$0xff]
    %v1952 = vld [vmem:[%s7 + $0x420] sm:$0xff]
    %v1953 = vld [vmem:[%s7 + $0x428] sm:$0xff]
    %v1954 = vld [vmem:[%s7 + $0x430] sm:$0xff]
    %v1955 = vld [vmem:[%s7 + $0x438] sm:$0xff]
    %v1956 = vld [vmem:[%s7 + $0x440] sm:$0xff]
    %v1957 = vld [vmem:[%s7 + $0x448] sm:$0xff]
    %v1958 = vld [vmem:[%s7 + $0x450] sm:$0xff]
    %v1959 = vld [vmem:[%s7 + $0x458] sm:$0xff]
    %v1960 = vld [vmem:[%s7 + $0x460] sm:$0xff]
    %v1961 = vld [vmem:[%s7 + $0x468] sm:$0xff]
    %v1962 = vld [vmem:[%s7 + $0x470] sm:$0xff]
    %v1963 = vld [vmem:[%s7 + $0x478] sm:$0xff]
    %v1964 = vld [vmem:[%s7 + $0x480] sm:$0xff]
    %v1965 = vld [vmem:[%s7 + $0x488] sm:$0xff]
    %v1966 = vld [vmem:[%s7 + $0x490] sm:$0xff]
    %v1967 = vld [vmem:[%s7 + $0x498] sm:$0xff]
    %v1968 = vld [vmem:[%s7 + $0x4a0] sm:$0xff]
    %v1969 = vld [vmem:[%s7 + $0x4a8] sm:$0xff]
    %v1970 = vld [vmem:[%s7 + $0x4b0] sm:$0xff]
    %v1971 = vld [vmem:[%s7 + $0x4b8] sm:$0xff]
    %v1972 = vld [vmem:[%s7 + $0x4c0] sm:$0xff]
    %v1973 = vld [vmem:[%s7 + $0x4c8] sm:$0xff]
    %v1974 = vld [vmem:[%s7 + $0x4d0] sm:$0xff]
    %v1975 = vld [vmem:[%s7 + $0x4d8] sm:$0xff]
    %v1976 = vld [vmem:[%s7 + $0x4e0] sm:$0xff]
    %v1977 = vld [vmem:[%s7 + $0x4e8] sm:$0xff]
    %v1978 = vld [vmem:[%s7 + $0x4f0] sm:$0xff]
    %v1979 = vld [vmem:[%s7 + $0x4f8] sm:$0xff]
    %v1980 = vld [vmem:[%s7 + $0x500] sm:$0xff]
    %v1981 = vld [vmem:[%s7 + $0x508] sm:$0xff]
    %v1982 = vld [vmem:[%s7 + $0x510] sm:$0xff]
    %v1983 = vld [vmem:[%s7 + $0x518] sm:$0xff]
    %v1984 = vld [vmem:[%s7 + $0x520] sm:$0xff]
    %v1985 = vld [vmem:[%s7 + $0x528] sm:$0xff]
    %v1986 = vld [vmem:[%s7 + $0x530] sm:$0xff]
    %v1987 = vld [vmem:[%s7 + $0x538] sm:$0xff]
    %v1988 = vld [vmem:[%s7 + $0x540] sm:$0xff]
    %v1989 = vld [vmem:[%s7 + $0x548] sm:$0xff]
    %v1990 = vld [vmem:[%s7 + $0x550] sm:$0xff]
    %v1991 = vld [vmem:[%s7 + $0x558] sm:$0xff]
    %v1992 = vld [vmem:[%s7 + $0x560] sm:$0xff]
    %v1993 = vld [vmem:[%s7 + $0x568] sm:$0xff]
    %v1994 = vld [vmem:[%s7 + $0x570] sm:$0xff]
    %v1995 = vld [vmem:[%s7 + $0x578] sm:$0xff]
    %v1996 = vld [vmem:[%s7 + $0x580] sm:$0xff]
    %v1997 = vld [vmem:[%s7 + $0x588] sm:$0xff]
    %v1998 = vld [vmem:[%s7 + $0x590] sm:$0xff]
    %v1999 = vld [vmem:[%s7 + $0x598] sm:$0xff]
    %v2000 = vld [vmem:[%s7 + $0x5a0] sm:$0xff]
    %v2001 = vld [vmem:[%s7 + $0x5a8] sm:$0xff]
    %v2002 = vld [vmem:[%s7 + $0x5b0] sm:$0xff]
    %v2003 = vld [vmem:[%s7 + $0x5b8] sm:$0xff]
    %v2004 = vld [vmem:[%s7 + $0x5c0] sm:$0xff]
    %v2005 = vld [vmem:[%s7 + $0x5c8] sm:$0xff]
    %v2006 = vld [vmem:[%s7 + $0x5d0] sm:$0xff]
    %v2007 = vld [vmem:[%s7 + $0x5d8] sm:$0xff]
    %v2008 = vld [vmem:[%s7 + $0x5e0] sm:$0xff]
    %v2009 = vld [vmem:[%s7 + $0x5e8] sm:$0xff]
    %v2010 = vld [vmem:[%s7 + $0x5f0] sm:$0xff]
    %v2011 = vld [vmem:[%s7 + $0x5f8] sm:$0xff]
    %v2012 = vld [vmem:[%s7 + $0x600] sm:$0xff]
    %v2013 = vld [vmem:[%s7 + $0x608] sm:$0xff]
    %v2014 = vld [vmem:[%s7 + $0x610] sm:$0xff]
    %v2015 = vld [vmem:[%s7 + $0x618] sm:$0xff]
    %v2016 = vld [vmem:[%s7 + $0x620] sm:$0xff]
    %v2017 = vld [vmem:[%s7 + $0x628] sm:$0xff]
    %v2018 = vld [vmem:[%s7 + $0x630] sm:$0xff]
    %v2019 = vld [vmem:[%s7 + $0x638] sm:$0xff]
    %v2020 = vld [vmem:[%s7 + $0x640] sm:$0xff]
    %v2021 = vld [vmem:[%s7 + $0x648] sm:$0xff]
    %v2022 = vld [vmem:[%s7 + $0x650] sm:$0xff]
    %v2023 = vld [vmem:[%s7 + $0x658] sm:$0xff]
    %v2024 = vld [vmem:[%s7 + $0x660] sm:$0xff]
    %v2025 = vld [vmem:[%s7 + $0x668] sm:$0xff]
    %v2026 = vld [vmem:[%s7 + $0x670] sm:$0xff]
    %v2027 = vld [vmem:[%s7 + $0x678] sm:$0xff]
    %v2028 = vld [vmem:[%s7 + $0x680] sm:$0xff]
    %v2029 = vld [vmem:[%s7 + $0x688] sm:$0xff]
    %v2030 = vld [vmem:[%s7 + $0x690] sm:$0xff]
    %v2031 = vld [vmem:[%s7 + $0x698] sm:$0xff]
    %v2032 = vld [vmem:[%s7 + $0x6a0] sm:$0xff]
    %v2033 = vld [vmem:[%s7 + $0x6a8] sm:$0xff]
    %v2034 = vld [vmem:[%s7 + $0x6b0] sm:$0xff]
    %v2035 = vld [vmem:[%s7 + $0x6b8] sm:$0xff]
    %v2036 = vld [vmem:[%s7 + $0x6c0] sm:$0xff]
    %v2037 = vld [vmem:[%s7 + $0x6c8] sm:$0xff]
    %v2038 = vld [vmem:[%s7 + $0x6d0] sm:$0xff]
    %v2039 = vld [vmem:[%s7 + $0x6d8] sm:$0xff]
    %v2040 = vld [vmem:[%s7 + $0x6e0] sm:$0xff]
    %v2041 = vld [vmem:[%s7 + $0x6e8] sm:$0xff]
    %v2042 = vld [vmem:[%s7 + $0x6f0] sm:$0xff]
    %v2043 = vld [vmem:[%s7 + $0x6f8] sm:$0xff]
    %v2044 = vld [vmem:[%s7 + $0x700] sm:$0xff]
    %v2045 = vld [vmem:[%s7 + $0x708] sm:$0xff]
    %v2046 = vld [vmem:[%s7 + $0x710] sm:$0xff]
    %v2047 = vld [vmem:[%s7 + $0x718] sm:$0xff]
    %v2048 = vld [vmem:[%s7 + $0x720] sm:$0xff]
    %v2049 = vld [vmem:[%s7 + $0x728] sm:$0xff]
    %v2050 = vld [vmem:[%s7 + $0x730] sm:$0xff]
    %v2051 = vld [vmem:[%s7 + $0x738] sm:$0xff]
    %v2052 = vld [vmem:[%s7 + $0x740] sm:$0xff]
    %v2053 = vld [vmem:[%s7 + $0x748] sm:$0xff]
    %v2054 = vld [vmem:[%s7 + $0x750] sm:$0xff]
    %v2055 = vld [vmem:[%s7 + $0x758] sm:$0xff]
    %v2056 = vld [vmem:[%s7 + $0x760] sm:$0xff]
    %v2057 = vld [vmem:[%s7 + $0x768] sm:$0xff]
    %v2058 = vld [vmem:[%s7 + $0x770] sm:$0xff]
    %v2059 = vld [vmem:[%s7 + $0x778] sm:$0xff]
    %v2060 = vld [vmem:[%s7 + $0x780] sm:$0xff]
    %v2061 = vld [vmem:[%s7 + $0x788] sm:$0xff]
    %v2062 = vld [vmem:[%s7 + $0x790] sm:$0xff]
    %v2063 = vld [vmem:[%s7 + $0x798] sm:$0xff]
    %v2064 = vld [vmem:[%s7 + $0x7a0] sm:$0xff]
    %v2065 = vld [vmem:[%s7 + $0x7a8] sm:$0xff]
    %v2066 = vld [vmem:[%s7 + $0x7b0] sm:$0xff]
    %v2067 = vld [vmem:[%s7 + $0x7b8] sm:$0xff]
    %v2068 = vld [vmem:[%s7 + $0x7c0] sm:$0xff]
    %v2069 = vld [vmem:[%s7 + $0x7c8] sm:$0xff]
    %v2070 = vld [vmem:[%s7 + $0x7d0] sm:$0xff]
    %v2071 = vld [vmem:[%s7 + $0x7d8] sm:$0xff]
    %v2072 = vld [vmem:[%s7 + $0x7e0] sm:$0xff]
    %v2073 = vld [vmem:[%s7 + $0x7e8] sm:$0xff]
    %v2074 = vld [vmem:[%s7 + $0x7f0] sm:$0xff]
    %v2075 = vld [vmem:[%s7 + $0x7f8] sm:$0xff]
    %v2076 = vld [vmem:[%s8] sm:$0xf]
    %v2078 = vperm.slane %v2076, 0
    %v2079 = vperm.slane %v2076, 1
    %v2080 = vperm.slane %v2076, 2
    %v2081 = vperm.slane %v2076, 3
    %2086 = vmatpush.msra.mxu0 %v1880
    %2087 = vmatpush.msra.mxu0 %v1876
    %2088 = vmatpush.msra.mxu0 %v1872
    %2089 = vmatpush.msra.mxu0 %v1868
    %2090 = vmatpush.msra.mxu0 %v1864
    %2091 = vmatpush.msra.mxu0 %v1860
    %2092 = vmatpush.msra.mxu0 %v1856
    %2093 = vmatpush.msra.mxu0 %v1852
    %2094 = vmatpush.msra.mxu0 %v1848
    %2095 = vmatpush.msra.mxu0 %v1844
    %2096 = vmatpush.msra.mxu0 %v1840
    %2097 = vmatpush.msra.mxu0 %v1836
    %2098 = vmatpush.msra.mxu0 %v1832
    %2099 = vmatpush.msra.mxu0 %v1828
    %2100 = vmatpush.msra.mxu0 %v1824
    %2101 = vmatpush.msra.mxu0 %v1820
    %2102 = vmatmul.f32.gmra.mxu0 %v1816
    %v2103 = vpop.f32.mrf.mxu0
    %v2104 = vadd.f32 %v2078, %v2103
    %2105 = vdwg.mxu0
    %2106 = vmatpush.msra.mxu0 %v1944
    %2107 = vmatpush.msra.mxu0 %v1940
    %2108 = vmatpush.msra.mxu0 %v1936
    %2109 = vmatpush.msra.mxu0 %v1932
    %2110 = vmatpush.msra.mxu0 %v1928
    %2111 = vmatpush.msra.mxu0 %v1924
    %2112 = vmatpush.msra.mxu0 %v1920
    %2113 = vmatpush.msra.mxu0 %v1916
    %2114 = vmatpush.msra.mxu0 %v1912
    %2115 = vmatpush.msra.mxu0 %v1908
    %2116 = vmatpush.msra.mxu0 %v1904
    %2117 = vmatpush.msra.mxu0 %v1900
    %2118 = vmatpush.msra.mxu0 %v1896
    %2119 = vmatpush.msra.mxu0 %v1892
    %2120 = vmatpush.msra.mxu0 %v1888
    %2121 = vmatpush.msra.mxu0 %v1884
    %2122 = vmatmul.f32.gmra.mxu0 %v1817
    %v2123 = vpop.f32.mrf.mxu0
    %v2124 = vadd.f32 %v2104, %v2123
    %2125 = vdwg.mxu0
    %2126 = vmatpush.msra.mxu0 %v2008
    %2127 = vmatpush.msra.mxu0 %v2004
    %2128 = vmatpush.msra.mxu0 %v2000
    %2129 = vmatpush.msra.mxu0 %v1996
    %2130 = vmatpush.msra.mxu0 %v1992
    %2131 = vmatpush.msra.mxu0 %v1988
    %2132 = vmatpush.msra.mxu0 %v1984
    %2133 = vmatpush.msra.mxu0 %v1980
    %2134 = vmatpush.msra.mxu0 %v1976
    %2135 = vmatpush.msra.mxu0 %v1972
    %2136 = vmatpush.msra.mxu0 %v1968
    %2137 = vmatpush.msra.mxu0 %v1964
    %2138 = vmatpush.msra.mxu0 %v1960
    %2139 = vmatpush.msra.mxu0 %v1956
    %2140 = vmatpush.msra.mxu0 %v1952
    %2141 = vmatpush.msra.mxu0 %v1948
    %2142 = vmatmul.f32.gmra.mxu0 %v1818
    %v2143 = vpop.f32.mrf.mxu0
    %v2144 = vadd.f32 %v2124, %v2143
    %2145 = vdwg.mxu0
    %2146 = vmatpush.msra.mxu0 %v2072
    %2147 = vmatpush.msra.mxu0 %v2068
    %2148 = vmatpush.msra.mxu0 %v2064
    %2149 = vmatpush.msra.mxu0 %v2060
    %2150 = vmatpush.msra.mxu0 %v2056
    %2151 = vmatpush.msra.mxu0 %v2052
    %2152 = vmatpush.msra.mxu0 %v2048
    %2153 = vmatpush.msra.mxu0 %v2044
    %2154 = vmatpush.msra.mxu0 %v2040
    %2155 = vmatpush.msra.mxu0 %v2036
    %2156 = vmatpush.msra.mxu0 %v2032
    %2157 = vmatpush.msra.mxu0 %v2028
    %2158 = vmatpush.msra.mxu0 %v2024
    %2159 = vmatpush.msra.mxu0 %v2020
    %2160 = vmatpush.msra.mxu0 %v2016
    %2161 = vmatpush.msra.mxu0 %v2012
    %2162 = vmatmul.f32.gmra.mxu0 %v1819
    %v2163 = vpop.f32.mrf.mxu0
    %v2164 = vadd.f32 %v2144, %v2163
    %2165 = vdwg.mxu0
    %2166 = vmatpush.msra.mxu0 %v1881
    %2167 = vmatpush.msra.mxu0 %v1877
    %2168 = vmatpush.msra.mxu0 %v1873
    %2169 = vmatpush.msra.mxu0 %v1869
    %2170 = vmatpush.msra.mxu0 %v1865
    %2171 = vmatpush.msra.mxu0 %v1861
    %2172 = vmatpush.msra.mxu0 %v1857
    %2173 = vmatpush.msra.mxu0 %v1853
    %2174 = vmatpush.msra.mxu0 %v1849
    %2175 = vmatpush.msra.mxu0 %v1845
    %2176 = vmatpush.msra.mxu0 %v1841
    %2177 = vmatpush.msra.mxu0 %v1837
    %2178 = vmatpush.msra.mxu0 %v1833
    %2179 = vmatpush.msra.mxu0 %v1829
    %2180 = vmatpush.msra.mxu0 %v1825
    %2181 = vmatpush.msra.mxu0 %v1821
    %2182 = vmatmul.f32.gmra.mxu0 %v1816
    %v2183 = vpop.f32.mrf.mxu0
    %v2184 = vadd.f32 %v2079, %v2183
    %2185 = vdwg.mxu0
    %2186 = vmatpush.msra.mxu0 %v1945
    %2187 = vmatpush.msra.mxu0 %v1941
    %2188 = vmatpush.msra.mxu0 %v1937
    %2189 = vmatpush.msra.mxu0 %v1933
    %2190 = vmatpush.msra.mxu0 %v1929
    %2191 = vmatpush.msra.mxu0 %v1925
    %2192 = vmatpush.msra.mxu0 %v1921
    %2193 = vmatpush.msra.mxu0 %v1917
    %2194 = vmatpush.msra.mxu0 %v1913
    %2195 = vmatpush.msra.mxu0 %v1909
    %2196 = vmatpush.msra.mxu0 %v1905
    %2197 = vmatpush.msra.mxu0 %v1901
    %2198 = vmatpush.msra.mxu0 %v1897
    %2199 = vmatpush.msra.mxu0 %v1893
    %2200 = vmatpush.msra.mxu0 %v1889
    %2201 = vmatpush.msra.mxu0 %v1885
    %2202 = vmatmul.f32.gmra.mxu0 %v1817
    %v2203 = vpop.f32.mrf.mxu0
    %v2204 = vadd.f32 %v2184, %v2203
    %2205 = vdwg.mxu0
    %2206 = vmatpush.msra.mxu0 %v2009
    %2207 = vmatpush.msra.mxu0 %v2005
    %2208 = vmatpush.msra.mxu0 %v2001
    %2209 = vmatpush.msra.mxu0 %v1997
    %2210 = vmatpush.msra.mxu0 %v1993
    %2211 = vmatpush.msra.mxu0 %v1989
    %2212 = vmatpush.msra.mxu0 %v1985
    %2213 = vmatpush.msra.mxu0 %v1981
    %2214 = vmatpush.msra.mxu0 %v1977
    %2215 = vmatpush.msra.mxu0 %v1973
    %2216 = vmatpush.msra.mxu0 %v1969
    %2217 = vmatpush.msra.mxu0 %v1965
    %2218 = vmatpush.msra.mxu0 %v1961
    %2219 = vmatpush.msra.mxu0 %v1957
    %2220 = vmatpush.msra.mxu0 %v1953
    %2221 = vmatpush.msra.mxu0 %v1949
    %2222 = vmatmul.f32.gmra.mxu0 %v1818
    %v2223 = vpop.f32.mrf.mxu0
    %v2224 = vadd.f32 %v2204, %v2223
    %2225 = vdwg.mxu0
    %2226 = vmatpush.msra.mxu0 %v2073
    %2227 = vmatpush.msra.mxu0 %v2069
    %2228 = vmatpush.msra.mxu0 %v2065
    %2229 = vmatpush.msra.mxu0 %v2061
    %2230 = vmatpush.msra.mxu0 %v2057
    %2231 = vmatpush.msra.mxu0 %v2053
    %2232 = vmatpush.msra.mxu0 %v2049
    %2233 = vmatpush.msra.mxu0 %v2045
    %2234 = vmatpush.msra.mxu0 %v2041
    %2235 = vmatpush.msra.mxu0 %v2037
    %2236 = vmatpush.msra.mxu0 %v2033
    %2237 = vmatpush.msra.mxu0 %v2029
    %2238 = vmatpush.msra.mxu0 %v2025
    %2239 = vmatpush.msra.mxu0 %v2021
    %2240 = vmatpush.msra.mxu0 %v2017
    %2241 = vmatpush.msra.mxu0 %v2013
    %2242 = vmatmul.f32.gmra.mxu0 %v1819
    %v2243 = vpop.f32.mrf.mxu0
    %v2244 = vadd.f32 %v2224, %v2243
    %2245 = vdwg.mxu0
    %2246 = vmatpush.msra.mxu0 %v1882
    %2247 = vmatpush.msra.mxu0 %v1878
    %2248 = vmatpush.msra.mxu0 %v1874
    %2249 = vmatpush.msra.mxu0 %v1870
    %2250 = vmatpush.msra.mxu0 %v1866
    %2251 = vmatpush.msra.mxu0 %v1862
    %2252 = vmatpush.msra.mxu0 %v1858
    %2253 = vmatpush.msra.mxu0 %v1854
    %2254 = vmatpush.msra.mxu0 %v1850
    %2255 = vmatpush.msra.mxu0 %v1846
    %2256 = vmatpush.msra.mxu0 %v1842
    %2257 = vmatpush.msra.mxu0 %v1838
    %2258 = vmatpush.msra.mxu0 %v1834
    %2259 = vmatpush.msra.mxu0 %v1830
    %2260 = vmatpush.msra.mxu0 %v1826
    %2261 = vmatpush.msra.mxu0 %v1822
    %2262 = vmatmul.f32.gmra.mxu0 %v1816
    %v2263 = vpop.f32.mrf.mxu0
    %v2264 = vadd.f32 %v2080, %v2263
    %2265 = vdwg.mxu0
    %2266 = vmatpush.msra.mxu0 %v1946
    %2267 = vmatpush.msra.mxu0 %v1942
    %2268 = vmatpush.msra.mxu0 %v1938
    %2269 = vmatpush.msra.mxu0 %v1934
    %2270 = vmatpush.msra.mxu0 %v1930
    %2271 = vmatpush.msra.mxu0 %v1926
    %2272 = vmatpush.msra.mxu0 %v1922
    %2273 = vmatpush.msra.mxu0 %v1918
    %2274 = vmatpush.msra.mxu0 %v1914
    %2275 = vmatpush.msra.mxu0 %v1910
    %2276 = vmatpush.msra.mxu0 %v1906
    %2277 = vmatpush.msra.mxu0 %v1902
    %2278 = vmatpush.msra.mxu0 %v1898
    %2279 = vmatpush.msra.mxu0 %v1894
    %2280 = vmatpush.msra.mxu0 %v1890
    %2281 = vmatpush.msra.mxu0 %v1886
    %2282 = vmatmul.f32.gmra.mxu0 %v1817
    %v2283 = vpop.f32.mrf.mxu0
    %v2284 = vadd.f32 %v2264, %v2283
    %2285 = vdwg.mxu0
    %2286 = vmatpush.msra.mxu0 %v2010
    %2287 = vmatpush.msra.mxu0 %v2006
    %2288 = vmatpush.msra.mxu0 %v2002
    %2289 = vmatpush.msra.mxu0 %v1998
    %2290 = vmatpush.msra.mxu0 %v1994
    %2291 = vmatpush.msra.mxu0 %v1990
    %2292 = vmatpush.msra.mxu0 %v1986
    %2293 = vmatpush.msra.mxu0 %v1982
    %2294 = vmatpush.msra.mxu0 %v1978
    %2295 = vmatpush.msra.mxu0 %v1974
    %2296 = vmatpush.msra.mxu0 %v1970
    %2297 = vmatpush.msra.mxu0 %v1966
    %2298 = vmatpush.msra.mxu0 %v1962
    %2299 = vmatpush.msra.mxu0 %v1958
    %2300 = vmatpush.msra.mxu0 %v1954
    %2301 = vmatpush.msra.mxu0 %v1950
    %2302 = vmatmul.f32.gmra.mxu0 %v1818
    %v2303 = vpop.f32.mrf.mxu0
    %v2304 = vadd.f32 %v2284, %v2303
    %2305 = vdwg.mxu0
    %2306 = vmatpush.msra.mxu0 %v2074
    %2307 = vmatpush.msra.mxu0 %v2070
    %2308 = vmatpush.msra.mxu0 %v2066
    %2309 = vmatpush.msra.mxu0 %v2062
    %2310 = vmatpush.msra.mxu0 %v2058
    %2311 = vmatpush.msra.mxu0 %v2054
    %2312 = vmatpush.msra.mxu0 %v2050
    %2313 = vmatpush.msra.mxu0 %v2046
    %2314 = vmatpush.msra.mxu0 %v2042
    %2315 = vmatpush.msra.mxu0 %v2038
    %2316 = vmatpush.msra.mxu0 %v2034
    %2317 = vmatpush.msra.mxu0 %v2030
    %2318 = vmatpush.msra.mxu0 %v2026
    %2319 = vmatpush.msra.mxu0 %v2022
    %2320 = vmatpush.msra.mxu0 %v2018
    %2321 = vmatpush.msra.mxu0 %v2014
    %2322 = vmatmul.f32.gmra.mxu0 %v1819
    %v2323 = vpop.f32.mrf.mxu0
    %v2324 = vadd.f32 %v2304, %v2323
    %2325 = vdwg.mxu0
    %2326 = vmatpush.msra.mxu0 %v1883
    %2327 = vmatpush.msra.mxu0 %v1879
    %2328 = vmatpush.msra.mxu0 %v1875
    %2329 = vmatpush.msra.mxu0 %v1871
    %2330 = vmatpush.msra.mxu0 %v1867
    %2331 = vmatpush.msra.mxu0 %v1863
    %2332 = vmatpush.msra.mxu0 %v1859
    %2333 = vmatpush.msra.mxu0 %v1855
    %2334 = vmatpush.msra.mxu0 %v1851
    %2335 = vmatpush.msra.mxu0 %v1847
    %2336 = vmatpush.msra.mxu0 %v1843
    %2337 = vmatpush.msra.mxu0 %v1839
    %2338 = vmatpush.msra.mxu0 %v1835
    %2339 = vmatpush.msra.mxu0 %v1831
    %2340 = vmatpush.msra.mxu0 %v1827
    %2341 = vmatpush.msra.mxu0 %v1823
    %2342 = vmatmul.f32.gmra.mxu0 %v1816
    %v2343 = vpop.f32.mrf.mxu0
    %v2344 = vadd.f32 %v2081, %v2343
    %2345 = vdwg.mxu0
    %2346 = vmatpush.msra.mxu0 %v1947
    %2347 = vmatpush.msra.mxu0 %v1943
    %2348 = vmatpush.msra.mxu0 %v1939
    %2349 = vmatpush.msra.mxu0 %v1935
    %2350 = vmatpush.msra.mxu0 %v1931
    %2351 = vmatpush.msra.mxu0 %v1927
    %2352 = vmatpush.msra.mxu0 %v1923
    %2353 = vmatpush.msra.mxu0 %v1919
    %2354 = vmatpush.msra.mxu0 %v1915
    %2355 = vmatpush.msra.mxu0 %v1911
    %2356 = vmatpush.msra.mxu0 %v1907
    %2357 = vmatpush.msra.mxu0 %v1903
    %2358 = vmatpush.msra.mxu0 %v1899
    %2359 = vmatpush.msra.mxu0 %v1895
    %2360 = vmatpush.msra.mxu0 %v1891
    %2361 = vmatpush.msra.mxu0 %v1887
    %2362 = vmatmul.f32.gmra.mxu0 %v1817
    %v2363 = vpop.f32.mrf.mxu0
    %v2364 = vadd.f32 %v2344, %v2363
    %2365 = vdwg.mxu0
    %2366 = vmatpush.msra.mxu0 %v2011
    %2367 = vmatpush.msra.mxu0 %v2007
    %2368 = vmatpush.msra.mxu0 %v2003
    %2369 = vmatpush.msra.mxu0 %v1999
    %2370 = vmatpush.msra.mxu0 %v1995
    %2371 = vmatpush.msra.mxu0 %v1991
    %2372 = vmatpush.msra.mxu0 %v1987
    %2373 = vmatpush.msra.mxu0 %v1983
    %2374 = vmatpush.msra.mxu0 %v1979
    %2375 = vmatpush.msra.mxu0 %v1975
    %2376 = vmatpush.msra.mxu0 %v1971
    %2377 = vmatpush.msra.mxu0 %v1967
    %2378 = vmatpush.msra.mxu0 %v1963
    %2379 = vmatpush.msra.mxu0 %v1959
    %2380 = vmatpush.msra.mxu0 %v1955
    %2381 = vmatpush.msra.mxu0 %v1951
    %2382 = vmatmul.f32.gmra.mxu0 %v1818
    %v2383 = vpop.f32.mrf.mxu0
    %v2384 = vadd.f32 %v2364, %v2383
    %2385 = vdwg.mxu0
    %2386 = vmatpush.msra.mxu0 %v2075
    %2387 = vmatpush.msra.mxu0 %v2071
    %2388 = vmatpush.msra.mxu0 %v2067
    %2389 = vmatpush.msra.mxu0 %v2063
    %2390 = vmatpush.msra.mxu0 %v2059
    %2391 = vmatpush.msra.mxu0 %v2055
    %2392 = vmatpush.msra.mxu0 %v2051
    %2393 = vmatpush.msra.mxu0 %v2047
    %2394 = vmatpush.msra.mxu0 %v2043
    %2395 = vmatpush.msra.mxu0 %v2039
    %2396 = vmatpush.msra.mxu0 %v2035
    %2397 = vmatpush.msra.mxu0 %v2031
    %2398 = vmatpush.msra.mxu0 %v2027
    %2399 = vmatpush.msra.mxu0 %v2023
    %2400 = vmatpush.msra.mxu0 %v2019
    %2401 = vmatpush.msra.mxu0 %v2015
    %2402 = vmatmul.f32.gmra.mxu0 %v1819
    %v2403 = vpop.f32.mrf.mxu0
    %v2404 = vadd.f32 %v2384, %v2403
    %2405 = vdwg.mxu0
    %v2406 = vmax.f32 %v2164, 0.0
    %v2407 = vmax.f32 %v2244, 0.0
    %v2408 = vmax.f32 %v2324, 0.0
    %v2409 = vmax.f32 %v2404, 0.0
    %v2410 = vld [vmem:[%s9] sm:$0xff]
    %v2411 = vld [vmem:[%s9 + $0x8] sm:$0xff]
    %v2412 = vld [vmem:[%s9 + $0x10] sm:$0xff]
    %v2413 = vld [vmem:[%s9 + $0x18] sm:$0xff]
    %v2414 = vld [vmem:[%s9 + $0x20] sm:$0xff]
    %v2415 = vld [vmem:[%s9 + $0x28] sm:$0xff]
    %v2416 = vld [vmem:[%s9 + $0x30] sm:$0xff]
    %v2417 = vld [vmem:[%s9 + $0x38] sm:$0xff]
    %v2418 = vld [vmem:[%s9 + $0x40] sm:$0xff]
    %v2419 = vld [vmem:[%s9 + $0x48] sm:$0xff]
    %v2420 = vld [vmem:[%s9 + $0x50] sm:$0xff]
    %v2421 = vld [vmem:[%s9 + $0x58] sm:$0xff]
    %v2422 = vld [vmem:[%s9 + $0x60] sm:$0xff]
    %v2423 = vld [vmem:[%s9 + $0x68] sm:$0xff]
    %v2424 = vld [vmem:[%s9 + $0x70] sm:$0xff]
    %v2425 = vld [vmem:[%s9 + $0x78] sm:$0xff]
    %v2426 = vld [vmem:[%s9 + $0x80] sm:$0xff]
    %v2427 = vld [vmem:[%s9 + $0x88] sm:$0xff]
    %v2428 = vld [vmem:[%s9 + $0x90] sm:$0xff]
    %v2429 = vld [vmem:[%s9 + $0x98] sm:$0xff]
    %v2430 = vld [vmem:[%s9 + $0xa0] sm:$0xff]
    %v2431 = vld [vmem:[%s9 + $0xa8] sm:$0xff]
    %v2432 = vld [vmem:[%s9 + $0xb0] sm:$0xff]
    %v2433 = vld [vmem:[%s9 + $0xb8] sm:$0xff]
    %v2434 = vld [vmem:[%s9 + $0xc0] sm:$0xff]
    %v2435 = vld [vmem:[%s9 + $0xc8] sm:$0xff]
    %v2436 = vld [vmem:[%s9 + $0xd0] sm:$0xff]
    %v2437 = vld [vmem:[%s9 + $0xd8] sm:$0xff]
    %v2438 = vld [vmem:[%s9 + $0xe0] sm:$0xff]
    %v2439 = vld [vmem:[%s9 + $0xe8] sm:$0xff]
    %v2440 = vld [vmem:[%s9 + $0xf0] sm:$0xff]
    %v2441 = vld [vmem:[%s9 + $0xf8] sm:$0xff]
    %v2442 = vld [vmem:[%s9 + $0x100] sm:$0xff]
    %v2443 = vld [vmem:[%s9 + $0x108] sm:$0xff]
    %v2444 = vld [vmem:[%s9 + $0x110] sm:$0xff]
    %v2445 = vld [vmem:[%s9 + $0x118] sm:$0xff]
    %v2446 = vld [vmem:[%s9 + $0x120] sm:$0xff]
    %v2447 = vld [vmem:[%s9 + $0x128] sm:$0xff]
    %v2448 = vld [vmem:[%s9 + $0x130] sm:$0xff]
    %v2449 = vld [vmem:[%s9 + $0x138] sm:$0xff]
    %v2450 = vld [vmem:[%s9 + $0x140] sm:$0xff]
    %v2451 = vld [vmem:[%s9 + $0x148] sm:$0xff]
    %v2452 = vld [vmem:[%s9 + $0x150] sm:$0xff]
    %v2453 = vld [vmem:[%s9 + $0x158] sm:$0xff]
    %v2454 = vld [vmem:[%s9 + $0x160] sm:$0xff]
    %v2455 = vld [vmem:[%s9 + $0x168] sm:$0xff]
    %v2456 = vld [vmem:[%s9 + $0x170] sm:$0xff]
    %v2457 = vld [vmem:[%s9 + $0x178] sm:$0xff]
    %v2458 = vld [vmem:[%s9 + $0x180] sm:$0xff]
    %v2459 = vld [vmem:[%s9 + $0x188] sm:$0xff]
    %v2460 = vld [vmem:[%s9 + $0x190] sm:$0xff]
    %v2461 = vld [vmem:[%s9 + $0x198] sm:$0xff]
    %v2462 = vld [vmem:[%s9 + $0x1a0] sm:$0xff]
    %v2463 = vld [vmem:[%s9 + $0x1a8] sm:$0xff]
    %v2464 = vld [vmem:[%s9 + $0x1b0] sm:$0xff]
    %v2465 = vld [vmem:[%s9 + $0x1b8] sm:$0xff]
    %v2466 = vld [vmem:[%s9 + $0x1c0] sm:$0xff]
    %v2467 = vld [vmem:[%s9 + $0x1c8] sm:$0xff]
    %v2468 = vld [vmem:[%s9 + $0x1d0] sm:$0xff]
    %v2469 = vld [vmem:[%s9 + $0x1d8] sm:$0xff]
    %v2470 = vld [vmem:[%s9 + $0x1e0] sm:$0xff]
    %v2471 = vld [vmem:[%s9 + $0x1e8] sm:$0xff]
    %v2472 = vld [vmem:[%s9 + $0x1f0] sm:$0xff]
    %v2473 = vld [vmem:[%s9 + $0x1f8] sm:$0xff]
    %v2474 = vld [vmem:[%s10] sm:$0x1]
    %v2476 = vperm.slane %v2474, 0
    %2478 = vmatpush.msra.mxu0 %v2425
    %2479 = vmatpush.msra.mxu0 %v2424
    %2480 = vmatpush.msra.mxu0 %v2423
    %2481 = vmatpush.msra.mxu0 %v2422
    %2482 = vmatpush.msra.mxu0 %v2421
    %2483 = vmatpush.msra.mxu0 %v2420
    %2484 = vmatpush.msra.mxu0 %v2419
    %2485 = vmatpush.msra.mxu0 %v2418
    %2486 = vmatpush.msra.mxu0 %v2417
    %2487 = vmatpush.msra.mxu0 %v2416
    %2488 = vmatpush.msra.mxu0 %v2415
    %2489 = vmatpush.msra.mxu0 %v2414
    %2490 = vmatpush.msra.mxu0 %v2413
    %2491 = vmatpush.msra.mxu0 %v2412
    %2492 = vmatpush.msra.mxu0 %v2411
    %2493 = vmatpush.msra.mxu0 %v2410
    %2494 = vmatmul.f32.gmra.mxu0 %v2406
    %v2495 = vpop.f32.mrf.mxu0
    %v2496 = vadd.f32 %v2476, %v2495
    %2497 = vdwg.mxu0
    %2498 = vmatpush.msra.mxu0 %v2441
    %2499 = vmatpush.msra.mxu0 %v2440
    %2500 = vmatpush.msra.mxu0 %v2439
    %2501 = vmatpush.msra.mxu0 %v2438
    %2502 = vmatpush.msra.mxu0 %v2437
    %2503 = vmatpush.msra.mxu0 %v2436
    %2504 = vmatpush.msra.mxu0 %v2435
    %2505 = vmatpush.msra.mxu0 %v2434
    %2506 = vmatpush.msra.mxu0 %v2433
    %2507 = vmatpush.msra.mxu0 %v2432
    %2508 = vmatpush.msra.mxu0 %v2431
    %2509 = vmatpush.msra.mxu0 %v2430
    %2510 = vmatpush.msra.mxu0 %v2429
    %2511 = vmatpush.msra.mxu0 %v2428
    %2512 = vmatpush.msra.mxu0 %v2427
    %2513 = vmatpush.msra.mxu0 %v2426
    %2514 = vmatmul.f32.gmra.mxu0 %v2407
    %v2515 = vpop.f32.mrf.mxu0
    %v2516 = vadd.f32 %v2496, %v2515
    %2517 = vdwg.mxu0
    %2518 = vmatpush.msra.mxu0 %v2457
    %2519 = vmatpush.msra.mxu0 %v2456
    %2520 = vmatpush.msra.mxu0 %v2455
    %2521 = vmatpush.msra.mxu0 %v2454
    %2522 = vmatpush.msra.mxu0 %v2453
    %2523 = vmatpush.msra.mxu0 %v2452
    %2524 = vmatpush.msra.mxu0 %v2451
    %2525 = vmatpush.msra.mxu0 %v2450
    %2526 = vmatpush.msra.mxu0 %v2449
    %2527 = vmatpush.msra.mxu0 %v2448
    %2528 = vmatpush.msra.mxu0 %v2447
    %2529 = vmatpush.msra.mxu0 %v2446
    %2530 = vmatpush.msra.mxu0 %v2445
    %2531 = vmatpush.msra.mxu0 %v2444
    %2532 = vmatpush.msra.mxu0 %v2443
    %2533 = vmatpush.msra.mxu0 %v2442
    %2534 = vmatmul.f32.gmra.mxu0 %v2408
    %v2535 = vpop.f32.mrf.mxu0
    %v2536 = vadd.f32 %v2516, %v2535
    %2537 = vdwg.mxu0
    %2538 = vmatpush.msra.mxu0 %v2473
    %2539 = vmatpush.msra.mxu0 %v2472
    %2540 = vmatpush.msra.mxu0 %v2471
    %2541 = vmatpush.msra.mxu0 %v2470
    %2542 = vmatpush.msra.mxu0 %v2469
    %2543 = vmatpush.msra.mxu0 %v2468
    %2544 = vmatpush.msra.mxu0 %v2467
    %2545 = vmatpush.msra.mxu0 %v2466
    %2546 = vmatpush.msra.mxu0 %v2465
    %2547 = vmatpush.msra.mxu0 %v2464
    %2548 = vmatpush.msra.mxu0 %v2463
    %2549 = vmatpush.msra.mxu0 %v2462
    %2550 = vmatpush.msra.mxu0 %v2461
    %2551 = vmatpush.msra.mxu0 %v2460
    %2552 = vmatpush.msra.mxu0 %v2459
    %2553 = vmatpush.msra.mxu0 %v2458
    %2554 = vmatmul.f32.gmra.mxu0 %v2409
    %v2555 = vpop.f32.mrf.mxu0
    %v2556 = vadd.f32 %v2536, %v2555
    %2557 = vdwg.mxu0
    %vm2558 = vcmask 451584
    %2559 = vst.msk [vmem:[#allocation2] sm:$0x3] %vm2558, %v2556
    // Predicated region
    $region46: #{deep_mlp_forward.3} parent=1 // pred_check
      _
    $region47: #{deep_mlp_forward.3} parent=1 // pred_check_branch
      %2561 = sbr.rel (0) target = $region49
    $region48: #{deep_mlp_forward.3} parent=1 // pred_region
      %2563 = vsyncadd [#allocation3], 0
      %s2565 = sshll.u32 [#allocation2], 4
      %s2566 = int_to_ptr.vmem [resolvable:$true] %s2565
      %s2567 = sshll.u32 %s11, 4
      %s2568 = int_to_ptr.hbm [resolvable:$true] %s2567
      %2570 = dma.vmem_to_hbm [thread:$0]  %s2566, 32, %s2568, [#allocation3]
    $region49: #{deep_mlp_forward.3} parent=1 // pred_fallthru
      _
    // Predicated region
    $region50: #{deep_mlp_forward.3} parent=1 // pred_check
      _
    $region51: #{deep_mlp_forward.3} parent=1 // pred_check_branch
      %2572 = sbr.rel (0) target = $region53
    $region52: #{deep_mlp_forward.3} parent=1 // pred_region
      %2574 = dma.done [#allocation3], 32
    $region53: #{deep_mlp_forward.3} parent=1 // pred_fallthru
      _
    %2575 = vsyncpa [#allocation3], 1

</llo_original>
